<compile_context>
chip_gen: v7x
topology: tpu7x:2x2x1
jax: 0.10.0
libtpu: 0.0.40
codegen_flags: <defaults>
</compile_context>

<pallas_src>
import math
import functools

import numpy as np
import jax
import jax.numpy as jnp
from jax import lax
from jax.experimental import pallas as pl
from jax.experimental.pallas import tpu as pltpu


def _relu6(x):
    return jnp.minimum(jnp.maximum(x, 0.0), 6.0)


def _round_up(x, m):
    return ((x + m - 1) // m) * m


def _default_images_per_step(N):
    """Whole batch in one step on single-TC chips; keep 2 parallel steps on v7x."""
    try:
        kind = jax.devices()[0].device_kind.lower()
    except Exception:
        kind = ""
    dual_tc = "7" in kind          # v7x has 2 TensorCores per chip
    if dual_tc and N >= 2 and N % 2 == 0:
        return N // 2
    return N


def mscb_kernel(kernel_sizes, H, W, G, cin_eq_cout, matmul_dtype, *refs):
    """One grid step = G images, lane-dense (C, G*H*W) layout."""
    n = len(kernel_sizes)
    x_ref, win_ref, s1_ref, b1_ref = refs[0:4]
    dw_refs = refs[4:4 + n]
    dwb_ref, w2t_ref, s2_ref, b2_ref, o_ref = refs[4 + n:4 + n + 5]
    scr_ref = refs[4 + n + 5] if len(refs) > 4 + n + 5 else None

    Cin, L = x_ref.shape
    Ce = s1_ref.shape[0]
    HW = H * W
    max_pad = max(kernel_sizes) // 2

    x32 = x_ref[...]                                            # (Cin, L) f32

    # ---- pconv1 (+ fused 1x1 skip projection when cin != cout) on the MXU ----
    y = jnp.dot(win_ref[...], x32.astype(matmul_dtype),
                preferred_element_type=jnp.float32)             # (Ce[+Cout], L)
    p1 = _relu6(y[:Ce] * s1_ref[...] + b1_ref[...])             # (Ce, L) f32
    skip = x32 if cin_eq_cout else y[Ce:]                       # (Cout, L) f32

    # lane -> (column, row-within-image) indices, shared by all masks
    lanes = lax.broadcasted_iota(jnp.int32, (1, L), 1)
    col = lanes % W

    # ---- stage pout1 into VMEM scratch: one column-premasked copy per distinct
    # column offset, zero halos at both ends.  Every depthwise tap is then a
    # plain VMEM load; column wrap / out-of-image reads come back as zero.
    if scr_ref is not None:
        n_ow, _, Lpad = scr_ref.shape
        S_off = (Lpad - L) // 2                                 # aligned halo width
        zl = jnp.zeros((Ce, S_off), jnp.float32)
        zr = jnp.zeros((Ce, Lpad - S_off - L), jnp.float32)
        for j in range(n_ow):                                   # halos zeroed every step
            scr_ref[j, :, :S_off] = zl
            scr_ref[j, :, S_off + L:] = zr
        for j in range(n_ow):
            ow = j - max_pad
            if ow == 0:
                q = p1
            elif ow > 0:
                q = jnp.where(col >= ow, p1, 0.0)               # source-side premask
            else:
                q = jnp.where(col < W + ow, p1, 0.0)
            scr_ref[j, :, S_off:S_off + L] = q

    # row validity masks are only needed when several images share the lane axis
    row_mask = {}
    if G > 1:
        h_img = (lanes % HW) // W
        def get_row_mask(oh):
            if oh not in row_mask:
                row_mask[oh] = (h_img + oh >= 0) & (h_img + oh < H)
            return row_mask[oh]

    # ---- per-scale depthwise (VPU) + immediate pconv2 partial matmul (MXU) ----
    out = None
    for i, k in enumerate(kernel_sizes):
        wdw = dw_refs[i][...]                                   # (Ce, k*k) f32, BN folded
        bias = dwb_ref[i]                                       # (Ce, 1)  f32
        if k == 1:
            acc = p1 * wdw                                      # per-channel scale
        else:
            pad = k // 2
            acc = None
            for oh in range(-pad, pad + 1):
                part = None
                for ow in range(-pad, pad + 1):
                    t = (oh + pad) * k + (ow + pad)
                    lo = S_off + oh * W + ow
                    tap = scr_ref[ow + max_pad, :, lo:lo + L]   # (Ce, L) vld
                    term = tap * wdw[:, t:t + 1]
                    part = term if part is None else part + term
                if G > 1 and oh != 0:                           # kill cross-image rows
                    part = jnp.where(get_row_mask(oh), part, 0.0)
                acc = part if acc is None else acc + part
        d = _relu6(acc + bias)                                  # (Ce, L) f32

        # pconv2 partial matmul for this scale (channel_shuffle folded into w2t)
        w2blk = w2t_ref[:, i * Ce:(i + 1) * Ce]                 # (Cout, Ce)
        pc = jnp.dot(w2blk, d.astype(matmul_dtype),
                     preferred_element_type=jnp.float32)        # (Cout, L)
        out = pc if out is None else out + pc

    out = out * s2_ref[...] + b2_ref[...] + skip
    o_ref[...] = out.astype(o_ref.dtype)


def make_params(key, cin, cout, expansion_factor=2, kernel_sizes=(1, 3, 5),
                eps=1e-5, random_bn_stats=True):
    """Synthetic parameters matching MSCB's __init__ shapes (+ kernel-ready folds)."""
    ce = int(cin * expansion_factor)
    n = len(kernel_sizes)
    ccomb = ce * n                      # shortcut=False -> concat of n scales
    std = 0.02                          # 'normal' init scheme
    keys = jax.random.split(key, 2 * n + 8)
    it = iter(keys)

    w1 = std * jax.random.normal(next(it), (cin, ce), jnp.float32)
    dww = [std * jax.random.normal(next(it), (k, k, ce), jnp.float32)
           for k in kernel_sizes]
    w2 = std * jax.random.normal(next(it), (ccomb, cout), jnp.float32)
    if cin != cout:
        wskip = std * jax.random.normal(next(it), (cin, cout), jnp.float32)
    else:
        _ = next(it)
        wskip = jnp.eye(cin, dtype=jnp.float32)   # identity skip when cin == cout

    # BatchNorm (eval mode) folded to per-channel scale/shift.
    def bn_fold(c):
        if random_bn_stats:
            kg, kb, km, kv = jax.random.split(next(it), 4)
            gamma = 1.0 + 0.5 * jax.random.uniform(kg, (c,), jnp.float32, -1.0, 1.0)
            beta = 0.1 * jax.random.normal(kb, (c,), jnp.float32)
            mean = 0.1 * jax.random.normal(km, (c,), jnp.float32)
            var = 1.0 + 0.5 * jax.random.uniform(kv, (c,), jnp.float32, -1.0, 1.0)
        else:
            gamma = jnp.ones((c,), jnp.float32); beta = jnp.zeros((c,), jnp.float32)
            mean = jnp.zeros((c,), jnp.float32); var = jnp.ones((c,), jnp.float32)
        scale = gamma / jnp.sqrt(var + eps)
        shift = beta - mean * scale
        return scale, shift

    s1, b1 = bn_fold(ce)
    dw_bn = [bn_fold(ce) for _ in kernel_sizes]
    s_dw = jnp.stack([s for s, _ in dw_bn])          # (n, Ce)
    b_dw = jnp.stack([b for _, b in dw_bn])          # (n, Ce)
    s2, b2 = bn_fold(cout)

    # ---------- kernel-ready, lane-dense (C, HW) derived tensors ----------
    win = jnp.concatenate([w1.T, wskip.T], axis=0)               # (Ce+Cout, Cin)
    s1c, b1c = s1[:, None], b1[:, None]                          # (Ce, 1)

    # depthwise weights: fold BN scale, lay out as (Ce, k*k)
    dw2d = []
    for i, k in enumerate(kernel_sizes):
        wf = dww[i] * s_dw[i][None, None, :]                     # (k, k, Ce)
        dw2d.append(wf.reshape(k * k, ce).T)                     # (Ce, k*k)
    dwbc = b_dw[:, :, None]                                      # (n, Ce, 1)

    # fold channel_shuffle(gcd(ccomb, cout)) into the pconv2 weight row order
    groups = math.gcd(ccomb, cout)
    cpg = ccomb // groups
    perm = np.array([(c % groups) * cpg + (c // groups) for c in range(ccomb)])
    inv_perm = np.argsort(perm)                                  # dout @ w2[inv] == shuffled @ w2
    w2t = jnp.asarray(w2[inv_perm]).T                            # (Cout, Ccomb)
    s2c, b2c = s2[:, None], b2[:, None]                          # (Cout, 1)

    return dict(kernel_sizes=tuple(kernel_sizes),
                # raw params (used by the pure-JAX reference)
                w1=w1, dww=dww, w2=w2, wskip=wskip,
                s1=s1, b1=b1, s_dw=s_dw, b_dw=b_dw, s2=s2, b2=b2,
                # kernel-ready folded params
                win=win, s1c=s1c, b1c=b1c, dw2d=dw2d, dwbc=dwbc,
                w2t=w2t, s2c=s2c, b2c=b2c)


def mscb_forward(x_nchw, p, matmul_dtype=jnp.float32, images_per_step=None):
    """MSCB forward.  matmul_dtype=jnp.bfloat16 gives native-rate MXU on all
    TPU generations; the depthwise / accumulation path stays f32 regardless."""
    kernel_sizes = p['kernel_sizes']
    N, Cin, H, W = x_nchw.shape
    HW = H * W
    Cout = p['w2t'].shape[0]
    Ce = p['s1c'].shape[0]
    cin_eq_cout = (Cin == Cout)

    if images_per_step is None:
        images_per_step = _default_images_per_step(N)
    G = int(images_per_step)
    assert N % G == 0, "images_per_step must divide the batch"
    steps = N // G
    L = G * HW

    # lane-dense, batch-folded layout: (Cin, N*HW); the (N, Cin) swap is a tiny
    # leading-dim transpose, HW rows stay contiguous.
    x = jnp.transpose(x_nchw.astype(jnp.float32), (1, 0, 2, 3)).reshape(Cin, N * HW)

    # pre-cast matmul weights on the host (constant across grid steps)
    win = (p['w1'].T if cin_eq_cout else p['win']).astype(matmul_dtype)
    w2t = p['w2t'].astype(matmul_dtype)
    weights = [win, p['s1c'], p['b1c'],
               *[w.astype(jnp.float32) for w in p['dw2d']],
               p['dwbc'], w2t, p['s2c'], p['b2c']]

    def whole(a):
        nd = a.ndim
        return pl.BlockSpec(a.shape, lambda b, nd=nd: (0,) * nd)

    in_specs = [pl.BlockSpec((Cin, L), lambda b: (0, b))]
    in_specs += [whole(a) for a in weights]

    scratch_shapes = []
    max_pad = max(kernel_sizes) // 2
    if max_pad > 0:
        S = max_pad * W + max_pad                   # largest |tap shift| in lanes
        S_off = _round_up(max(S, 1), 128)           # aligned halo -> aligned main store
        Lpad = S_off + L + S_off
        n_ow = 2 * max_pad + 1
        scratch_shapes = [pltpu.VMEM((n_ow, Ce, Lpad), jnp.float32)]

    out = pl.pallas_call(
        functools.partial(mscb_kernel, kernel_sizes, H, W, G, cin_eq_cout,
                          matmul_dtype),
        out_shape=jax.ShapeDtypeStruct((Cout, N * HW), jnp.float32),
        grid=(steps,),
        in_specs=in_specs,
        out_specs=pl.BlockSpec((Cout, L), lambda b: (0, b)),
        scratch_shapes=scratch_shapes,
        compiler_params=pltpu.CompilerParams(
            dimension_semantics=("parallel",)),     # both v7x TCs get work
    )(x, *weights)

    return jnp.transpose(out.reshape(Cout, N, HW), (1, 0, 2)).reshape(N, Cout, H, W)


def mscb_reference(x_nchw, p):
    """Pure-JAX reference of MSCB.forward (eval-mode BN), for validation."""
    kernel_sizes = p['kernel_sizes']
    x = jnp.transpose(x_nchw, (0, 2, 3, 1)).astype(jnp.float32)
    pout1 = _relu6(jnp.einsum('nhwc,cd->nhwd', x, p['w1']) * p['s1'] + p['b1'])
    Ce = pout1.shape[-1]
    outs = []
    for i, k in enumerate(kernel_sizes):
        rhs = p['dww'][i][..., None, :]              # (k, k, 1, Ce) HWIO depthwise
        d = lax.conv_general_dilated(
            pout1, rhs, (1, 1), 'SAME',
            dimension_numbers=('NHWC', 'HWIO', 'NHWC'),
            feature_group_count=Ce)
        outs.append(_relu6(d * p['s_dw'][i] + p['b_dw'][i]))
    dout = jnp.concatenate(outs, axis=-1)
    N, H, W, Ccomb = dout.shape
    Cout = p['w2'].shape[1]
    groups = math.gcd(Ccomb, Cout)
    dout = dout.reshape(N, H, W, groups, Ccomb // groups)
    dout = jnp.transpose(dout, (0, 1, 2, 4, 3)).reshape(N, H, W, Ccomb)
    out = jnp.einsum('nhwc,cd->nhwd', dout, p['w2']) * p['s2'] + p['b2']
    out = out + jnp.einsum('nhwc,cd->nhwd', x, p['wskip'])
    return jnp.transpose(out, (0, 3, 1, 2))


if __name__ == "__main__":
    # MSCB(in_channels=8, out_channels=16, stride=1, kernel_sizes=[1,3,5],
    #      expansion_factor=2, dw_parallel=True, shortcut=False, activation='relu6')
    N, Cin, H, W = 2, 8, 16, 16
    Cout = 16
    key = jax.random.PRNGKey(0)
    kx, kp, kp2 = jax.random.split(key, 3)
    x = jax.random.normal(kx, (N, Cin, H, W), jnp.float32)

    params = make_params(kp, Cin, Cout)
    ref = mscb_reference(x, params)

    # f32 matmuls, one image per grid step (v7x-style: 2 parallel steps)
    out_a = jax.block_until_ready(mscb_forward(x, params, jnp.float32,
                                               images_per_step=1))
    assert out_a.shape == (N, Cout, H, W)
    np.testing.assert_allclose(np.asarray(out_a), np.asarray(ref),
                               rtol=3e-4, atol=3e-4)

    # f32 matmuls, whole batch folded into a single step (v5e/v6e-style)
    out_b = jax.block_until_ready(mscb_forward(x, params, jnp.float32,
                                               images_per_step=2))
    np.testing.assert_allclose(np.asarray(out_b), np.asarray(ref),
                               rtol=3e-4, atol=3e-4)

    # bf16 matmul operands / f32 accumulation & f32 depthwise, auto step choice
    out_c = jax.block_until_ready(mscb_forward(x, params, jnp.bfloat16))
    np.testing.assert_allclose(np.asarray(out_c), np.asarray(ref),
                               rtol=5e-2, atol=2e-2)

    # cin == cout configuration: exact f32 residual path (skip rows dropped)
    params_eq = make_params(kp2, Cin, Cin)
    ref_eq = mscb_reference(x, params_eq)
    out_eq = jax.block_until_ready(mscb_forward(x, params_eq, jnp.float32))
    np.testing.assert_allclose(np.asarray(out_eq), np.asarray(ref_eq),
                               rtol=3e-4, atol=3e-4)

    print("KERNEL_OK")
</pallas_src>

<mosaic_0001>
module attributes {stable_mosaic.version = 11 : i64} {
  func.func @mscb_kernel(%arg0: i32, %arg1: memref<8x256xf32, #tpu.memory_space<vmem>>, %arg2: memref<32x8xf32, #tpu.memory_space<vmem>>, %arg3: memref<16x1xf32, #tpu.memory_space<vmem>>, %arg4: memref<16x1xf32, #tpu.memory_space<vmem>>, %arg5: memref<16x1xf32, #tpu.memory_space<vmem>>, %arg6: memref<16x9xf32, #tpu.memory_space<vmem>>, %arg7: memref<16x25xf32, #tpu.memory_space<vmem>>, %arg8: memref<3x16x1xf32, #tpu.memory_space<vmem>>, %arg9: memref<16x48xf32, #tpu.memory_space<vmem>>, %arg10: memref<16x1xf32, #tpu.memory_space<vmem>>, %arg11: memref<16x1xf32, #tpu.memory_space<vmem>>, %arg12: memref<16x256xf32, #tpu.memory_space<vmem>>, %arg13: memref<5x16x512xf32, #tpu.memory_space<vmem>>) attributes {dimension_semantics = [#tpu.dimension_semantics<parallel>], iteration_bounds = array<i64: 2>, scalar_prefetch = 0 : i64, scratch_operands = 1 : i64, tpu.core_type = #tpu.core_type<tc>, window_params = [{transform_indices = @transform_0, window_bounds = array<i64: 8, 256>}, {pipeline_mode = #tpu.pipeline_mode<synchronous>, transform_indices = @transform_1, window_bounds = array<i64: 32, 8>}, {pipeline_mode = #tpu.pipeline_mode<synchronous>, transform_indices = @transform_2, window_bounds = array<i64: 16, 1>}, {pipeline_mode = #tpu.pipeline_mode<synchronous>, transform_indices = @transform_3, window_bounds = array<i64: 16, 1>}, {pipeline_mode = #tpu.pipeline_mode<synchronous>, transform_indices = @transform_4, window_bounds = array<i64: 16, 1>}, {pipeline_mode = #tpu.pipeline_mode<synchronous>, transform_indices = @transform_5, window_bounds = array<i64: 16, 9>}, {pipeline_mode = #tpu.pipeline_mode<synchronous>, transform_indices = @transform_6, window_bounds = array<i64: 16, 25>}, {pipeline_mode = #tpu.pipeline_mode<synchronous>, transform_indices = @transform_7, window_bounds = array<i64: 3, 16, 1>}, {pipeline_mode = #tpu.pipeline_mode<synchronous>, transform_indices = @transform_8, window_bounds = array<i64: 16, 48>}, {pipeline_mode = #tpu.pipeline_mode<synchronous>, transform_indices = @transform_9, window_bounds = array<i64: 16, 1>}, {pipeline_mode = #tpu.pipeline_mode<synchronous>, transform_indices = @transform_10, window_bounds = array<i64: 16, 1>}, {transform_indices = @transform_11, window_bounds = array<i64: 16, 256>}]} {
    %c0 = arith.constant 0 : index
    %c0_0 = arith.constant 0 : index
    %0 = vector.load %arg1[%c0, %c0_0] : memref<8x256xf32, #tpu.memory_space<vmem>>, vector<8x256xf32>
    %c0_1 = arith.constant 0 : index
    %c0_2 = arith.constant 0 : index
    %1 = vector.load %arg2[%c0_1, %c0_2] : memref<32x8xf32, #tpu.memory_space<vmem>>, vector<32x8xf32>
    %cst = arith.constant dense<0.000000e+00> : vector<32x256xf32>
    %2 = tpu.matmul %1, %0, %cst {dimension_numbers = #tpu.dot_dimension_numbers<[1], [0], [0], [1], [0, 0, 1, 1], [], []>} : vector<32x8xf32>, vector<8x256xf32>, vector<32x256xf32> -> vector<32x256xf32>
    %3 = vector.extract_strided_slice %2 {offsets = [0, 0], sizes = [16, 256], strides = [1, 1]} : vector<32x256xf32> to vector<16x256xf32>
    %c0_3 = arith.constant 0 : index
    %c0_4 = arith.constant 0 : index
    %4 = vector.load %arg3[%c0_3, %c0_4] : memref<16x1xf32, #tpu.memory_space<vmem>>, vector<16x1xf32>
    %5 = vector.broadcast %4 : vector<16x1xf32> to vector<16x256xf32>
    %6 = arith.mulf %3, %5 : vector<16x256xf32>
    %c0_5 = arith.constant 0 : index
    %c0_6 = arith.constant 0 : index
    %7 = vector.load %arg4[%c0_5, %c0_6] : memref<16x1xf32, #tpu.memory_space<vmem>>, vector<16x1xf32>
    %8 = vector.broadcast %7 : vector<16x1xf32> to vector<16x256xf32>
    %9 = arith.addf %6, %8 : vector<16x256xf32>
    %cst_7 = arith.constant 0.000000e+00 : f32
    %10 = vector.broadcast %cst_7 : f32 to vector<16x256xf32>
    %11 = arith.maximumf %9, %10 : vector<16x256xf32>
    %cst_8 = arith.constant 6.000000e+00 : f32
    %12 = vector.broadcast %cst_8 : f32 to vector<16x256xf32>
    %13 = arith.minimumf %11, %12 : vector<16x256xf32>
    %14 = vector.extract_strided_slice %2 {offsets = [16, 0], sizes = [16, 256], strides = [1, 1]} : vector<32x256xf32> to vector<16x256xf32>
    %15 = tpu.iota {dimensions = array<i32: 1>} : vector<1x256xi32>
    %c16_i32 = arith.constant 16 : i32
    %c0_i32 = arith.constant 0 : i32
    %16 = arith.cmpi eq, %c16_i32, %c0_i32 : i32
    %c1_i32 = arith.constant 1 : i32
    %17 = arith.select %16, %c1_i32, %c16_i32 : i32
    %18 = vector.broadcast %17 : i32 to vector<1x256xi32>
    %19 = arith.remsi %15, %18 : vector<1x256xi32>
    %c0_i32_9 = arith.constant 0 : i32
    %20 = vector.broadcast %c0_i32_9 : i32 to vector<1x256xi32>
    %21 = arith.cmpi ne, %19, %20 : vector<1x256xi32>
    %c0_i32_10 = arith.constant 0 : i32
    %22 = vector.broadcast %c0_i32_10 : i32 to vector<1x256xi32>
    %23 = arith.cmpi slt, %19, %22 : vector<1x256xi32>
    %c0_i32_11 = arith.constant 0 : i32
    %24 = arith.cmpi slt, %17, %c0_i32_11 : i32
    %25 = vector.broadcast %24 : i1 to vector<1x256xi1>
    %26 = vector.broadcast %25 : vector<1x256xi1> to vector<1x256xi1>
    %27 = arith.xori %23, %26 : vector<1x256xi1>
    %28 = arith.andi %27, %21 : vector<1x256xi1>
    %29 = vector.broadcast %17 : i32 to vector<1x256xi32>
    %30 = arith.addi %19, %29 : vector<1x256xi32>
    %31 = arith.select %28, %30, %19 : vector<1x256xi1>, vector<1x256xi32>
    %cst_12 = arith.constant 0.000000e+00 : f32
    %32 = vector.broadcast %cst_12 : f32 to vector<16x128xf32>
    %cst_13 = arith.constant 0.000000e+00 : f32
    %33 = vector.broadcast %cst_13 : f32 to vector<16x128xf32>
    %c0_14 = arith.constant 0 : index
    %c0_15 = arith.constant 0 : index
    %c0_16 = arith.constant 0 : index
    %34 = vector.load %arg13[%c0_14, %c0_15, %c0_16] : memref<5x16x512xf32, #tpu.memory_space<vmem>>, vector<1x16x128xf32>
    %35 = vector.shape_cast %34 : vector<1x16x128xf32> to vector<16x128xf32>
    %36 = vector.shape_cast %32 : vector<16x128xf32> to vector<1x16x128xf32>
    tpu.vector_store %arg13[%c0_14, %c0_15, %c0_16], %36 {strides = array<i32>} : memref<5x16x512xf32, #tpu.memory_space<vmem>>, vector<1x16x128xf32>,
    %c0_17 = arith.constant 0 : index
    %c0_18 = arith.constant 0 : index
    %c384 = arith.constant 384 : index
    %37 = vector.load %arg13[%c0_17, %c0_18, %c384] : memref<5x16x512xf32, #tpu.memory_space<vmem>>, vector<1x16x128xf32>
    %38 = vector.shape_cast %37 : vector<1x16x128xf32> to vector<16x128xf32>
    %39 = vector.shape_cast %33 : vector<16x128xf32> to vector<1x16x128xf32>
    tpu.vector_store %arg13[%c0_17, %c0_18, %c384], %39 {strides = array<i32>} : memref<5x16x512xf32, #tpu.memory_space<vmem>>, vector<1x16x128xf32>,
    %c1 = arith.constant 1 : index
    %c0_19 = arith.constant 0 : index
    %c0_20 = arith.constant 0 : index
    %40 = vector.load %arg13[%c1, %c0_19, %c0_20] : memref<5x16x512xf32, #tpu.memory_space<vmem>>, vector<1x16x128xf32>
    %41 = vector.shape_cast %40 : vector<1x16x128xf32> to vector<16x128xf32>
    %42 = vector.shape_cast %32 : vector<16x128xf32> to vector<1x16x128xf32>
    tpu.vector_store %arg13[%c1, %c0_19, %c0_20], %42 {strides = array<i32>} : memref<5x16x512xf32, #tpu.memory_space<vmem>>, vector<1x16x128xf32>,
    %c1_21 = arith.constant 1 : index
    %c0_22 = arith.constant 0 : index
    %c384_23 = arith.constant 384 : index
    %43 = vector.load %arg13[%c1_21, %c0_22, %c384_23] : memref<5x16x512xf32, #tpu.memory_space<vmem>>, vector<1x16x128xf32>
    %44 = vector.shape_cast %43 : vector<1x16x128xf32> to vector<16x128xf32>
    %45 = vector.shape_cast %33 : vector<16x128xf32> to vector<1x16x128xf32>
    tpu.vector_store %arg13[%c1_21, %c0_22, %c384_23], %45 {strides = array<i32>} : memref<5x16x512xf32, #tpu.memory_space<vmem>>, vector<1x16x128xf32>,
    %c2 = arith.constant 2 : index
    %c0_24 = arith.constant 0 : index
    %c0_25 = arith.constant 0 : index
    %46 = vector.load %arg13[%c2, %c0_24, %c0_25] : memref<5x16x512xf32, #tpu.memory_space<vmem>>, vector<1x16x128xf32>
    %47 = vector.shape_cast %46 : vector<1x16x128xf32> to vector<16x128xf32>
    %48 = vector.shape_cast %32 : vector<16x128xf32> to vector<1x16x128xf32>
    tpu.vector_store %arg13[%c2, %c0_24, %c0_25], %48 {strides = array<i32>} : memref<5x16x512xf32, #tpu.memory_space<vmem>>, vector<1x16x128xf32>,
    %c2_26 = arith.constant 2 : index
    %c0_27 = arith.constant 0 : index
    %c384_28 = arith.constant 384 : index
    %49 = vector.load %arg13[%c2_26, %c0_27, %c384_28] : memref<5x16x512xf32, #tpu.memory_space<vmem>>, vector<1x16x128xf32>
    %50 = vector.shape_cast %49 : vector<1x16x128xf32> to vector<16x128xf32>
    %51 = vector.shape_cast %33 : vector<16x128xf32> to vector<1x16x128xf32>
    tpu.vector_store %arg13[%c2_26, %c0_27, %c384_28], %51 {strides = array<i32>} : memref<5x16x512xf32, #tpu.memory_space<vmem>>, vector<1x16x128xf32>,
    %c3 = arith.constant 3 : index
    %c0_29 = arith.constant 0 : index
    %c0_30 = arith.constant 0 : index
    %52 = vector.load %arg13[%c3, %c0_29, %c0_30] : memref<5x16x512xf32, #tpu.memory_space<vmem>>, vector<1x16x128xf32>
    %53 = vector.shape_cast %52 : vector<1x16x128xf32> to vector<16x128xf32>
    %54 = vector.shape_cast %32 : vector<16x128xf32> to vector<1x16x128xf32>
    tpu.vector_store %arg13[%c3, %c0_29, %c0_30], %54 {strides = array<i32>} : memref<5x16x512xf32, #tpu.memory_space<vmem>>, vector<1x16x128xf32>,
    %c3_31 = arith.constant 3 : index
    %c0_32 = arith.constant 0 : index
    %c384_33 = arith.constant 384 : index
    %55 = vector.load %arg13[%c3_31, %c0_32, %c384_33] : memref<5x16x512xf32, #tpu.memory_space<vmem>>, vector<1x16x128xf32>
    %56 = vector.shape_cast %55 : vector<1x16x128xf32> to vector<16x128xf32>
    %57 = vector.shape_cast %33 : vector<16x128xf32> to vector<1x16x128xf32>
    tpu.vector_store %arg13[%c3_31, %c0_32, %c384_33], %57 {strides = array<i32>} : memref<5x16x512xf32, #tpu.memory_space<vmem>>, vector<1x16x128xf32>,
    %c4 = arith.constant 4 : index
    %c0_34 = arith.constant 0 : index
    %c0_35 = arith.constant 0 : index
    %58 = vector.load %arg13[%c4, %c0_34, %c0_35] : memref<5x16x512xf32, #tpu.memory_space<vmem>>, vector<1x16x128xf32>
    %59 = vector.shape_cast %58 : vector<1x16x128xf32> to vector<16x128xf32>
    %60 = vector.shape_cast %32 : vector<16x128xf32> to vector<1x16x128xf32>
    tpu.vector_store %arg13[%c4, %c0_34, %c0_35], %60 {strides = array<i32>} : memref<5x16x512xf32, #tpu.memory_space<vmem>>, vector<1x16x128xf32>,
    %c4_36 = arith.constant 4 : index
    %c0_37 = arith.constant 0 : index
    %c384_38 = arith.constant 384 : index
    %61 = vector.load %arg13[%c4_36, %c0_37, %c384_38] : memref<5x16x512xf32, #tpu.memory_space<vmem>>, vector<1x16x128xf32>
    %62 = vector.shape_cast %61 : vector<1x16x128xf32> to vector<16x128xf32>
    %63 = vector.shape_cast %33 : vector<16x128xf32> to vector<1x16x128xf32>
    tpu.vector_store %arg13[%c4_36, %c0_37, %c384_38], %63 {strides = array<i32>} : memref<5x16x512xf32, #tpu.memory_space<vmem>>, vector<1x16x128xf32>,
    %c14_i32 = arith.constant 14 : i32
    %64 = vector.broadcast %c14_i32 : i32 to vector<1x256xi32>
    %65 = arith.cmpi slt, %31, %64 : vector<1x256xi32>
    %cst_39 = arith.constant 0.000000e+00 : f32
    %66 = vector.shape_cast %65 : vector<1x256xi1> to vector<1x256xi1>
    %67 = vector.broadcast %66 : vector<1x256xi1> to vector<16x256xi1>
    %68 = vector.broadcast %cst_39 : f32 to vector<16x256xf32>
    %69 = arith.select %67, %13, %68 : vector<16x256xi1>, vector<16x256xf32>
    %c0_40 = arith.constant 0 : index
    %c0_41 = arith.constant 0 : index
    %c128 = arith.constant 128 : index
    %70 = vector.load %arg13[%c0_40, %c0_41, %c128] : memref<5x16x512xf32, #tpu.memory_space<vmem>>, vector<1x16x256xf32>
    %71 = vector.shape_cast %70 : vector<1x16x256xf32> to vector<16x256xf32>
    %72 = vector.shape_cast %69 : vector<16x256xf32> to vector<1x16x256xf32>
    tpu.vector_store %arg13[%c0_40, %c0_41, %c128], %72 {strides = array<i32>} : memref<5x16x512xf32, #tpu.memory_space<vmem>>, vector<1x16x256xf32>,
    %c15_i32 = arith.constant 15 : i32
    %73 = vector.broadcast %c15_i32 : i32 to vector<1x256xi32>
    %74 = arith.cmpi slt, %31, %73 : vector<1x256xi32>
    %cst_42 = arith.constant 0.000000e+00 : f32
    %75 = vector.shape_cast %74 : vector<1x256xi1> to vector<1x256xi1>
    %76 = vector.broadcast %75 : vector<1x256xi1> to vector<16x256xi1>
    %77 = vector.broadcast %cst_42 : f32 to vector<16x256xf32>
    %78 = arith.select %76, %13, %77 : vector<16x256xi1>, vector<16x256xf32>
    %c1_43 = arith.constant 1 : index
    %c0_44 = arith.constant 0 : index
    %c128_45 = arith.constant 128 : index
    %79 = vector.load %arg13[%c1_43, %c0_44, %c128_45] : memref<5x16x512xf32, #tpu.memory_space<vmem>>, vector<1x16x256xf32>
    %80 = vector.shape_cast %79 : vector<1x16x256xf32> to vector<16x256xf32>
    %81 = vector.shape_cast %78 : vector<16x256xf32> to vector<1x16x256xf32>
    tpu.vector_store %arg13[%c1_43, %c0_44, %c128_45], %81 {strides = array<i32>} : memref<5x16x512xf32, #tpu.memory_space<vmem>>, vector<1x16x256xf32>,
    %c2_46 = arith.constant 2 : index
    %c0_47 = arith.constant 0 : index
    %c128_48 = arith.constant 128 : index
    %82 = vector.load %arg13[%c2_46, %c0_47, %c128_48] : memref<5x16x512xf32, #tpu.memory_space<vmem>>, vector<1x16x256xf32>
    %83 = vector.shape_cast %82 : vector<1x16x256xf32> to vector<16x256xf32>
    %84 = vector.shape_cast %13 : vector<16x256xf32> to vector<1x16x256xf32>
    tpu.vector_store %arg13[%c2_46, %c0_47, %c128_48], %84 {strides = array<i32>} : memref<5x16x512xf32, #tpu.memory_space<vmem>>, vector<1x16x256xf32>,
    %c1_i32_49 = arith.constant 1 : i32
    %85 = vector.broadcast %c1_i32_49 : i32 to vector<1x256xi32>
    %86 = arith.cmpi sge, %31, %85 : vector<1x256xi32>
    %cst_50 = arith.constant 0.000000e+00 : f32
    %87 = vector.shape_cast %86 : vector<1x256xi1> to vector<1x256xi1>
    %88 = vector.broadcast %87 : vector<1x256xi1> to vector<16x256xi1>
    %89 = vector.broadcast %cst_50 : f32 to vector<16x256xf32>
    %90 = arith.select %88, %13, %89 : vector<16x256xi1>, vector<16x256xf32>
    %c3_51 = arith.constant 3 : index
    %c0_52 = arith.constant 0 : index
    %c128_53 = arith.constant 128 : index
    %91 = vector.load %arg13[%c3_51, %c0_52, %c128_53] : memref<5x16x512xf32, #tpu.memory_space<vmem>>, vector<1x16x256xf32>
    %92 = vector.shape_cast %91 : vector<1x16x256xf32> to vector<16x256xf32>
    %93 = vector.shape_cast %90 : vector<16x256xf32> to vector<1x16x256xf32>
    tpu.vector_store %arg13[%c3_51, %c0_52, %c128_53], %93 {strides = array<i32>} : memref<5x16x512xf32, #tpu.memory_space<vmem>>, vector<1x16x256xf32>,
    %c2_i32 = arith.constant 2 : i32
    %94 = vector.broadcast %c2_i32 : i32 to vector<1x256xi32>
    %95 = arith.cmpi sge, %31, %94 : vector<1x256xi32>
    %cst_54 = arith.constant 0.000000e+00 : f32
    %96 = vector.shape_cast %95 : vector<1x256xi1> to vector<1x256xi1>
    %97 = vector.broadcast %96 : vector<1x256xi1> to vector<16x256xi1>
    %98 = vector.broadcast %cst_54 : f32 to vector<16x256xf32>
    %99 = arith.select %97, %13, %98 : vector<16x256xi1>, vector<16x256xf32>
    %c4_55 = arith.constant 4 : index
    %c0_56 = arith.constant 0 : index
    %c128_57 = arith.constant 128 : index
    %100 = vector.load %arg13[%c4_55, %c0_56, %c128_57] : memref<5x16x512xf32, #tpu.memory_space<vmem>>, vector<1x16x256xf32>
    %101 = vector.shape_cast %100 : vector<1x16x256xf32> to vector<16x256xf32>
    %102 = vector.shape_cast %99 : vector<16x256xf32> to vector<1x16x256xf32>
    tpu.vector_store %arg13[%c4_55, %c0_56, %c128_57], %102 {strides = array<i32>} : memref<5x16x512xf32, #tpu.memory_space<vmem>>, vector<1x16x256xf32>,
    %c0_58 = arith.constant 0 : index
    %c0_59 = arith.constant 0 : index
    %103 = vector.load %arg5[%c0_58, %c0_59] : memref<16x1xf32, #tpu.memory_space<vmem>>, vector<16x1xf32>
    %c0_60 = arith.constant 0 : index
    %c0_61 = arith.constant 0 : index
    %c0_62 = arith.constant 0 : index
    %104 = vector.load %arg8[%c0_60, %c0_61, %c0_62] : memref<3x16x1xf32, #tpu.memory_space<vmem>>, vector<1x16x1xf32>
    %105 = vector.shape_cast %104 : vector<1x16x1xf32> to vector<16x1xf32>
    %106 = vector.broadcast %103 : vector<16x1xf32> to vector<16x256xf32>
    %107 = arith.mulf %13, %106 : vector<16x256xf32>
    %108 = vector.broadcast %105 : vector<16x1xf32> to vector<16x256xf32>
    %109 = arith.addf %107, %108 : vector<16x256xf32>
    %cst_63 = arith.constant 0.000000e+00 : f32
    %110 = vector.broadcast %cst_63 : f32 to vector<16x256xf32>
    %111 = arith.maximumf %109, %110 : vector<16x256xf32>
    %cst_64 = arith.constant 6.000000e+00 : f32
    %112 = vector.broadcast %cst_64 : f32 to vector<16x256xf32>
    %113 = arith.minimumf %111, %112 : vector<16x256xf32>
    %c0_65 = arith.constant 0 : index
    %c0_66 = arith.constant 0 : index
    %114 = vector.load %arg9[%c0_65, %c0_66] : memref<16x48xf32, #tpu.memory_space<vmem>>, vector<16x16xf32>
    %cst_67 = arith.constant dense<0.000000e+00> : vector<16x256xf32>
    %115 = tpu.matmul %114, %113, %cst_67 {dimension_numbers = #tpu.dot_dimension_numbers<[1], [0], [0], [1], [0, 0, 1, 1], [], []>} : vector<16x16xf32>, vector<16x256xf32>, vector<16x256xf32> -> vector<16x256xf32>
    %c0_68 = arith.constant 0 : index
    %c0_69 = arith.constant 0 : index
    %116 = vector.load %arg6[%c0_68, %c0_69] : memref<16x9xf32, #tpu.memory_space<vmem>>, vector<16x9xf32>
    %c1_70 = arith.constant 1 : index
    %c0_71 = arith.constant 0 : index
    %c0_72 = arith.constant 0 : index
    %117 = vector.load %arg8[%c1_70, %c0_71, %c0_72] : memref<3x16x1xf32, #tpu.memory_space<vmem>>, vector<1x16x1xf32>
    %118 = vector.shape_cast %117 : vector<1x16x1xf32> to vector<16x1xf32>
    %c1_73 = arith.constant 1 : index
    %c0_74 = arith.constant 0 : index
    %c111 = arith.constant 111 : index
    %119 = vector.load %arg13[%c1_73, %c0_74, %c111] : memref<5x16x512xf32, #tpu.memory_space<vmem>>, vector<1x16x256xf32>
    %120 = vector.shape_cast %119 : vector<1x16x256xf32> to vector<16x256xf32>
    %121 = vector.extract_strided_slice %116 {offsets = [0, 0], sizes = [16, 1], strides = [1, 1]} : vector<16x9xf32> to vector<16x1xf32>
    %122 = vector.broadcast %121 : vector<16x1xf32> to vector<16x256xf32>
    %123 = arith.mulf %120, %122 : vector<16x256xf32>
    %c2_75 = arith.constant 2 : index
    %c0_76 = arith.constant 0 : index
    %c112 = arith.constant 112 : index
    %124 = vector.load %arg13[%c2_75, %c0_76, %c112] : memref<5x16x512xf32, #tpu.memory_space<vmem>>, vector<1x16x256xf32>
    %125 = vector.shape_cast %124 : vector<1x16x256xf32> to vector<16x256xf32>
    %126 = vector.extract_strided_slice %116 {offsets = [0, 1], sizes = [16, 1], strides = [1, 1]} : vector<16x9xf32> to vector<16x1xf32>
    %127 = vector.broadcast %126 : vector<16x1xf32> to vector<16x256xf32>
    %128 = arith.mulf %125, %127 : vector<16x256xf32>
    %129 = arith.addf %123, %128 : vector<16x256xf32>
    %c3_77 = arith.constant 3 : index
    %c0_78 = arith.constant 0 : index
    %c113 = arith.constant 113 : index
    %130 = vector.load %arg13[%c3_77, %c0_78, %c113] : memref<5x16x512xf32, #tpu.memory_space<vmem>>, vector<1x16x256xf32>
    %131 = vector.shape_cast %130 : vector<1x16x256xf32> to vector<16x256xf32>
    %132 = vector.extract_strided_slice %116 {offsets = [0, 2], sizes = [16, 1], strides = [1, 1]} : vector<16x9xf32> to vector<16x1xf32>
    %133 = vector.broadcast %132 : vector<16x1xf32> to vector<16x256xf32>
    %134 = arith.mulf %131, %133 : vector<16x256xf32>
    %135 = arith.addf %129, %134 : vector<16x256xf32>
    %c1_79 = arith.constant 1 : index
    %c0_80 = arith.constant 0 : index
    %c127 = arith.constant 127 : index
    %136 = vector.load %arg13[%c1_79, %c0_80, %c127] : memref<5x16x512xf32, #tpu.memory_space<vmem>>, vector<1x16x256xf32>
    %137 = vector.shape_cast %136 : vector<1x16x256xf32> to vector<16x256xf32>
    %138 = vector.extract_strided_slice %116 {offsets = [0, 3], sizes = [16, 1], strides = [1, 1]} : vector<16x9xf32> to vector<16x1xf32>
    %139 = vector.broadcast %138 : vector<16x1xf32> to vector<16x256xf32>
    %140 = arith.mulf %137, %139 : vector<16x256xf32>
    %c2_81 = arith.constant 2 : index
    %c0_82 = arith.constant 0 : index
    %c128_83 = arith.constant 128 : index
    %141 = vector.load %arg13[%c2_81, %c0_82, %c128_83] : memref<5x16x512xf32, #tpu.memory_space<vmem>>, vector<1x16x256xf32>
    %142 = vector.shape_cast %141 : vector<1x16x256xf32> to vector<16x256xf32>
    %143 = vector.extract_strided_slice %116 {offsets = [0, 4], sizes = [16, 1], strides = [1, 1]} : vector<16x9xf32> to vector<16x1xf32>
    %144 = vector.broadcast %143 : vector<16x1xf32> to vector<16x256xf32>
    %145 = arith.mulf %142, %144 : vector<16x256xf32>
    %146 = arith.addf %140, %145 : vector<16x256xf32>
    %c3_84 = arith.constant 3 : index
    %c0_85 = arith.constant 0 : index
    %c129 = arith.constant 129 : index
    %147 = vector.load %arg13[%c3_84, %c0_85, %c129] : memref<5x16x512xf32, #tpu.memory_space<vmem>>, vector<1x16x256xf32>
    %148 = vector.shape_cast %147 : vector<1x16x256xf32> to vector<16x256xf32>
    %149 = vector.extract_strided_slice %116 {offsets = [0, 5], sizes = [16, 1], strides = [1, 1]} : vector<16x9xf32> to vector<16x1xf32>
    %150 = vector.broadcast %149 : vector<16x1xf32> to vector<16x256xf32>
    %151 = arith.mulf %148, %150 : vector<16x256xf32>
    %152 = arith.addf %146, %151 : vector<16x256xf32>
    %153 = arith.addf %135, %152 : vector<16x256xf32>
    %c1_86 = arith.constant 1 : index
    %c0_87 = arith.constant 0 : index
    %c143 = arith.constant 143 : index
    %154 = vector.load %arg13[%c1_86, %c0_87, %c143] : memref<5x16x512xf32, #tpu.memory_space<vmem>>, vector<1x16x256xf32>
    %155 = vector.shape_cast %154 : vector<1x16x256xf32> to vector<16x256xf32>
    %156 = vector.extract_strided_slice %116 {offsets = [0, 6], sizes = [16, 1], strides = [1, 1]} : vector<16x9xf32> to vector<16x1xf32>
    %157 = vector.broadcast %156 : vector<16x1xf32> to vector<16x256xf32>
    %158 = arith.mulf %155, %157 : vector<16x256xf32>
    %c2_88 = arith.constant 2 : index
    %c0_89 = arith.constant 0 : index
    %c144 = arith.constant 144 : index
    %159 = vector.load %arg13[%c2_88, %c0_89, %c144] : memref<5x16x512xf32, #tpu.memory_space<vmem>>, vector<1x16x256xf32>
    %160 = vector.shape_cast %159 : vector<1x16x256xf32> to vector<16x256xf32>
    %161 = vector.extract_strided_slice %116 {offsets = [0, 7], sizes = [16, 1], strides = [1, 1]} : vector<16x9xf32> to vector<16x1xf32>
    %162 = vector.broadcast %161 : vector<16x1xf32> to vector<16x256xf32>
    %163 = arith.mulf %160, %162 : vector<16x256xf32>
    %164 = arith.addf %158, %163 : vector<16x256xf32>
    %c3_90 = arith.constant 3 : index
    %c0_91 = arith.constant 0 : index
    %c145 = arith.constant 145 : index
    %165 = vector.load %arg13[%c3_90, %c0_91, %c145] : memref<5x16x512xf32, #tpu.memory_space<vmem>>, vector<1x16x256xf32>
    %166 = vector.shape_cast %165 : vector<1x16x256xf32> to vector<16x256xf32>
    %167 = vector.extract_strided_slice %116 {offsets = [0, 8], sizes = [16, 1], strides = [1, 1]} : vector<16x9xf32> to vector<16x1xf32>
    %168 = vector.broadcast %167 : vector<16x1xf32> to vector<16x256xf32>
    %169 = arith.mulf %166, %168 : vector<16x256xf32>
    %170 = arith.addf %164, %169 : vector<16x256xf32>
    %171 = arith.addf %153, %170 : vector<16x256xf32>
    %172 = vector.broadcast %118 : vector<16x1xf32> to vector<16x256xf32>
    %173 = arith.addf %171, %172 : vector<16x256xf32>
    %cst_92 = arith.constant 0.000000e+00 : f32
    %174 = vector.broadcast %cst_92 : f32 to vector<16x256xf32>
    %175 = arith.maximumf %173, %174 : vector<16x256xf32>
    %cst_93 = arith.constant 6.000000e+00 : f32
    %176 = vector.broadcast %cst_93 : f32 to vector<16x256xf32>
    %177 = arith.minimumf %175, %176 : vector<16x256xf32>
    %c0_94 = arith.constant 0 : index
    %c16 = arith.constant 16 : index
    %178 = vector.load %arg9[%c0_94, %c16] : memref<16x48xf32, #tpu.memory_space<vmem>>, vector<16x16xf32>
    %cst_95 = arith.constant dense<0.000000e+00> : vector<16x256xf32>
    %179 = tpu.matmul %178, %177, %cst_95 {dimension_numbers = #tpu.dot_dimension_numbers<[1], [0], [0], [1], [0, 0, 1, 1], [], []>} : vector<16x16xf32>, vector<16x256xf32>, vector<16x256xf32> -> vector<16x256xf32>
    %180 = arith.addf %115, %179 : vector<16x256xf32>
    %c0_96 = arith.constant 0 : index
    %c0_97 = arith.constant 0 : index
    %181 = vector.load %arg7[%c0_96, %c0_97] : memref<16x25xf32, #tpu.memory_space<vmem>>, vector<16x25xf32>
    %c2_98 = arith.constant 2 : index
    %c0_99 = arith.constant 0 : index
    %c0_100 = arith.constant 0 : index
    %182 = vector.load %arg8[%c2_98, %c0_99, %c0_100] : memref<3x16x1xf32, #tpu.memory_space<vmem>>, vector<1x16x1xf32>
    %183 = vector.shape_cast %182 : vector<1x16x1xf32> to vector<16x1xf32>
    %c0_101 = arith.constant 0 : index
    %c0_102 = arith.constant 0 : index
    %c94 = arith.constant 94 : index
    %184 = vector.load %arg13[%c0_101, %c0_102, %c94] : memref<5x16x512xf32, #tpu.memory_space<vmem>>, vector<1x16x256xf32>
    %185 = vector.shape_cast %184 : vector<1x16x256xf32> to vector<16x256xf32>
    %186 = vector.extract_strided_slice %181 {offsets = [0, 0], sizes = [16, 1], strides = [1, 1]} : vector<16x25xf32> to vector<16x1xf32>
    %187 = vector.broadcast %186 : vector<16x1xf32> to vector<16x256xf32>
    %188 = arith.mulf %185, %187 : vector<16x256xf32>
    %c1_103 = arith.constant 1 : index
    %c0_104 = arith.constant 0 : index
    %c95 = arith.constant 95 : index
    %189 = vector.load %arg13[%c1_103, %c0_104, %c95] : memref<5x16x512xf32, #tpu.memory_space<vmem>>, vector<1x16x256xf32>
    %190 = vector.shape_cast %189 : vector<1x16x256xf32> to vector<16x256xf32>
    %191 = vector.extract_strided_slice %181 {offsets = [0, 1], sizes = [16, 1], strides = [1, 1]} : vector<16x25xf32> to vector<16x1xf32>
    %192 = vector.broadcast %191 : vector<16x1xf32> to vector<16x256xf32>
    %193 = arith.mulf %190, %192 : vector<16x256xf32>
    %194 = arith.addf %188, %193 : vector<16x256xf32>
    %c2_105 = arith.constant 2 : index
    %c0_106 = arith.constant 0 : index
    %c96 = arith.constant 96 : index
    %195 = vector.load %arg13[%c2_105, %c0_106, %c96] : memref<5x16x512xf32, #tpu.memory_space<vmem>>, vector<1x16x256xf32>
    %196 = vector.shape_cast %195 : vector<1x16x256xf32> to vector<16x256xf32>
    %197 = vector.extract_strided_slice %181 {offsets = [0, 2], sizes = [16, 1], strides = [1, 1]} : vector<16x25xf32> to vector<16x1xf32>
    %198 = vector.broadcast %197 : vector<16x1xf32> to vector<16x256xf32>
    %199 = arith.mulf %196, %198 : vector<16x256xf32>
    %200 = arith.addf %194, %199 : vector<16x256xf32>
    %c3_107 = arith.constant 3 : index
    %c0_108 = arith.constant 0 : index
    %c97 = arith.constant 97 : index
    %201 = vector.load %arg13[%c3_107, %c0_108, %c97] : memref<5x16x512xf32, #tpu.memory_space<vmem>>, vector<1x16x256xf32>
    %202 = vector.shape_cast %201 : vector<1x16x256xf32> to vector<16x256xf32>
    %203 = vector.extract_strided_slice %181 {offsets = [0, 3], sizes = [16, 1], strides = [1, 1]} : vector<16x25xf32> to vector<16x1xf32>
    %204 = vector.broadcast %203 : vector<16x1xf32> to vector<16x256xf32>
    %205 = arith.mulf %202, %204 : vector<16x256xf32>
    %206 = arith.addf %200, %205 : vector<16x256xf32>
    %c4_109 = arith.constant 4 : index
    %c0_110 = arith.constant 0 : index
    %c98 = arith.constant 98 : index
    %207 = vector.load %arg13[%c4_109, %c0_110, %c98] : memref<5x16x512xf32, #tpu.memory_space<vmem>>, vector<1x16x256xf32>
    %208 = vector.shape_cast %207 : vector<1x16x256xf32> to vector<16x256xf32>
    %209 = vector.extract_strided_slice %181 {offsets = [0, 4], sizes = [16, 1], strides = [1, 1]} : vector<16x25xf32> to vector<16x1xf32>
    %210 = vector.broadcast %209 : vector<16x1xf32> to vector<16x256xf32>
    %211 = arith.mulf %208, %210 : vector<16x256xf32>
    %212 = arith.addf %206, %211 : vector<16x256xf32>
    %c0_111 = arith.constant 0 : index
    %c0_112 = arith.constant 0 : index
    %c110 = arith.constant 110 : index
    %213 = vector.load %arg13[%c0_111, %c0_112, %c110] : memref<5x16x512xf32, #tpu.memory_space<vmem>>, vector<1x16x256xf32>
    %214 = vector.shape_cast %213 : vector<1x16x256xf32> to vector<16x256xf32>
    %215 = vector.extract_strided_slice %181 {offsets = [0, 5], sizes = [16, 1], strides = [1, 1]} : vector<16x25xf32> to vector<16x1xf32>
    %216 = vector.broadcast %215 : vector<16x1xf32> to vector<16x256xf32>
    %217 = arith.mulf %214, %216 : vector<16x256xf32>
    %c1_113 = arith.constant 1 : index
    %c0_114 = arith.constant 0 : index
    %c111_115 = arith.constant 111 : index
    %218 = vector.load %arg13[%c1_113, %c0_114, %c111_115] : memref<5x16x512xf32, #tpu.memory_space<vmem>>, vector<1x16x256xf32>
    %219 = vector.shape_cast %218 : vector<1x16x256xf32> to vector<16x256xf32>
    %220 = vector.extract_strided_slice %181 {offsets = [0, 6], sizes = [16, 1], strides = [1, 1]} : vector<16x25xf32> to vector<16x1xf32>
    %221 = vector.broadcast %220 : vector<16x1xf32> to vector<16x256xf32>
    %222 = arith.mulf %219, %221 : vector<16x256xf32>
    %223 = arith.addf %217, %222 : vector<16x256xf32>
    %c2_116 = arith.constant 2 : index
    %c0_117 = arith.constant 0 : index
    %c112_118 = arith.constant 112 : index
    %224 = vector.load %arg13[%c2_116, %c0_117, %c112_118] : memref<5x16x512xf32, #tpu.memory_space<vmem>>, vector<1x16x256xf32>
    %225 = vector.shape_cast %224 : vector<1x16x256xf32> to vector<16x256xf32>
    %226 = vector.extract_strided_slice %181 {offsets = [0, 7], sizes = [16, 1], strides = [1, 1]} : vector<16x25xf32> to vector<16x1xf32>
    %227 = vector.broadcast %226 : vector<16x1xf32> to vector<16x256xf32>
    %228 = arith.mulf %225, %227 : vector<16x256xf32>
    %229 = arith.addf %223, %228 : vector<16x256xf32>
    %c3_119 = arith.constant 3 : index
    %c0_120 = arith.constant 0 : index
    %c113_121 = arith.constant 113 : index
    %230 = vector.load %arg13[%c3_119, %c0_120, %c113_121] : memref<5x16x512xf32, #tpu.memory_space<vmem>>, vector<1x16x256xf32>
    %231 = vector.shape_cast %230 : vector<1x16x256xf32> to vector<16x256xf32>
    %232 = vector.extract_strided_slice %181 {offsets = [0, 8], sizes = [16, 1], strides = [1, 1]} : vector<16x25xf32> to vector<16x1xf32>
    %233 = vector.broadcast %232 : vector<16x1xf32> to vector<16x256xf32>
    %234 = arith.mulf %231, %233 : vector<16x256xf32>
    %235 = arith.addf %229, %234 : vector<16x256xf32>
    %c4_122 = arith.constant 4 : index
    %c0_123 = arith.constant 0 : index
    %c114 = arith.constant 114 : index
    %236 = vector.load %arg13[%c4_122, %c0_123, %c114] : memref<5x16x512xf32, #tpu.memory_space<vmem>>, vector<1x16x256xf32>
    %237 = vector.shape_cast %236 : vector<1x16x256xf32> to vector<16x256xf32>
    %238 = vector.extract_strided_slice %181 {offsets = [0, 9], sizes = [16, 1], strides = [1, 1]} : vector<16x25xf32> to vector<16x1xf32>
    %239 = vector.broadcast %238 : vector<16x1xf32> to vector<16x256xf32>
    %240 = arith.mulf %237, %239 : vector<16x256xf32>
    %241 = arith.addf %235, %240 : vector<16x256xf32>
    %242 = arith.addf %212, %241 : vector<16x256xf32>
    %c0_124 = arith.constant 0 : index
    %c0_125 = arith.constant 0 : index
    %c126 = arith.constant 126 : index
    %243 = vector.load %arg13[%c0_124, %c0_125, %c126] : memref<5x16x512xf32, #tpu.memory_space<vmem>>, vector<1x16x256xf32>
    %244 = vector.shape_cast %243 : vector<1x16x256xf32> to vector<16x256xf32>
    %245 = vector.extract_strided_slice %181 {offsets = [0, 10], sizes = [16, 1], strides = [1, 1]} : vector<16x25xf32> to vector<16x1xf32>
    %246 = vector.broadcast %245 : vector<16x1xf32> to vector<16x256xf32>
    %247 = arith.mulf %244, %246 : vector<16x256xf32>
    %c1_126 = arith.constant 1 : index
    %c0_127 = arith.constant 0 : index
    %c127_128 = arith.constant 127 : index
    %248 = vector.load %arg13[%c1_126, %c0_127, %c127_128] : memref<5x16x512xf32, #tpu.memory_space<vmem>>, vector<1x16x256xf32>
    %249 = vector.shape_cast %248 : vector<1x16x256xf32> to vector<16x256xf32>
    %250 = vector.extract_strided_slice %181 {offsets = [0, 11], sizes = [16, 1], strides = [1, 1]} : vector<16x25xf32> to vector<16x1xf32>
    %251 = vector.broadcast %250 : vector<16x1xf32> to vector<16x256xf32>
    %252 = arith.mulf %249, %251 : vector<16x256xf32>
    %253 = arith.addf %247, %252 : vector<16x256xf32>
    %c2_129 = arith.constant 2 : index
    %c0_130 = arith.constant 0 : index
    %c128_131 = arith.constant 128 : index
    %254 = vector.load %arg13[%c2_129, %c0_130, %c128_131] : memref<5x16x512xf32, #tpu.memory_space<vmem>>, vector<1x16x256xf32>
    %255 = vector.shape_cast %254 : vector<1x16x256xf32> to vector<16x256xf32>
    %256 = vector.extract_strided_slice %181 {offsets = [0, 12], sizes = [16, 1], strides = [1, 1]} : vector<16x25xf32> to vector<16x1xf32>
    %257 = vector.broadcast %256 : vector<16x1xf32> to vector<16x256xf32>
    %258 = arith.mulf %255, %257 : vector<16x256xf32>
    %259 = arith.addf %253, %258 : vector<16x256xf32>
    %c3_132 = arith.constant 3 : index
    %c0_133 = arith.constant 0 : index
    %c129_134 = arith.constant 129 : index
    %260 = vector.load %arg13[%c3_132, %c0_133, %c129_134] : memref<5x16x512xf32, #tpu.memory_space<vmem>>, vector<1x16x256xf32>
    %261 = vector.shape_cast %260 : vector<1x16x256xf32> to vector<16x256xf32>
    %262 = vector.extract_strided_slice %181 {offsets = [0, 13], sizes = [16, 1], strides = [1, 1]} : vector<16x25xf32> to vector<16x1xf32>
    %263 = vector.broadcast %262 : vector<16x1xf32> to vector<16x256xf32>
    %264 = arith.mulf %261, %263 : vector<16x256xf32>
    %265 = arith.addf %259, %264 : vector<16x256xf32>
    %c4_135 = arith.constant 4 : index
    %c0_136 = arith.constant 0 : index
    %c130 = arith.constant 130 : index
    %266 = vector.load %arg13[%c4_135, %c0_136, %c130] : memref<5x16x512xf32, #tpu.memory_space<vmem>>, vector<1x16x256xf32>
    %267 = vector.shape_cast %266 : vector<1x16x256xf32> to vector<16x256xf32>
    %268 = vector.extract_strided_slice %181 {offsets = [0, 14], sizes = [16, 1], strides = [1, 1]} : vector<16x25xf32> to vector<16x1xf32>
    %269 = vector.broadcast %268 : vector<16x1xf32> to vector<16x256xf32>
    %270 = arith.mulf %267, %269 : vector<16x256xf32>
    %271 = arith.addf %265, %270 : vector<16x256xf32>
    %272 = arith.addf %242, %271 : vector<16x256xf32>
    %c0_137 = arith.constant 0 : index
    %c0_138 = arith.constant 0 : index
    %c142 = arith.constant 142 : index
    %273 = vector.load %arg13[%c0_137, %c0_138, %c142] : memref<5x16x512xf32, #tpu.memory_space<vmem>>, vector<1x16x256xf32>
    %274 = vector.shape_cast %273 : vector<1x16x256xf32> to vector<16x256xf32>
    %275 = vector.extract_strided_slice %181 {offsets = [0, 15], sizes = [16, 1], strides = [1, 1]} : vector<16x25xf32> to vector<16x1xf32>
    %276 = vector.broadcast %275 : vector<16x1xf32> to vector<16x256xf32>
    %277 = arith.mulf %274, %276 : vector<16x256xf32>
    %c1_139 = arith.constant 1 : index
    %c0_140 = arith.constant 0 : index
    %c143_141 = arith.constant 143 : index
    %278 = vector.load %arg13[%c1_139, %c0_140, %c143_141] : memref<5x16x512xf32, #tpu.memory_space<vmem>>, vector<1x16x256xf32>
    %279 = vector.shape_cast %278 : vector<1x16x256xf32> to vector<16x256xf32>
    %280 = vector.extract_strided_slice %181 {offsets = [0, 16], sizes = [16, 1], strides = [1, 1]} : vector<16x25xf32> to vector<16x1xf32>
    %281 = vector.broadcast %280 : vector<16x1xf32> to vector<16x256xf32>
    %282 = arith.mulf %279, %281 : vector<16x256xf32>
    %283 = arith.addf %277, %282 : vector<16x256xf32>
    %c2_142 = arith.constant 2 : index
    %c0_143 = arith.constant 0 : index
    %c144_144 = arith.constant 144 : index
    %284 = vector.load %arg13[%c2_142, %c0_143, %c144_144] : memref<5x16x512xf32, #tpu.memory_space<vmem>>, vector<1x16x256xf32>
    %285 = vector.shape_cast %284 : vector<1x16x256xf32> to vector<16x256xf32>
    %286 = vector.extract_strided_slice %181 {offsets = [0, 17], sizes = [16, 1], strides = [1, 1]} : vector<16x25xf32> to vector<16x1xf32>
    %287 = vector.broadcast %286 : vector<16x1xf32> to vector<16x256xf32>
    %288 = arith.mulf %285, %287 : vector<16x256xf32>
    %289 = arith.addf %283, %288 : vector<16x256xf32>
    %c3_145 = arith.constant 3 : index
    %c0_146 = arith.constant 0 : index
    %c145_147 = arith.constant 145 : index
    %290 = vector.load %arg13[%c3_145, %c0_146, %c145_147] : memref<5x16x512xf32, #tpu.memory_space<vmem>>, vector<1x16x256xf32>
    %291 = vector.shape_cast %290 : vector<1x16x256xf32> to vector<16x256xf32>
    %292 = vector.extract_strided_slice %181 {offsets = [0, 18], sizes = [16, 1], strides = [1, 1]} : vector<16x25xf32> to vector<16x1xf32>
    %293 = vector.broadcast %292 : vector<16x1xf32> to vector<16x256xf32>
    %294 = arith.mulf %291, %293 : vector<16x256xf32>
    %295 = arith.addf %289, %294 : vector<16x256xf32>
    %c4_148 = arith.constant 4 : index
    %c0_149 = arith.constant 0 : index
    %c146 = arith.constant 146 : index
    %296 = vector.load %arg13[%c4_148, %c0_149, %c146] : memref<5x16x512xf32, #tpu.memory_space<vmem>>, vector<1x16x256xf32>
    %297 = vector.shape_cast %296 : vector<1x16x256xf32> to vector<16x256xf32>
    %298 = vector.extract_strided_slice %181 {offsets = [0, 19], sizes = [16, 1], strides = [1, 1]} : vector<16x25xf32> to vector<16x1xf32>
    %299 = vector.broadcast %298 : vector<16x1xf32> to vector<16x256xf32>
    %300 = arith.mulf %297, %299 : vector<16x256xf32>
    %301 = arith.addf %295, %300 : vector<16x256xf32>
    %302 = arith.addf %272, %301 : vector<16x256xf32>
    %c0_150 = arith.constant 0 : index
    %c0_151 = arith.constant 0 : index
    %c158 = arith.constant 158 : index
    %303 = vector.load %arg13[%c0_150, %c0_151, %c158] : memref<5x16x512xf32, #tpu.memory_space<vmem>>, vector<1x16x256xf32>
    %304 = vector.shape_cast %303 : vector<1x16x256xf32> to vector<16x256xf32>
    %305 = vector.extract_strided_slice %181 {offsets = [0, 20], sizes = [16, 1], strides = [1, 1]} : vector<16x25xf32> to vector<16x1xf32>
    %306 = vector.broadcast %305 : vector<16x1xf32> to vector<16x256xf32>
    %307 = arith.mulf %304, %306 : vector<16x256xf32>
    %c1_152 = arith.constant 1 : index
    %c0_153 = arith.constant 0 : index
    %c159 = arith.constant 159 : index
    %308 = vector.load %arg13[%c1_152, %c0_153, %c159] : memref<5x16x512xf32, #tpu.memory_space<vmem>>, vector<1x16x256xf32>
    %309 = vector.shape_cast %308 : vector<1x16x256xf32> to vector<16x256xf32>
    %310 = vector.extract_strided_slice %181 {offsets = [0, 21], sizes = [16, 1], strides = [1, 1]} : vector<16x25xf32> to vector<16x1xf32>
    %311 = vector.broadcast %310 : vector<16x1xf32> to vector<16x256xf32>
    %312 = arith.mulf %309, %311 : vector<16x256xf32>
    %313 = arith.addf %307, %312 : vector<16x256xf32>
    %c2_154 = arith.constant 2 : index
    %c0_155 = arith.constant 0 : index
    %c160 = arith.constant 160 : index
    %314 = vector.load %arg13[%c2_154, %c0_155, %c160] : memref<5x16x512xf32, #tpu.memory_space<vmem>>, vector<1x16x256xf32>
    %315 = vector.shape_cast %314 : vector<1x16x256xf32> to vector<16x256xf32>
    %316 = vector.extract_strided_slice %181 {offsets = [0, 22], sizes = [16, 1], strides = [1, 1]} : vector<16x25xf32> to vector<16x1xf32>
    %317 = vector.broadcast %316 : vector<16x1xf32> to vector<16x256xf32>
    %318 = arith.mulf %315, %317 : vector<16x256xf32>
    %319 = arith.addf %313, %318 : vector<16x256xf32>
    %c3_156 = arith.constant 3 : index
    %c0_157 = arith.constant 0 : index
    %c161 = arith.constant 161 : index
    %320 = vector.load %arg13[%c3_156, %c0_157, %c161] : memref<5x16x512xf32, #tpu.memory_space<vmem>>, vector<1x16x256xf32>
    %321 = vector.shape_cast %320 : vector<1x16x256xf32> to vector<16x256xf32>
    %322 = vector.extract_strided_slice %181 {offsets = [0, 23], sizes = [16, 1], strides = [1, 1]} : vector<16x25xf32> to vector<16x1xf32>
    %323 = vector.broadcast %322 : vector<16x1xf32> to vector<16x256xf32>
    %324 = arith.mulf %321, %323 : vector<16x256xf32>
    %325 = arith.addf %319, %324 : vector<16x256xf32>
    %c4_158 = arith.constant 4 : index
    %c0_159 = arith.constant 0 : index
    %c162 = arith.constant 162 : index
    %326 = vector.load %arg13[%c4_158, %c0_159, %c162] : memref<5x16x512xf32, #tpu.memory_space<vmem>>, vector<1x16x256xf32>
    %327 = vector.shape_cast %326 : vector<1x16x256xf32> to vector<16x256xf32>
    %328 = vector.extract_strided_slice %181 {offsets = [0, 24], sizes = [16, 1], strides = [1, 1]} : vector<16x25xf32> to vector<16x1xf32>
    %329 = vector.broadcast %328 : vector<16x1xf32> to vector<16x256xf32>
    %330 = arith.mulf %327, %329 : vector<16x256xf32>
    %331 = arith.addf %325, %330 : vector<16x256xf32>
    %332 = arith.addf %302, %331 : vector<16x256xf32>
    %333 = vector.broadcast %183 : vector<16x1xf32> to vector<16x256xf32>
    %334 = arith.addf %332, %333 : vector<16x256xf32>
    %cst_160 = arith.constant 0.000000e+00 : f32
    %335 = vector.broadcast %cst_160 : f32 to vector<16x256xf32>
    %336 = arith.maximumf %334, %335 : vector<16x256xf32>
    %cst_161 = arith.constant 6.000000e+00 : f32
    %337 = vector.broadcast %cst_161 : f32 to vector<16x256xf32>
    %338 = arith.minimumf %336, %337 : vector<16x256xf32>
    %c0_162 = arith.constant 0 : index
    %c32 = arith.constant 32 : index
    %339 = vector.load %arg9[%c0_162, %c32] : memref<16x48xf32, #tpu.memory_space<vmem>>, vector<16x16xf32>
    %cst_163 = arith.constant dense<0.000000e+00> : vector<16x256xf32>
    %340 = tpu.matmul %339, %338, %cst_163 {dimension_numbers = #tpu.dot_dimension_numbers<[1], [0], [0], [1], [0, 0, 1, 1], [], []>} : vector<16x16xf32>, vector<16x256xf32>, vector<16x256xf32> -> vector<16x256xf32>
    %341 = arith.addf %180, %340 : vector<16x256xf32>
    %c0_164 = arith.constant 0 : index
    %c0_165 = arith.constant 0 : index
    %342 = vector.load %arg10[%c0_164, %c0_165] : memref<16x1xf32, #tpu.memory_space<vmem>>, vector<16x1xf32>
    %343 = vector.broadcast %342 : vector<16x1xf32> to vector<16x256xf32>
    %344 = arith.mulf %341, %343 : vector<16x256xf32>
    %c0_166 = arith.constant 0 : index
    %c0_167 = arith.constant 0 : index
    %345 = vector.load %arg11[%c0_166, %c0_167] : memref<16x1xf32, #tpu.memory_space<vmem>>, vector<16x1xf32>
    %346 = vector.broadcast %345 : vector<16x1xf32> to vector<16x256xf32>
    %347 = arith.addf %344, %346 : vector<16x256xf32>
    %348 = arith.addf %347, %14 : vector<16x256xf32>
    %c0_168 = arith.constant 0 : index
    %c0_169 = arith.constant 0 : index
    %349 = vector.load %arg12[%c0_168, %c0_169] : memref<16x256xf32, #tpu.memory_space<vmem>>, vector<16x256xf32>
    tpu.vector_store %arg12[%c0_168, %c0_169], %348 {strides = array<i32>} : memref<16x256xf32, #tpu.memory_space<vmem>>, vector<16x256xf32>,
    return
  }
  func.func @transform_0(%arg0: i32) -> (i32, i32) {
    %c0_i32 = arith.constant 0 : i32
    %c0_i32_0 = arith.constant 0 : i32
    return %c0_i32, %arg0 : i32, i32
  }
  func.func @transform_1(%arg0: i32) -> (i32, i32) {
    %c0_i32 = arith.constant 0 : i32
    %c0_i32_0 = arith.constant 0 : i32
    %c0_i32_1 = arith.constant 0 : i32
    return %c0_i32, %c0_i32_0 : i32, i32
  }
  func.func @transform_2(%arg0: i32) -> (i32, i32) {
    %c0_i32 = arith.constant 0 : i32
    %c0_i32_0 = arith.constant 0 : i32
    %c0_i32_1 = arith.constant 0 : i32
    return %c0_i32, %c0_i32_0 : i32, i32
  }
  func.func @transform_3(%arg0: i32) -> (i32, i32) {
    %c0_i32 = arith.constant 0 : i32
    %c0_i32_0 = arith.constant 0 : i32
    %c0_i32_1 = arith.constant 0 : i32
    return %c0_i32, %c0_i32_0 : i32, i32
  }
  func.func @transform_4(%arg0: i32) -> (i32, i32) {
    %c0_i32 = arith.constant 0 : i32
    %c0_i32_0 = arith.constant 0 : i32
    %c0_i32_1 = arith.constant 0 : i32
    return %c0_i32, %c0_i32_0 : i32, i32
  }
  func.func @transform_5(%arg0: i32) -> (i32, i32) {
    %c0_i32 = arith.constant 0 : i32
    %c0_i32_0 = arith.constant 0 : i32
    %c0_i32_1 = arith.constant 0 : i32
    return %c0_i32, %c0_i32_0 : i32, i32
  }
  func.func @transform_6(%arg0: i32) -> (i32, i32) {
    %c0_i32 = arith.constant 0 : i32
    %c0_i32_0 = arith.constant 0 : i32
    %c0_i32_1 = arith.constant 0 : i32
    return %c0_i32, %c0_i32_0 : i32, i32
  }
  func.func @transform_7(%arg0: i32) -> (i32, i32, i32) {
    %c0_i32 = arith.constant 0 : i32
    %c0_i32_0 = arith.constant 0 : i32
    %c0_i32_1 = arith.constant 0 : i32
    %c0_i32_2 = arith.constant 0 : i32
    return %c0_i32, %c0_i32_0, %c0_i32_1 : i32, i32, i32
  }
  func.func @transform_8(%arg0: i32) -> (i32, i32) {
    %c0_i32 = arith.constant 0 : i32
    %c0_i32_0 = arith.constant 0 : i32
    %c0_i32_1 = arith.constant 0 : i32
    return %c0_i32, %c0_i32_0 : i32, i32
  }
  func.func @transform_9(%arg0: i32) -> (i32, i32) {
    %c0_i32 = arith.constant 0 : i32
    %c0_i32_0 = arith.constant 0 : i32
    %c0_i32_1 = arith.constant 0 : i32
    return %c0_i32, %c0_i32_0 : i32, i32
  }
  func.func @transform_10(%arg0: i32) -> (i32, i32) {
    %c0_i32 = arith.constant 0 : i32
    %c0_i32_0 = arith.constant 0 : i32
    %c0_i32_1 = arith.constant 0 : i32
    return %c0_i32, %c0_i32_0 : i32, i32
  }
  func.func @transform_11(%arg0: i32) -> (i32, i32) {
    %c0_i32 = arith.constant 0 : i32
    %c0_i32_0 = arith.constant 0 : i32
    return %c0_i32, %arg0 : i32, i32
  }
}

</mosaic_0001>

<llo_original>
// kernel: tpu_custom_call.1
$region0: #{tpu_custom_call.1}
  #allocation0 [shape = 'u32[]', space=smem, size = 0x4, offset = 0x4, fixed_abs, tag = 'smem constant byte address 0x4 - core index']
  #allocation1 [shape = 'u32[144,128]{1,0:T(1,128)}', space=vmem, size = 0x12000, scoped, tag = 'internal scratch']
  #allocation2 [shape = 'f32[5,16,512]{2,1,0:T(8,128)}', space=vmem, size = 0x28000, scoped, tag = 'scratch operand']
  %s0 = inlined_call_operand.vmem [shape: f32[8,512], index: 0, kind: input, shape index: {}]
  %s1 = inlined_call_operand.vmem [shape: f32[32,8], index: 1, kind: input, shape index: {}]
  %s2 = inlined_call_operand.vmem [shape: f32[16,1], index: 2, kind: input, shape index: {}]
  %s3 = inlined_call_operand.vmem [shape: f32[16,1], index: 3, kind: input, shape index: {}]
  %s4 = inlined_call_operand.vmem [shape: f32[16,1], index: 4, kind: input, shape index: {}]
  %s5 = inlined_call_operand.vmem [shape: f32[16,9], index: 5, kind: input, shape index: {}]
  %s6 = inlined_call_operand.vmem [shape: f32[16,25], index: 6, kind: input, shape index: {}]
  %s7 = inlined_call_operand.vmem [shape: f32[3,16,1], index: 7, kind: input, shape index: {}]
  %s8 = inlined_call_operand.vmem [shape: f32[16,48], index: 8, kind: input, shape index: {}]
  %s9 = inlined_call_operand.vmem [shape: f32[16,1], index: 9, kind: input, shape index: {}]
  %s10 = inlined_call_operand.vmem [shape: f32[16,1], index: 10, kind: input, shape index: {}]
  %s11 = inlined_call_operand.hbm [shape: f32[16,512], index: 11, kind: output, shape index: {}]
  %s12 = sld [smem:[#allocation0]]
  $region77: #{tpu_custom_call.1} parent=0
    _
  %s14 = ssub.s32 1, %s12
  %s15 = scalar_select 0, %s14, %s12
  $region1: #{tpu_custom_call.1} parent=0
    #allocation3 [shape = 'u8[32768]{0}', space=vmem, size = 0x8000, scoped, tag = 'output window, operand 0']
    #allocation4 [shape = 's32[2]{0}', space=sflag, size = 0x8, scoped, tag = 'scoped memory for tpu_custom_call.1']
    %16 = vsyncpa [#allocation4], 0
    %s17 = scalar_lea.sflag [#allocation4], 1
    %18 = vsyncpa %s17, 0
    loop: start=0, step=1, limit=4
    $region2: #{tpu_custom_call.1} parent=1 // loop_pre_header
      _
    $region3: #{tpu_custom_call.1} parent=1 // loop_header
      %s20 = sphi 0, %s24
      %p21 = scmp.ge.s32.totalorder %s20, 4
      %s30 = sphi 0, %s32
      %s33 = sphi 0, %s30
      %s34 = sphi 0, %s33
      %s50 = sphi 0, %s34
      %s54 = sphi 0, %s54
      %s56 = sphi 0, %s54
      %s57 = sphi 0, %s56
      %s71 = sphi 0, %s57
      %s75 = sphi 0, %s75
      %s77 = sphi 0, %s75
      %s78 = sphi 0, %s77
      %s92 = sphi 0, %s78
      %s96 = sphi 0, %s96
      %s98 = sphi 0, %s96
      %s99 = sphi 0, %s98
      %s113 = sphi 0, %s99
      %s117 = sphi 0, %s117
      %s119 = sphi 0, %s117
      %s120 = sphi 0, %s119
      %s134 = sphi 0, %s120
      %s138 = sphi 0, %s138
      %s140 = sphi 0, %s138
      %s141 = sphi 0, %s140
      %s155 = sphi 0, %s141
      %s159 = sphi 0, %s159
      %s161 = sphi 0, %s159
      %s162 = sphi 0, %s161
      %s176 = sphi 0, %s162
      %s180 = sphi 0, %s180
      %s182 = sphi 0, %s180
      %s183 = sphi 0, %s182
      %s197 = sphi 0, %s183
      %s201 = sphi 0, %s201
      %s203 = sphi 0, %s201
      %s204 = sphi 0, %s203
      %s218 = sphi 0, %s204
      %s222 = sphi 0, %s222
      %s224 = sphi 0, %s222
      %s225 = sphi 0, %s224
      %s239 = sphi 0, %s225
      %s243 = sphi 0, %s243
      %s245 = sphi 0, %s243
      %s246 = sphi 0, %s245
      %s260 = sphi 0, %s246
      %s266 = sphi 0, %s268
      %s269 = sphi 0, %s266
      %s270 = sphi 0, %s269
      %s286 = sphi 0, %s270
    $region4: #{tpu_custom_call.1} parent=1 // loop_header_branch
      %23 = sbr.rel (%p21) target = $region8
    $region5: #{tpu_custom_call.1} parent=1 // loop_body
      %s25 = ssub.s32 %s20, 1
      %s26 = ssub.s32 %s20, 2
      %s27 = sadd.s32 %s20, 1
      %s28 = ssub.s32 %s20, %s27
      %p29 = scmp.eq.s32.totalorder %s28, 0
      %s31 = sadd.s32 %s30, 1
      %s32 = scalar_select %p29, %s30, %s31
      %p35 = pneg %p29
      %p36 = scmp.eq.s32.totalorder %s20, 1
      %p37 = por %p35, %p36
      %p38 = scmp.ne.s32.totalorder %s30, %s33
      %p39 = scmp.eq.s32.totalorder %s20, 0
      %p40 = por %p38, %p39
      %p41 = scmp.ne.s32.totalorder %s30, %s33
      %p42 = scmp.eq.s32.totalorder %s25, 1
      %p43 = por %p41, %p42
      %p44 = scmp.ne.s32.totalorder %s33, %s34
      %p45 = scmp.eq.s32.totalorder %s25, 0
      %p46 = por %p44, %p45
      %p47 = scmp.ne.s32.totalorder %s33, %s34
      %p48 = scmp.eq.s32.totalorder %s26, 1
      %p49 = por %p47, %p48
      %p51 = scmp.ne.s32.totalorder %s34, %s50
      %p52 = scmp.eq.s32.totalorder %s26, 0
      %p53 = por %p51, %p52
      %s55 = sadd.s32 %s54, 1
      %p58 = scmp.eq.s32.totalorder %s20, 1
      %p59 = scmp.ne.s32.totalorder %s54, %s56
      %p60 = scmp.eq.s32.totalorder %s20, 0
      %p61 = por %p59, %p60
      %p62 = scmp.ne.s32.totalorder %s54, %s56
      %p63 = scmp.eq.s32.totalorder %s25, 1
      %p64 = por %p62, %p63
      %p65 = scmp.ne.s32.totalorder %s56, %s57
      %p66 = scmp.eq.s32.totalorder %s25, 0
      %p67 = por %p65, %p66
      %p68 = scmp.ne.s32.totalorder %s56, %s57
      %p69 = scmp.eq.s32.totalorder %s26, 1
      %p70 = por %p68, %p69
      %p72 = scmp.ne.s32.totalorder %s57, %s71
      %p73 = scmp.eq.s32.totalorder %s26, 0
      %p74 = por %p72, %p73
      %s76 = sadd.s32 %s75, 1
      %p79 = scmp.eq.s32.totalorder %s20, 1
      %p80 = scmp.ne.s32.totalorder %s75, %s77
      %p81 = scmp.eq.s32.totalorder %s20, 0
      %p82 = por %p80, %p81
      %p83 = scmp.ne.s32.totalorder %s75, %s77
      %p84 = scmp.eq.s32.totalorder %s25, 1
      %p85 = por %p83, %p84
      %p86 = scmp.ne.s32.totalorder %s77, %s78
      %p87 = scmp.eq.s32.totalorder %s25, 0
      %p88 = por %p86, %p87
      %p89 = scmp.ne.s32.totalorder %s77, %s78
      %p90 = scmp.eq.s32.totalorder %s26, 1
      %p91 = por %p89, %p90
      %p93 = scmp.ne.s32.totalorder %s78, %s92
      %p94 = scmp.eq.s32.totalorder %s26, 0
      %p95 = por %p93, %p94
      %s97 = sadd.s32 %s96, 1
      %p100 = scmp.eq.s32.totalorder %s20, 1
      %p101 = scmp.ne.s32.totalorder %s96, %s98
      %p102 = scmp.eq.s32.totalorder %s20, 0
      %p103 = por %p101, %p102
      %p104 = scmp.ne.s32.totalorder %s96, %s98
      %p105 = scmp.eq.s32.totalorder %s25, 1
      %p106 = por %p104, %p105
      %p107 = scmp.ne.s32.totalorder %s98, %s99
      %p108 = scmp.eq.s32.totalorder %s25, 0
      %p109 = por %p107, %p108
      %p110 = scmp.ne.s32.totalorder %s98, %s99
      %p111 = scmp.eq.s32.totalorder %s26, 1
      %p112 = por %p110, %p111
      %p114 = scmp.ne.s32.totalorder %s99, %s113
      %p115 = scmp.eq.s32.totalorder %s26, 0
      %p116 = por %p114, %p115
      %s118 = sadd.s32 %s117, 1
      %p121 = scmp.eq.s32.totalorder %s20, 1
      %p122 = scmp.ne.s32.totalorder %s117, %s119
      %p123 = scmp.eq.s32.totalorder %s20, 0
      %p124 = por %p122, %p123
      %p125 = scmp.ne.s32.totalorder %s117, %s119
      %p126 = scmp.eq.s32.totalorder %s25, 1
      %p127 = por %p125, %p126
      %p128 = scmp.ne.s32.totalorder %s119, %s120
      %p129 = scmp.eq.s32.totalorder %s25, 0
      %p130 = por %p128, %p129
      %p131 = scmp.ne.s32.totalorder %s119, %s120
      %p132 = scmp.eq.s32.totalorder %s26, 1
      %p133 = por %p131, %p132
      %p135 = scmp.ne.s32.totalorder %s120, %s134
      %p136 = scmp.eq.s32.totalorder %s26, 0
      %p137 = por %p135, %p136
      %s139 = sadd.s32 %s138, 1
      %p142 = scmp.eq.s32.totalorder %s20, 1
      %p143 = scmp.ne.s32.totalorder %s138, %s140
      %p144 = scmp.eq.s32.totalorder %s20, 0
      %p145 = por %p143, %p144
      %p146 = scmp.ne.s32.totalorder %s138, %s140
      %p147 = scmp.eq.s32.totalorder %s25, 1
      %p148 = por %p146, %p147
      %p149 = scmp.ne.s32.totalorder %s140, %s141
      %p150 = scmp.eq.s32.totalorder %s25, 0
      %p151 = por %p149, %p150
      %p152 = scmp.ne.s32.totalorder %s140, %s141
      %p153 = scmp.eq.s32.totalorder %s26, 1
      %p154 = por %p152, %p153
      %p156 = scmp.ne.s32.totalorder %s141, %s155
      %p157 = scmp.eq.s32.totalorder %s26, 0
      %p158 = por %p156, %p157
      %s160 = sadd.s32 %s159, 1
      %p163 = scmp.eq.s32.totalorder %s20, 1
      %p164 = scmp.ne.s32.totalorder %s159, %s161
      %p165 = scmp.eq.s32.totalorder %s20, 0
      %p166 = por %p164, %p165
      %p167 = scmp.ne.s32.totalorder %s159, %s161
      %p168 = scmp.eq.s32.totalorder %s25, 1
      %p169 = por %p167, %p168
      %p170 = scmp.ne.s32.totalorder %s161, %s162
      %p171 = scmp.eq.s32.totalorder %s25, 0
      %p172 = por %p170, %p171
      %p173 = scmp.ne.s32.totalorder %s161, %s162
      %p174 = scmp.eq.s32.totalorder %s26, 1
      %p175 = por %p173, %p174
      %p177 = scmp.ne.s32.totalorder %s162, %s176
      %p178 = scmp.eq.s32.totalorder %s26, 0
      %p179 = por %p177, %p178
      %s181 = sadd.s32 %s180, 1
      %p184 = scmp.eq.s32.totalorder %s20, 1
      %p185 = scmp.ne.s32.totalorder %s180, %s182
      %p186 = scmp.eq.s32.totalorder %s20, 0
      %p187 = por %p185, %p186
      %p188 = scmp.ne.s32.totalorder %s180, %s182
      %p189 = scmp.eq.s32.totalorder %s25, 1
      %p190 = por %p188, %p189
      %p191 = scmp.ne.s32.totalorder %s182, %s183
      %p192 = scmp.eq.s32.totalorder %s25, 0
      %p193 = por %p191, %p192
      %p194 = scmp.ne.s32.totalorder %s182, %s183
      %p195 = scmp.eq.s32.totalorder %s26, 1
      %p196 = por %p194, %p195
      %p198 = scmp.ne.s32.totalorder %s183, %s197
      %p199 = scmp.eq.s32.totalorder %s26, 0
      %p200 = por %p198, %p199
      %s202 = sadd.s32 %s201, 1
      %p205 = scmp.eq.s32.totalorder %s20, 1
      %p206 = scmp.ne.s32.totalorder %s201, %s203
      %p207 = scmp.eq.s32.totalorder %s20, 0
      %p208 = por %p206, %p207
      %p209 = scmp.ne.s32.totalorder %s201, %s203
      %p210 = scmp.eq.s32.totalorder %s25, 1
      %p211 = por %p209, %p210
      %p212 = scmp.ne.s32.totalorder %s203, %s204
      %p213 = scmp.eq.s32.totalorder %s25, 0
      %p214 = por %p212, %p213
      %p215 = scmp.ne.s32.totalorder %s203, %s204
      %p216 = scmp.eq.s32.totalorder %s26, 1
      %p217 = por %p215, %p216
      %p219 = scmp.ne.s32.totalorder %s204, %s218
      %p220 = scmp.eq.s32.totalorder %s26, 0
      %p221 = por %p219, %p220
      %s223 = sadd.s32 %s222, 1
      %p226 = scmp.eq.s32.totalorder %s20, 1
      %p227 = scmp.ne.s32.totalorder %s222, %s224
      %p228 = scmp.eq.s32.totalorder %s20, 0
      %p229 = por %p227, %p228
      %p230 = scmp.ne.s32.totalorder %s222, %s224
      %p231 = scmp.eq.s32.totalorder %s25, 1
      %p232 = por %p230, %p231
      %p233 = scmp.ne.s32.totalorder %s224, %s225
      %p234 = scmp.eq.s32.totalorder %s25, 0
      %p235 = por %p233, %p234
      %p236 = scmp.ne.s32.totalorder %s224, %s225
      %p237 = scmp.eq.s32.totalorder %s26, 1
      %p238 = por %p236, %p237
      %p240 = scmp.ne.s32.totalorder %s225, %s239
      %p241 = scmp.eq.s32.totalorder %s26, 0
      %p242 = por %p240, %p241
      %s244 = sadd.s32 %s243, 1
      %p247 = scmp.eq.s32.totalorder %s20, 1
      %p248 = scmp.ne.s32.totalorder %s243, %s245
      %p249 = scmp.eq.s32.totalorder %s20, 0
      %p250 = por %p248, %p249
      %p251 = scmp.ne.s32.totalorder %s243, %s245
      %p252 = scmp.eq.s32.totalorder %s25, 1
      %p253 = por %p251, %p252
      %p254 = scmp.ne.s32.totalorder %s245, %s246
      %p255 = scmp.eq.s32.totalorder %s25, 0
      %p256 = por %p254, %p255
      %p257 = scmp.ne.s32.totalorder %s245, %s246
      %p258 = scmp.eq.s32.totalorder %s26, 1
      %p259 = por %p257, %p258
      %p261 = scmp.ne.s32.totalorder %s246, %s260
      %p262 = scmp.eq.s32.totalorder %s26, 0
      %p263 = por %p261, %p262
      %s264 = ssub.s32 %s20, %s27
      %p265 = scmp.eq.s32.totalorder %s264, 0
      %s267 = sadd.s32 %s266, 1
      %s268 = scalar_select %p265, %s266, %s267
      %p271 = pneg %p265
      %p272 = scmp.eq.s32.totalorder %s20, 1
      %p273 = por %p271, %p272
      %p274 = scmp.ne.s32.totalorder %s266, %s269
      %p275 = scmp.eq.s32.totalorder %s20, 0
      %p276 = por %p274, %p275
      %p277 = scmp.ne.s32.totalorder %s266, %s269
      %p278 = scmp.eq.s32.totalorder %s25, 1
      %p279 = por %p277, %p278
      %p280 = scmp.ne.s32.totalorder %s269, %s270
      %p281 = scmp.eq.s32.totalorder %s25, 0
      %p282 = por %p280, %p281
      %p283 = scmp.ne.s32.totalorder %s269, %s270
      %p284 = scmp.eq.s32.totalorder %s26, 1
      %p285 = por %p283, %p284
      %p287 = scmp.ne.s32.totalorder %s270, %s286
      %p288 = scmp.eq.s32.totalorder %s26, 0
      %p289 = por %p287, %p288
      %p290 = scmp.le.s32.totalorder 1, %s20
      %p291 = scmp.lt.s32.totalorder %s20, 3
      %p292 = pnand %p290, %p291
      %p293 = pneg %p292
      // Predicated region
      $region9: #{tpu_custom_call.1} parent=5 // pred_check
        _
      $region10: #{tpu_custom_call.1} parent=5 // pred_check_branch
        %295 = sbr.rel (%p292) target = $region12
      $region11: #{tpu_custom_call.1} parent=5 // pred_region
        %s296 = ssub.s32 %s20, 1
        // Predicated region
        $region13: #{tpu_custom_call.1} parent=11 // pred_check
          %p297 = pneg %p67
        $region14: #{tpu_custom_call.1} parent=11 // pred_check_branch
          %299 = sbr.rel (%p297) target = $region16
        $region15: #{tpu_custom_call.1} parent=11 // pred_region
          _
        $region16: #{tpu_custom_call.1} parent=11 // pred_fallthru
          _
        // Predicated region
        $region17: #{tpu_custom_call.1} parent=11 // pred_check
          %p300 = pneg %p88
        $region18: #{tpu_custom_call.1} parent=11 // pred_check_branch
          %302 = sbr.rel (%p300) target = $region20
        $region19: #{tpu_custom_call.1} parent=11 // pred_region
          _
        $region20: #{tpu_custom_call.1} parent=11 // pred_fallthru
          _
        // Predicated region
        $region21: #{tpu_custom_call.1} parent=11 // pred_check
          %p303 = pneg %p109
        $region22: #{tpu_custom_call.1} parent=11 // pred_check_branch
          %305 = sbr.rel (%p303) target = $region24
        $region23: #{tpu_custom_call.1} parent=11 // pred_region
          _
        $region24: #{tpu_custom_call.1} parent=11 // pred_fallthru
          _
        // Predicated region
        $region25: #{tpu_custom_call.1} parent=11 // pred_check
          %p306 = pneg %p130
        $region26: #{tpu_custom_call.1} parent=11 // pred_check_branch
          %308 = sbr.rel (%p306) target = $region28
        $region27: #{tpu_custom_call.1} parent=11 // pred_region
          _
        $region28: #{tpu_custom_call.1} parent=11 // pred_fallthru
          _
        // Predicated region
        $region29: #{tpu_custom_call.1} parent=11 // pred_check
          %p309 = pneg %p151
        $region30: #{tpu_custom_call.1} parent=11 // pred_check_branch
          %311 = sbr.rel (%p309) target = $region32
        $region31: #{tpu_custom_call.1} parent=11 // pred_region
          _
        $region32: #{tpu_custom_call.1} parent=11 // pred_fallthru
          _
        // Predicated region
        $region33: #{tpu_custom_call.1} parent=11 // pred_check
          %p312 = pneg %p172
        $region34: #{tpu_custom_call.1} parent=11 // pred_check_branch
          %314 = sbr.rel (%p312) target = $region36
        $region35: #{tpu_custom_call.1} parent=11 // pred_region
          _
        $region36: #{tpu_custom_call.1} parent=11 // pred_fallthru
          _
        // Predicated region
        $region37: #{tpu_custom_call.1} parent=11 // pred_check
          %p315 = pneg %p193
        $region38: #{tpu_custom_call.1} parent=11 // pred_check_branch
          %317 = sbr.rel (%p315) target = $region40
        $region39: #{tpu_custom_call.1} parent=11 // pred_region
          _
        $region40: #{tpu_custom_call.1} parent=11 // pred_fallthru
          _
        // Predicated region
        $region41: #{tpu_custom_call.1} parent=11 // pred_check
          %p318 = pneg %p214
        $region42: #{tpu_custom_call.1} parent=11 // pred_check_branch
          %320 = sbr.rel (%p318) target = $region44
        $region43: #{tpu_custom_call.1} parent=11 // pred_region
          _
        $region44: #{tpu_custom_call.1} parent=11 // pred_fallthru
          _
        // Predicated region
        $region45: #{tpu_custom_call.1} parent=11 // pred_check
          %p321 = pneg %p235
        $region46: #{tpu_custom_call.1} parent=11 // pred_check_branch
          %323 = sbr.rel (%p321) target = $region48
        $region47: #{tpu_custom_call.1} parent=11 // pred_region
          _
        $region48: #{tpu_custom_call.1} parent=11 // pred_fallthru
          _
        // Predicated region
        $region49: #{tpu_custom_call.1} parent=11 // pred_check
          %p324 = pneg %p256
        $region50: #{tpu_custom_call.1} parent=11 // pred_check_branch
          %326 = sbr.rel (%p324) target = $region52
        $region51: #{tpu_custom_call.1} parent=11 // pred_region
          _
        $region52: #{tpu_custom_call.1} parent=11 // pred_fallthru
          _
      $region12: #{tpu_custom_call.1} parent=5 // pred_fallthru
        _
      %p327 = scmp.lt.s32.totalorder %s20, 2
      // Predicated region
      $region53: #{tpu_custom_call.1} parent=5 // pred_check
        %p328 = pneg %p327
      $region54: #{tpu_custom_call.1} parent=5 // pred_check_branch
        %330 = sbr.rel (%p328) target = $region56
      $region55: #{tpu_custom_call.1} parent=5 // pred_region
        // Predicated region
        $region57: #{tpu_custom_call.1} parent=55 // pred_check
          %p331 = pneg %p40
        $region58: #{tpu_custom_call.1} parent=55 // pred_check_branch
          %333 = sbr.rel (%p331) target = $region60
        $region59: #{tpu_custom_call.1} parent=55 // pred_region
          %s334 = smul.u32 2, %s20
          %p335 = scmp.lt.s32.totalorder %s334, 3
          %s336 = scalar_select %p335, %s334, 3
          %s337 = smul.addr %s336, 8
          %s338 = scalar_lea.vmem %s0, %s337
          %s339 = smul.u32 2, %s20
        $region60: #{tpu_custom_call.1} parent=55 // pred_fallthru
          _
      $region56: #{tpu_custom_call.1} parent=5 // pred_fallthru
        _
      %p340 = scmp.le.s32.totalorder 1, %s20
      %p341 = scmp.lt.s32.totalorder %s20, 3
      %p342 = pnand %p340, %p341
      %p343 = pneg %p342
      // Predicated region
      $region61: #{tpu_custom_call.1} parent=5 // pred_check
        _
      $region62: #{tpu_custom_call.1} parent=5 // pred_check_branch
        %345 = sbr.rel (%p342) target = $region64
      $region63: #{tpu_custom_call.1} parent=5 // pred_region
        %s346 = ssub.s32 %s20, 1
        %s347 = smul.u32 2, %s25
        %p348 = scmp.lt.s32.totalorder %s347, 3
        %s349 = scalar_select %p348, %s347, 3
        %s350 = smul.addr %s349, 8
        %s351 = scalar_lea.vmem %s0, %s350
        %p352 = pneg %p46
        %p353 = pneg %p43
        %p354 = pneg %p67
        %p355 = pneg %p64
        %p356 = pneg %p88
        %p357 = pneg %p85
        %p358 = pneg %p109
        %p359 = pneg %p106
        %p360 = pneg %p130
        %p361 = pneg %p127
        %p362 = pneg %p151
        %p363 = pneg %p148
        %p364 = pneg %p172
        %p365 = pneg %p169
        %p366 = pneg %p193
        %p367 = pneg %p190
        %p368 = pneg %p214
        %p369 = pneg %p211
        %p370 = pneg %p235
        %p371 = pneg %p232
        %p372 = pneg %p256
        %p373 = pneg %p253
        %p374 = pneg %p282
        %p375 = pneg %p279
        %s376 = sand.u32 %s269, 1
        %s377 = scalar_lea.sflag [#allocation4], %s376
        %s378 = sand.u32 %s269, 1
        %s379 = smul.addr %s378, 32
        %s380 = scalar_lea.vmem [#allocation3], %s379
        %s381 = smul.u32 2, %s25
        %p382 = scmp.lt.s32.totalorder %s381, 3
        %s383 = scalar_select %p382, %s381, 3
        %s384 = smul.addr %s383, 8
        %s385 = scalar_lea.vmem %s0, %s384
        %s386 = smul.u32 2, %s25
        %s387 = smul.u32 2, %s25
        %v388 = vld [vmem:[%s385] sm:$0xff]
        %v389 = vld [vmem:[%s385 + $0x8] sm:$0xff]
        %v390 = vld [vmem:[%s1] sm:$0xff]
        %v391 = vld [vmem:[%s1 + $0x8] sm:$0xff]
        %v392 = vld [vmem:[%s1 + $0x10] sm:$0xff]
        %v393 = vld [vmem:[%s1 + $0x18] sm:$0xff]
        %vm394 = vcmask 64512
        %v396 = vsel %vm394, %v390, 0
        %v399 = vsel %vm394, %v391, 0
        %v402 = vsel %vm394, %v392, 0
        %v405 = vsel %vm394, %v393, 0
        %407 = vmatprep.subr.mxu0 %v389
        %408 = vmatpush1.msra.mxu0 %v388
        %409 = vmatprep.subr.mxu0 0.0
        %410 = vmatpush1.msra.mxu0 0.0
        %411 = vmatprep.subr.mxu0 0.0
        %412 = vmatpush1.msra.mxu0 0.0
        %413 = vmatprep.subr.mxu0 0.0
        %414 = vmatpush1.msra.mxu0 0.0
        %415 = vmatprep.subr.mxu0 0.0
        %416 = vmatpush1.msra.mxu0 0.0
        %417 = vmatprep.subr.mxu0 0.0
        %418 = vmatpush1.msra.mxu0 0.0
        %419 = vmatprep.subr.mxu0 0.0
        %420 = vmatpush1.msra.mxu0 0.0
        %421 = vmatprep.subr.mxu0 0.0
        %422 = vmatpush1.msra.mxu0 0.0
        %423 = vmatprep.subr.mxu0 0.0
        %424 = vmatpush1.msra.mxu0 0.0
        %425 = vmatprep.subr.mxu0 0.0
        %426 = vmatpush1.msra.mxu0 0.0
        %427 = vmatprep.subr.mxu0 0.0
        %428 = vmatpush1.msra.mxu0 0.0
        %429 = vmatprep.subr.mxu0 0.0
        %430 = vmatpush1.msra.mxu0 0.0
        %431 = vmatprep.subr.mxu0 0.0
        %432 = vmatpush1.msra.mxu0 0.0
        %433 = vmatprep.subr.mxu0 0.0
        %434 = vmatpush1.msra.mxu0 0.0
        %435 = vmatprep.subr.mxu0 0.0
        %436 = vmatpush1.msra.mxu0 0.0
        %437 = vmatprep.subr.mxu0 0.0
        %438 = vmatpush1.msra.mxu0 0.0
        %439 = vmatprep.subr.mxu0 0.0
        %440 = vmatpush1.msra.mxu0 0.0
        %441 = vmatprep.subr.mxu0 0.0
        %442 = vmatpush1.msra.mxu0 0.0
        %443 = vmatprep.subr.mxu0 0.0
        %444 = vmatpush1.msra.mxu0 0.0
        %445 = vmatprep.subr.mxu0 0.0
        %446 = vmatpush1.msra.mxu0 0.0
        %447 = vmatprep.subr.mxu0 0.0
        %448 = vmatpush1.msra.mxu0 0.0
        %449 = vmatprep.subr.mxu0 0.0
        %450 = vmatpush1.msra.mxu0 0.0
        %451 = vmatprep.subr.mxu0 0.0
        %452 = vmatpush1.msra.mxu0 0.0
        %453 = vmatprep.subr.mxu0 0.0
        %454 = vmatpush1.msra.mxu0 0.0
        %455 = vmatprep.subr.mxu0 0.0
        %456 = vmatpush1.msra.mxu0 0.0
        %457 = vmatprep.subr.mxu0 0.0
        %458 = vmatpush1.msra.mxu0 0.0
        %459 = vmatprep.subr.mxu0 0.0
        %460 = vmatpush1.msra.mxu0 0.0
        %461 = vmatprep.subr.mxu0 0.0
        %462 = vmatpush1.msra.mxu0 0.0
        %463 = vmatprep.subr.mxu0 0.0
        %464 = vmatpush1.msra.mxu0 0.0
        %465 = vmatprep.subr.mxu0 0.0
        %466 = vmatpush1.msra.mxu0 0.0
        %467 = vmatprep.subr.mxu0 0.0
        %468 = vmatpush1.msra.mxu0 0.0
        %469 = vmatprep.subr.mxu0 0.0
        %470 = vmatpush1.msra.mxu0 0.0
        %471 = vmatprep.mubr.f32.mxu0 0.0
        %472 = vmatmul.mubr.f32.gmra.mrb[0].mxu0 %v396
        %v473 = vpop.f32.mrb[0].mxu0
        %v474 = vadd.f32 0.0, %v473
        %v475 = vpop.f32.mrb[0].mxu0
        %v476 = vadd.f32 0.0, %v475
        %477 = vmatprep.mubr.f32.mxu0 0.0
        %478 = vmatmul.mubr.f32.gmra.mrb[0].mxu0 %v399
        %v479 = vpop.f32.mrb[0].mxu0
        %v480 = vadd.f32 0.0, %v479
        %v481 = vpop.f32.mrb[0].mxu0
        %v482 = vadd.f32 0.0, %v481
        %483 = vmatprep.mubr.f32.mxu0 0.0
        %484 = vmatmul.mubr.f32.gmra.mrb[0].mxu0 %v402
        %v485 = vpop.f32.mrb[0].mxu0
        %v486 = vadd.f32 0.0, %v485
        %v487 = vpop.f32.mrb[0].mxu0
        %v488 = vadd.f32 0.0, %v487
        %489 = vmatprep.mubr.f32.mxu0 0.0
        %490 = vmatmul.mubr.f32.gmra.mrb[0].mxu0 %v405
        %v491 = vpop.f32.mrb[0].mxu0
        %v492 = vadd.f32 0.0, %v491
        %v493 = vpop.f32.mrb[0].mxu0
        %v494 = vadd.f32 0.0, %v493
        %495 = vdwg.mxu0
        %v496 = vld [vmem:[%s2] sm:$0xff]
        %v497 = vld [vmem:[%s2 + $0x8] sm:$0xff]
        %499 = vset.pattern.permute.xlu0 0
        %500 = vperm.xlu0 %499, %v496
        %v501 = vpop.permute.xlu0 %500
        %504 = vset.pattern.permute.xlu0 0
        %505 = vperm.xlu0 %504, %v497
        %v506 = vpop.permute.xlu0 %505
        %v508 = vmul.f32 %v474, %v501
        %v509 = vmul.f32 %v476, %v501
        %v510 = vmul.f32 %v480, %v506
        %v511 = vmul.f32 %v482, %v506
        %v512 = vld [vmem:[%s3] sm:$0xff]
        %v513 = vld [vmem:[%s3 + $0x8] sm:$0xff]
        %515 = vset.pattern.permute.xlu0 0
        %516 = vperm.xlu0 %515, %v512
        %v517 = vpop.permute.xlu0 %516
        %520 = vset.pattern.permute.xlu0 0
        %521 = vperm.xlu0 %520, %v513
        %v522 = vpop.permute.xlu0 %521
        %v524 = vadd.f32 %v508, %v517
        %v525 = vadd.f32 %v509, %v517
        %v526 = vadd.f32 %v510, %v522
        %v527 = vadd.f32 %v511, %v522
        %v528 = vmax.f32 %v524, 0.0
        %v529 = vmax.f32 %v525, 0.0
        %v530 = vmax.f32 %v526, 0.0
        %v531 = vmax.f32 %v527, 0.0
        %v532 = vmin.f32 %v528, 6.0
        %v533 = vmin.f32 %v529, 6.0
        %v534 = vmin.f32 %v530, 6.0
        %v535 = vmin.f32 %v531, 6.0
        %v536 = vlaneseq
        %v537 = vand.u32 %v536, 127
        %v538 = vadd.s32 %v537, 128
        %vm539 = vcmp.lt.s32.totalorder %v537, 0
        %v540 = vsub.s32 0, %v537
        %v541 = vsel %vm539, %v540, %v537
        %v542 = vshrl.u32 %v541, 4
        %v543 = vand.u32 %v541, 15
        %v544 = vsub.s32 0, %v543
        %v545 = vsel %vm539, %v544, %v543
        %vm546 = vcmp.lt.s32.totalorder %v538, 0
        %v547 = vsub.s32 0, %v538
        %v548 = vsel %vm546, %v547, %v538
        %v549 = vshrl.u32 %v548, 4
        %v550 = vand.u32 %v548, 15
        %v551 = vsub.s32 0, %v550
        %v552 = vsel %vm546, %v551, %v550
        %vm553 = vcmp.ne.s32.totalorder %v545, 0
        %vm554 = vcmp.ne.s32.totalorder %v552, 0
        %vm555 = vcmp.lt.s32.totalorder %v545, 0
        %vm556 = vcmp.lt.s32.totalorder %v552, 0
        %vm557 = vmand %vm555, %vm553
        %vm558 = vmand %vm556, %vm554
        %v559 = vadd.s32 %v545, 16
        %v560 = vadd.s32 %v552, 16
        %v561 = vsel %vm557, %v559, %v545
        %v562 = vsel %vm558, %v560, %v552
        %563 = vst [vmem:[#allocation2] sm:$0xff] 0.0
        %564 = vst [vmem:[#allocation2 + $0x20] sm:$0xff] 0.0
        %565 = vst [vmem:[#allocation2 + $0x18] sm:$0xff] 0.0
        %566 = vst [vmem:[#allocation2 + $0x38] sm:$0xff] 0.0
        %s567 = scalar_lea.vmem [#allocation2], 64
        %568 = vst [vmem:[%s567] sm:$0xff] 0.0
        %569 = vst [vmem:[%s567 + $0x20] sm:$0xff] 0.0
        %570 = vst [vmem:[%s567 + $0x18] sm:$0xff] 0.0
        %571 = vst [vmem:[%s567 + $0x38] sm:$0xff] 0.0
        %s572 = scalar_lea.vmem [#allocation2], 128
        %573 = vst [vmem:[%s572] sm:$0xff] 0.0
        %574 = vst [vmem:[%s572 + $0x20] sm:$0xff] 0.0
        %575 = vst [vmem:[%s572 + $0x18] sm:$0xff] 0.0
        %576 = vst [vmem:[%s572 + $0x38] sm:$0xff] 0.0
        %s577 = scalar_lea.vmem [#allocation2], 192
        %578 = vst [vmem:[%s577] sm:$0xff] 0.0
        %579 = vst [vmem:[%s577 + $0x20] sm:$0xff] 0.0
        %580 = vst [vmem:[%s577 + $0x18] sm:$0xff] 0.0
        %581 = vst [vmem:[%s577 + $0x38] sm:$0xff] 0.0
        %s582 = scalar_lea.vmem [#allocation2], 256
        %583 = vst [vmem:[%s582] sm:$0xff] 0.0
        %584 = vst [vmem:[%s582 + $0x20] sm:$0xff] 0.0
        %585 = vst [vmem:[%s582 + $0x18] sm:$0xff] 0.0
        %586 = vst [vmem:[%s582 + $0x38] sm:$0xff] 0.0
        %vm587 = vcmp.lt.s32.totalorder %v561, 14
        %vm588 = vcmp.lt.s32.totalorder %v562, 14
        %v589 = vsel %vm587, 1, 0
        %v590 = vsel %vm588, 1, 0
        %vm591 = vcmp.eq.s32.totalorder %v589, 1
        %vm592 = vcmp.eq.s32.totalorder %v590, 1
        %v593 = vsel %vm591, %v532, 0.0
        %v594 = vsel %vm592, %v533, 0.0
        %v595 = vsel %vm591, %v534, 0.0
        %v596 = vsel %vm592, %v535, 0.0
        %597 = vst [vmem:[#allocation2 + $0x8] sm:$0xff] %v593
        %598 = vst [vmem:[#allocation2 + $0x10] sm:$0xff] %v594
        %599 = vst [vmem:[#allocation2 + $0x28] sm:$0xff] %v595
        %600 = vst [vmem:[#allocation2 + $0x30] sm:$0xff] %v596
        %vm601 = vcmp.lt.s32.totalorder %v561, 15
        %vm602 = vcmp.lt.s32.totalorder %v562, 15
        %v603 = vsel %vm601, 1, 0
        %v604 = vsel %vm602, 1, 0
        %vm605 = vcmp.eq.s32.totalorder %v603, 1
        %vm606 = vcmp.eq.s32.totalorder %v604, 1
        %v607 = vsel %vm605, %v532, 0.0
        %v608 = vsel %vm606, %v533, 0.0
        %v609 = vsel %vm605, %v534, 0.0
        %v610 = vsel %vm606, %v535, 0.0
        %611 = vst [vmem:[%s567 + $0x8] sm:$0xff] %v607
        %612 = vst [vmem:[%s567 + $0x10] sm:$0xff] %v608
        %613 = vst [vmem:[%s567 + $0x28] sm:$0xff] %v609
        %614 = vst [vmem:[%s567 + $0x30] sm:$0xff] %v610
        %615 = vst [vmem:[%s572 + $0x8] sm:$0xff] %v532
        %616 = vst [vmem:[%s572 + $0x10] sm:$0xff] %v533
        %617 = vst [vmem:[%s572 + $0x28] sm:$0xff] %v534
        %618 = vst [vmem:[%s572 + $0x30] sm:$0xff] %v535
        %vm619 = vcmp.ge.s32.totalorder %v561, 1
        %vm620 = vcmp.ge.s32.totalorder %v562, 1
        %v621 = vsel %vm619, 1, 0
        %v622 = vsel %vm620, 1, 0
        %vm623 = vcmp.eq.s32.totalorder %v621, 1
        %vm624 = vcmp.eq.s32.totalorder %v622, 1
        %v625 = vsel %vm623, %v532, 0.0
        %v626 = vsel %vm624, %v533, 0.0
        %v627 = vsel %vm623, %v534, 0.0
        %v628 = vsel %vm624, %v535, 0.0
        %629 = vst [vmem:[%s577 + $0x8] sm:$0xff] %v625
        %630 = vst [vmem:[%s577 + $0x10] sm:$0xff] %v626
        %631 = vst [vmem:[%s577 + $0x28] sm:$0xff] %v627
        %632 = vst [vmem:[%s577 + $0x30] sm:$0xff] %v628
        %vm633 = vcmp.ge.s32.totalorder %v561, 2
        %vm634 = vcmp.ge.s32.totalorder %v562, 2
        %v635 = vsel %vm633, 1, 0
        %v636 = vsel %vm634, 1, 0
        %vm637 = vcmp.eq.s32.totalorder %v635, 1
        %vm638 = vcmp.eq.s32.totalorder %v636, 1
        %v639 = vsel %vm637, %v532, 0.0
        %v640 = vsel %vm638, %v533, 0.0
        %v641 = vsel %vm637, %v534, 0.0
        %v642 = vsel %vm638, %v535, 0.0
        %643 = vst [vmem:[%s582 + $0x8] sm:$0xff] %v639
        %644 = vst [vmem:[%s582 + $0x10] sm:$0xff] %v640
        %645 = vst [vmem:[%s582 + $0x28] sm:$0xff] %v641
        %646 = vst [vmem:[%s582 + $0x30] sm:$0xff] %v642
        %v647 = vld [vmem:[%s4] sm:$0xff]
        %v648 = vld [vmem:[%s4 + $0x8] sm:$0xff]
        %v649 = vld [vmem:[%s7] sm:$0xff]
        %v650 = vld [vmem:[%s7 + $0x8] sm:$0xff]
        %652 = vset.pattern.permute.xlu0 0
        %653 = vperm.xlu0 %652, %v647
        %v654 = vpop.permute.xlu0 %653
        %657 = vset.pattern.permute.xlu0 0
        %658 = vperm.xlu0 %657, %v648
        %v659 = vpop.permute.xlu0 %658
        %v661 = vmul.f32 %v532, %v654
        %v662 = vmul.f32 %v533, %v654
        %v663 = vmul.f32 %v534, %v659
        %v664 = vmul.f32 %v535, %v659
        %666 = vset.pattern.permute.xlu0 0
        %667 = vperm.xlu0 %666, %v649
        %v668 = vpop.permute.xlu0 %667
        %671 = vset.pattern.permute.xlu0 0
        %672 = vperm.xlu0 %671, %v650
        %v673 = vpop.permute.xlu0 %672
        %v675 = vadd.f32 %v661, %v668
        %v676 = vadd.f32 %v662, %v668
        %v677 = vadd.f32 %v663, %v673
        %v678 = vadd.f32 %v664, %v673
        %v679 = vmax.f32 %v675, 0.0
        %v680 = vmax.f32 %v676, 0.0
        %v681 = vmax.f32 %v677, 0.0
        %v682 = vmax.f32 %v678, 0.0
        %v683 = vmin.f32 %v679, 6.0
        %v684 = vmin.f32 %v680, 6.0
        %v685 = vmin.f32 %v681, 6.0
        %v686 = vmin.f32 %v682, 6.0
        %v687 = vld [vmem:[%s8] sm:$0xff]
        %v688 = vld [vmem:[%s8 + $0x8] sm:$0xff]
        %v689 = vld [vmem:[%s5] sm:$0xff]
        %v690 = vld [vmem:[%s5 + $0x8] sm:$0xff]
        %s691 = scalar_lea.vmem %s7, 16
        %v692 = vld [vmem:[%s691] sm:$0xff]
        %v693 = vld [vmem:[%s691 + $0x8] sm:$0xff]
        %v694 = vld [vmem:[%s567] sm:$0xff]
        %v695 = vld [vmem:[%s567 + $0x8] sm:$0xff]
        %v696 = vld [vmem:[%s567 + $0x10] sm:$0xff]
        %v697 = vld [vmem:[%s567 + $0x20] sm:$0xff]
        %v698 = vld [vmem:[%s567 + $0x28] sm:$0xff]
        %v699 = vld [vmem:[%s567 + $0x30] sm:$0xff]
        %701 = vset.pattern.permute.xlu0 0
        %702 = vperm.xlu0 %701, %v689
        %v703 = vpop.permute.xlu0 %702
        %706 = vset.pattern.permute.xlu0 0
        %707 = vperm.xlu0 %706, %v690
        %v708 = vpop.permute.xlu0 %707
        %v710 = vmul.f32 %v694, %v703
        %v711 = vmul.f32 %v695, %v703
        %v712 = vmul.f32 %v696, %v703
        %v713 = vmul.f32 %v697, %v708
        %v714 = vmul.f32 %v698, %v708
        %v715 = vmul.f32 %v699, %v708
        %v716 = vld [vmem:[%s572] sm:$0xff]
        %v717 = vld [vmem:[%s572 + $0x8] sm:$0xff]
        %v718 = vld [vmem:[%s572 + $0x10] sm:$0xff]
        %v719 = vld [vmem:[%s572 + $0x20] sm:$0xff]
        %v720 = vld [vmem:[%s572 + $0x28] sm:$0xff]
        %v721 = vld [vmem:[%s572 + $0x30] sm:$0xff]
        %722 = vset.pattern.permute.xlu0 1
        %723 = vperm.xlu0 %722, %v689
        %v724 = vpop.permute.xlu0 %723
        %726 = vset.pattern.permute.xlu0 1
        %727 = vperm.xlu0 %726, %v690
        %v728 = vpop.permute.xlu0 %727
        %v730 = vmul.f32 %v716, %v724
        %v731 = vmul.f32 %v717, %v724
        %v732 = vmul.f32 %v718, %v724
        %v733 = vmul.f32 %v719, %v728
        %v734 = vmul.f32 %v720, %v728
        %v735 = vmul.f32 %v721, %v728
        %742 = vrot.lane.b32.xlu0 %v730, 127
        %v743 = vpop.permute.xlu0 %742
        %744 = vrot.lane.b32.xlu0 %v731, 127
        %v745 = vpop.permute.xlu0 %744
        %746 = vrot.lane.b32.xlu0 %v732, 127
        %v747 = vpop.permute.xlu0 %746
        %748 = vrot.lane.b32.xlu0 %v733, 127
        %v749 = vpop.permute.xlu0 %748
        %750 = vrot.lane.b32.xlu0 %v734, 127
        %v751 = vpop.permute.xlu0 %750
        %752 = vrot.lane.b32.xlu0 %v735, 127
        %v753 = vpop.permute.xlu0 %752
        %vm754 = vcmask 1039360
        %v755 = vsel %vm754, %v743, %v745
        %v756 = vsel %vm754, %v745, %v747
        %v757 = vsel %vm754, %v749, %v751
        %v758 = vsel %vm754, %v751, %v753
        %v765 = vadd.f32 %v710, %v755
        %v766 = vadd.f32 %v711, %v756
        %v767 = vadd.f32 %v712, %v747
        %v768 = vadd.f32 %v713, %v757
        %v769 = vadd.f32 %v714, %v758
        %v770 = vadd.f32 %v715, %v753
        %v771 = vld [vmem:[%s577] sm:$0xff]
        %v772 = vld [vmem:[%s577 + $0x8] sm:$0xff]
        %v773 = vld [vmem:[%s577 + $0x10] sm:$0xff]
        %v774 = vld [vmem:[%s577 + $0x20] sm:$0xff]
        %v775 = vld [vmem:[%s577 + $0x28] sm:$0xff]
        %v776 = vld [vmem:[%s577 + $0x30] sm:$0xff]
        %777 = vset.pattern.permute.xlu0 2
        %778 = vperm.xlu0 %777, %v689
        %v779 = vpop.permute.xlu0 %778
        %781 = vset.pattern.permute.xlu0 2
        %782 = vperm.xlu0 %781, %v690
        %v783 = vpop.permute.xlu0 %782
        %v785 = vmul.f32 %v771, %v779
        %v786 = vmul.f32 %v772, %v779
        %v787 = vmul.f32 %v773, %v779
        %v788 = vmul.f32 %v774, %v783
        %v789 = vmul.f32 %v775, %v783
        %v790 = vmul.f32 %v776, %v783
        %797 = vrot.lane.b32.xlu0 %v785, 126
        %v798 = vpop.permute.xlu0 %797
        %799 = vrot.lane.b32.xlu0 %v786, 126
        %v800 = vpop.permute.xlu0 %799
        %801 = vrot.lane.b32.xlu0 %v787, 126
        %v802 = vpop.permute.xlu0 %801
        %803 = vrot.lane.b32.xlu0 %v788, 126
        %v804 = vpop.permute.xlu0 %803
        %805 = vrot.lane.b32.xlu0 %v789, 126
        %v806 = vpop.permute.xlu0 %805
        %807 = vrot.lane.b32.xlu0 %v790, 126
        %v808 = vpop.permute.xlu0 %807
        %vm809 = vcmask 1031168
        %v810 = vsel %vm809, %v798, %v800
        %v811 = vsel %vm809, %v800, %v802
        %v812 = vsel %vm809, %v804, %v806
        %v813 = vsel %vm809, %v806, %v808
        %v820 = vadd.f32 %v765, %v810
        %v821 = vadd.f32 %v766, %v811
        %v822 = vadd.f32 %v767, %v802
        %v823 = vadd.f32 %v768, %v812
        %v824 = vadd.f32 %v769, %v813
        %v825 = vadd.f32 %v770, %v808
        %826 = vset.pattern.permute.xlu0 3
        %827 = vperm.xlu0 %826, %v689
        %v828 = vpop.permute.xlu0 %827
        %830 = vset.pattern.permute.xlu0 3
        %831 = vperm.xlu0 %830, %v690
        %v832 = vpop.permute.xlu0 %831
        %v834 = vmul.f32 %v694, %v828
        %v835 = vmul.f32 %v695, %v828
        %v836 = vmul.f32 %v696, %v828
        %v837 = vmul.f32 %v697, %v832
        %v838 = vmul.f32 %v698, %v832
        %v839 = vmul.f32 %v699, %v832
        %840 = vset.pattern.permute.xlu0 4
        %841 = vperm.xlu0 %840, %v689
        %v842 = vpop.permute.xlu0 %841
        %844 = vset.pattern.permute.xlu0 4
        %845 = vperm.xlu0 %844, %v690
        %v846 = vpop.permute.xlu0 %845
        %v848 = vmul.f32 %v717, %v842
        %v849 = vmul.f32 %v718, %v842
        %v850 = vmul.f32 %v720, %v846
        %v851 = vmul.f32 %v721, %v846
        %856 = vrot.lane.b32.xlu0 %v848, 127
        %v857 = vpop.permute.xlu0 %856
        %858 = vrot.lane.b32.xlu0 %v849, 127
        %v859 = vpop.permute.xlu0 %858
        %860 = vrot.lane.b32.xlu0 %v850, 127
        %v861 = vpop.permute.xlu0 %860
        %862 = vrot.lane.b32.xlu0 %v851, 127
        %v863 = vpop.permute.xlu0 %862
        %v864 = vsel %vm754, %v857, %v859
        %v865 = vsel %vm754, %v861, %v863
        %v872 = vadd.f32 %v834, %v857
        %v873 = vadd.f32 %v835, %v864
        %v874 = vadd.f32 %v836, %v859
        %v875 = vadd.f32 %v837, %v861
        %v876 = vadd.f32 %v838, %v865
        %v877 = vadd.f32 %v839, %v863
        %v878 = vld [vmem:[%s577 + $0x8] sm:$0xff]
        %v879 = vld [vmem:[%s577 + $0x10] sm:$0xff]
        %v880 = vld [vmem:[%s577 + $0x18] sm:$0xff]
        %v881 = vld [vmem:[%s577 + $0x28] sm:$0xff]
        %v882 = vld [vmem:[%s577 + $0x30] sm:$0xff]
        %v883 = vld [vmem:[%s577 + $0x38] sm:$0xff]
        %884 = vset.pattern.permute.xlu0 5
        %885 = vperm.xlu0 %884, %v689
        %v886 = vpop.permute.xlu0 %885
        %888 = vset.pattern.permute.xlu0 5
        %889 = vperm.xlu0 %888, %v690
        %v890 = vpop.permute.xlu0 %889
        %v892 = vmul.f32 %v878, %v886
        %v893 = vmul.f32 %v879, %v886
        %v894 = vmul.f32 %v880, %v886
        %v895 = vmul.f32 %v881, %v890
        %v896 = vmul.f32 %v882, %v890
        %v897 = vmul.f32 %v883, %v890
        %904 = vrot.lane.b32.xlu0 %v892, 126
        %v905 = vpop.permute.xlu0 %904
        %906 = vrot.lane.b32.xlu0 %v893, 126
        %v907 = vpop.permute.xlu0 %906
        %908 = vrot.lane.b32.xlu0 %v894, 126
        %v909 = vpop.permute.xlu0 %908
        %910 = vrot.lane.b32.xlu0 %v895, 126
        %v911 = vpop.permute.xlu0 %910
        %912 = vrot.lane.b32.xlu0 %v896, 126
        %v913 = vpop.permute.xlu0 %912
        %914 = vrot.lane.b32.xlu0 %v897, 126
        %v915 = vpop.permute.xlu0 %914
        %v916 = vsel %vm809, %v905, %v907
        %v917 = vsel %vm809, %v907, %v909
        %v918 = vsel %vm809, %v911, %v913
        %v919 = vsel %vm809, %v913, %v915
        %v926 = vadd.f32 %v872, %v905
        %v927 = vadd.f32 %v873, %v916
        %v928 = vadd.f32 %v874, %v917
        %v929 = vadd.f32 %v875, %v911
        %v930 = vadd.f32 %v876, %v918
        %v931 = vadd.f32 %v877, %v919
        %938 = vrot.lane.b32.xlu0 %v926, 112
        %v939 = vpop.permute.xlu0 %938
        %940 = vrot.lane.b32.xlu0 %v927, 112
        %v941 = vpop.permute.xlu0 %940
        %942 = vrot.lane.b32.xlu0 %v928, 112
        %v943 = vpop.permute.xlu0 %942
        %944 = vrot.lane.b32.xlu0 %v929, 112
        %v945 = vpop.permute.xlu0 %944
        %946 = vrot.lane.b32.xlu0 %v930, 112
        %v947 = vpop.permute.xlu0 %946
        %948 = vrot.lane.b32.xlu0 %v931, 112
        %v949 = vpop.permute.xlu0 %948
        %vm950 = vcmask 916480
        %v951 = vsel %vm950, %v939, %v941
        %v952 = vsel %vm950, %v941, %v943
        %v953 = vsel %vm950, %v945, %v947
        %v954 = vsel %vm950, %v947, %v949
        %v961 = vadd.f32 %v820, %v951
        %v962 = vadd.f32 %v821, %v952
        %v963 = vadd.f32 %v822, %v943
        %v964 = vadd.f32 %v823, %v953
        %v965 = vadd.f32 %v824, %v954
        %v966 = vadd.f32 %v825, %v949
        %v967 = vld [vmem:[%s567 + $0x8] sm:$0xff]
        %v968 = vld [vmem:[%s567 + $0x10] sm:$0xff]
        %v969 = vld [vmem:[%s567 + $0x18] sm:$0xff]
        %v970 = vld [vmem:[%s567 + $0x28] sm:$0xff]
        %v971 = vld [vmem:[%s567 + $0x30] sm:$0xff]
        %v972 = vld [vmem:[%s567 + $0x38] sm:$0xff]
        %973 = vset.pattern.permute.xlu0 6
        %974 = vperm.xlu0 %973, %v689
        %v975 = vpop.permute.xlu0 %974
        %977 = vset.pattern.permute.xlu0 6
        %978 = vperm.xlu0 %977, %v690
        %v979 = vpop.permute.xlu0 %978
        %v981 = vmul.f32 %v967, %v975
        %v982 = vmul.f32 %v968, %v975
        %v983 = vmul.f32 %v969, %v975
        %v984 = vmul.f32 %v970, %v979
        %v985 = vmul.f32 %v971, %v979
        %v986 = vmul.f32 %v972, %v979
        %v987 = vld [vmem:[%s572 + $0x8] sm:$0xff]
        %v988 = vld [vmem:[%s572 + $0x10] sm:$0xff]
        %v989 = vld [vmem:[%s572 + $0x18] sm:$0xff]
        %v990 = vld [vmem:[%s572 + $0x28] sm:$0xff]
        %v991 = vld [vmem:[%s572 + $0x30] sm:$0xff]
        %v992 = vld [vmem:[%s572 + $0x38] sm:$0xff]
        %993 = vset.pattern.permute.xlu0 7
        %994 = vperm.xlu0 %993, %v689
        %v995 = vpop.permute.xlu0 %994
        %997 = vset.pattern.permute.xlu0 7
        %998 = vperm.xlu0 %997, %v690
        %v999 = vpop.permute.xlu0 %998
        %v1001 = vmul.f32 %v987, %v995
        %v1002 = vmul.f32 %v988, %v995
        %v1003 = vmul.f32 %v989, %v995
        %v1004 = vmul.f32 %v990, %v999
        %v1005 = vmul.f32 %v991, %v999
        %v1006 = vmul.f32 %v992, %v999
        %1013 = vrot.lane.b32.xlu0 %v1001, 127
        %v1014 = vpop.permute.xlu0 %1013
        %1015 = vrot.lane.b32.xlu0 %v1002, 127
        %v1016 = vpop.permute.xlu0 %1015
        %1017 = vrot.lane.b32.xlu0 %v1003, 127
        %v1018 = vpop.permute.xlu0 %1017
        %1019 = vrot.lane.b32.xlu0 %v1004, 127
        %v1020 = vpop.permute.xlu0 %1019
        %1021 = vrot.lane.b32.xlu0 %v1005, 127
        %v1022 = vpop.permute.xlu0 %1021
        %1023 = vrot.lane.b32.xlu0 %v1006, 127
        %v1024 = vpop.permute.xlu0 %1023
        %v1025 = vsel %vm754, %v1014, %v1016
        %v1026 = vsel %vm754, %v1016, %v1018
        %v1027 = vsel %vm754, %v1020, %v1022
        %v1028 = vsel %vm754, %v1022, %v1024
        %v1035 = vadd.f32 %v981, %v1025
        %v1036 = vadd.f32 %v982, %v1026
        %v1037 = vadd.f32 %v983, %v1018
        %v1038 = vadd.f32 %v984, %v1027
        %v1039 = vadd.f32 %v985, %v1028
        %v1040 = vadd.f32 %v986, %v1024
        %1041 = vset.pattern.permute.xlu0 8
        %1042 = vperm.xlu0 %1041, %v689
        %v1043 = vpop.permute.xlu0 %1042
        %1045 = vset.pattern.permute.xlu0 8
        %1046 = vperm.xlu0 %1045, %v690
        %v1047 = vpop.permute.xlu0 %1046
        %v1049 = vmul.f32 %v878, %v1043
        %v1050 = vmul.f32 %v879, %v1043
        %v1051 = vmul.f32 %v880, %v1043
        %v1052 = vmul.f32 %v881, %v1047
        %v1053 = vmul.f32 %v882, %v1047
        %v1054 = vmul.f32 %v883, %v1047
        %1061 = vrot.lane.b32.xlu0 %v1049, 126
        %v1062 = vpop.permute.xlu0 %1061
        %1063 = vrot.lane.b32.xlu0 %v1050, 126
        %v1064 = vpop.permute.xlu0 %1063
        %1065 = vrot.lane.b32.xlu0 %v1051, 126
        %v1066 = vpop.permute.xlu0 %1065
        %1067 = vrot.lane.b32.xlu0 %v1052, 126
        %v1068 = vpop.permute.xlu0 %1067
        %1069 = vrot.lane.b32.xlu0 %v1053, 126
        %v1070 = vpop.permute.xlu0 %1069
        %1071 = vrot.lane.b32.xlu0 %v1054, 126
        %v1072 = vpop.permute.xlu0 %1071
        %v1073 = vsel %vm809, %v1062, %v1064
        %v1074 = vsel %vm809, %v1064, %v1066
        %v1075 = vsel %vm809, %v1068, %v1070
        %v1076 = vsel %vm809, %v1070, %v1072
        %v1083 = vadd.f32 %v1035, %v1073
        %v1084 = vadd.f32 %v1036, %v1074
        %v1085 = vadd.f32 %v1037, %v1066
        %v1086 = vadd.f32 %v1038, %v1075
        %v1087 = vadd.f32 %v1039, %v1076
        %v1088 = vadd.f32 %v1040, %v1072
        %1095 = vrot.lane.b32.xlu0 %v1083, 96
        %v1096 = vpop.permute.xlu0 %1095
        %1097 = vrot.lane.b32.xlu0 %v1084, 96
        %v1098 = vpop.permute.xlu0 %1097
        %1099 = vrot.lane.b32.xlu0 %v1085, 96
        %v1100 = vpop.permute.xlu0 %1099
        %1101 = vrot.lane.b32.xlu0 %v1086, 96
        %v1102 = vpop.permute.xlu0 %1101
        %1103 = vrot.lane.b32.xlu0 %v1087, 96
        %v1104 = vpop.permute.xlu0 %1103
        %1105 = vrot.lane.b32.xlu0 %v1088, 96
        %v1106 = vpop.permute.xlu0 %1105
        %vm1107 = vcmask 785408
        %v1108 = vsel %vm1107, %v1096, %v1098
        %v1109 = vsel %vm1107, %v1098, %v1100
        %v1110 = vsel %vm1107, %v1102, %v1104
        %v1111 = vsel %vm1107, %v1104, %v1106
        %v1118 = vadd.f32 %v961, %v1096
        %v1119 = vadd.f32 %v962, %v1108
        %v1120 = vadd.f32 %v963, %v1109
        %v1121 = vadd.f32 %v964, %v1102
        %v1122 = vadd.f32 %v965, %v1110
        %v1123 = vadd.f32 %v966, %v1111
        %1125 = vset.pattern.permute.xlu0 0
        %1126 = vperm.xlu0 %1125, %v692
        %v1127 = vpop.permute.xlu0 %1126
        %1130 = vset.pattern.permute.xlu0 0
        %1131 = vperm.xlu0 %1130, %v693
        %v1132 = vpop.permute.xlu0 %1131
        %v1134 = vadd.f32 %v1118, %v1127
        %v1135 = vadd.f32 %v1119, %v1127
        %v1136 = vadd.f32 %v1120, %v1127
        %v1137 = vadd.f32 %v1121, %v1132
        %v1138 = vadd.f32 %v1122, %v1132
        %v1139 = vadd.f32 %v1123, %v1132
        %v1140 = vmax.f32 %v1134, 0.0
        %v1141 = vmax.f32 %v1135, 0.0
        %v1142 = vmax.f32 %v1136, 0.0
        %v1143 = vmax.f32 %v1137, 0.0
        %v1144 = vmax.f32 %v1138, 0.0
        %v1145 = vmax.f32 %v1139, 0.0
        %v1146 = vmin.f32 %v1140, 6.0
        %v1147 = vmin.f32 %v1141, 6.0
        %v1148 = vmin.f32 %v1142, 6.0
        %v1149 = vmin.f32 %v1143, 6.0
        %v1150 = vmin.f32 %v1144, 6.0
        %v1151 = vmin.f32 %v1145, 6.0
        %1154 = vrot.lane.b32.xlu0 %v687, 112
        %v1155 = vpop.permute.xlu0 %1154
        %1156 = vrot.lane.b32.xlu0 %v688, 112
        %v1157 = vpop.permute.xlu0 %1156
        %1164 = vrot.lane.b32.xlu0 %v1146, 17
        %v1165 = vpop.permute.xlu0 %1164
        %1166 = vrot.lane.b32.xlu0 %v1147, 17
        %v1167 = vpop.permute.xlu0 %1166
        %1168 = vrot.lane.b32.xlu0 %v1148, 17
        %v1169 = vpop.permute.xlu0 %1168
        %1170 = vrot.lane.b32.xlu0 %v1149, 17
        %v1171 = vpop.permute.xlu0 %1170
        %1172 = vrot.lane.b32.xlu0 %v1150, 17
        %v1173 = vpop.permute.xlu0 %1172
        %1174 = vrot.lane.b32.xlu0 %v1151, 17
        %v1175 = vpop.permute.xlu0 %1174
        %vm1176 = vcmask 138240
        %v1177 = vsel %vm1176, %v1165, %v1167
        %v1178 = vsel %vm1176, %v1167, %v1169
        %v1179 = vsel %vm1176, %v1171, %v1173
        %v1180 = vsel %vm1176, %v1173, %v1175
        %vm1185 = vcmask 130048
        %v1186 = vsel %vm1185, %v1155, 0
        %v1188 = vsel %vm1185, %v1157, 0
        %1190 = vmatprep.subr.mxu0 %v1178
        %1191 = vmatpush1.msra.mxu0 %v1177
        %1192 = vmatprep.subr.mxu0 %v1180
        %1193 = vmatpush1.msra.mxu0 %v1179
        %1194 = vmatprep.subr.mxu0 0.0
        %1195 = vmatpush1.msra.mxu0 0.0
        %1196 = vmatprep.subr.mxu0 0.0
        %1197 = vmatpush1.msra.mxu0 0.0
        %1198 = vmatprep.subr.mxu0 0.0
        %1199 = vmatpush1.msra.mxu0 0.0
        %1200 = vmatprep.subr.mxu0 0.0
        %1201 = vmatpush1.msra.mxu0 0.0
        %1202 = vmatprep.subr.mxu0 0.0
        %1203 = vmatpush1.msra.mxu0 0.0
        %1204 = vmatprep.subr.mxu0 0.0
        %1205 = vmatpush1.msra.mxu0 0.0
        %1206 = vmatprep.subr.mxu0 0.0
        %1207 = vmatpush1.msra.mxu0 0.0
        %1208 = vmatprep.subr.mxu0 0.0
        %1209 = vmatpush1.msra.mxu0 0.0
        %1210 = vmatprep.subr.mxu0 0.0
        %1211 = vmatpush1.msra.mxu0 0.0
        %1212 = vmatprep.subr.mxu0 0.0
        %1213 = vmatpush1.msra.mxu0 0.0
        %1214 = vmatprep.subr.mxu0 0.0
        %1215 = vmatpush1.msra.mxu0 0.0
        %1216 = vmatprep.subr.mxu0 0.0
        %1217 = vmatpush1.msra.mxu0 0.0
        %1218 = vmatprep.subr.mxu0 0.0
        %1219 = vmatpush1.msra.mxu0 0.0
        %1220 = vmatprep.subr.mxu0 0.0
        %1221 = vmatpush1.msra.mxu0 0.0
        %1222 = vmatprep.subr.mxu0 0.0
        %1223 = vmatpush1.msra.mxu0 0.0
        %1224 = vmatprep.subr.mxu0 0.0
        %1225 = vmatpush1.msra.mxu0 0.0
        %1226 = vmatprep.subr.mxu0 0.0
        %1227 = vmatpush1.msra.mxu0 0.0
        %1228 = vmatprep.subr.mxu0 0.0
        %1229 = vmatpush1.msra.mxu0 0.0
        %1230 = vmatprep.subr.mxu0 0.0
        %1231 = vmatpush1.msra.mxu0 0.0
        %1232 = vmatprep.subr.mxu0 0.0
        %1233 = vmatpush1.msra.mxu0 0.0
        %1234 = vmatprep.subr.mxu0 0.0
        %1235 = vmatpush1.msra.mxu0 0.0
        %1236 = vmatprep.subr.mxu0 0.0
        %1237 = vmatpush1.msra.mxu0 0.0
        %1238 = vmatprep.subr.mxu0 0.0
        %1239 = vmatpush1.msra.mxu0 0.0
        %1240 = vmatprep.subr.mxu0 0.0
        %1241 = vmatpush1.msra.mxu0 0.0
        %1242 = vmatprep.subr.mxu0 0.0
        %1243 = vmatpush1.msra.mxu0 0.0
        %1244 = vmatprep.subr.mxu0 0.0
        %1245 = vmatpush1.msra.mxu0 0.0
        %1246 = vmatprep.subr.mxu0 0.0
        %1247 = vmatpush1.msra.mxu0 0.0
        %1248 = vmatprep.subr.mxu0 0.0
        %1249 = vmatpush1.msra.mxu0 0.0
        %1250 = vmatprep.subr.mxu0 0.0
        %1251 = vmatpush1.msra.mxu0 0.0
        %1252 = vmatprep.subr.mxu0 0.0
        %1253 = vmatpush1.msra.mxu0 0.0
        %1254 = vmatprep.mubr.f32.mxu0 0.0
        %1255 = vmatmul.mubr.f32.gmra.mrb[0].mxu0 %v1186
        %v1256 = vpop.f32.mrb[0].mxu0
        %v1257 = vadd.f32 0.0, %v1256
        %v1258 = vpop.f32.mrb[0].mxu0
        %v1259 = vadd.f32 0.0, %v1258
        %1260 = vmatprep.mubr.f32.mxu0 0.0
        %1261 = vmatmul.mubr.f32.gmra.mrb[0].mxu0 %v1188
        %v1262 = vpop.f32.mrb[0].mxu0
        %v1263 = vadd.f32 0.0, %v1262
        %v1264 = vpop.f32.mrb[0].mxu0
        %v1265 = vadd.f32 0.0, %v1264
        %1266 = vdwg.mxu0
        %v1267 = vsel %vm1185, %v687, 0
        %v1269 = vsel %vm1185, %v688, 0
        %1271 = vmatprep.subr.mxu0 %v684
        %1272 = vmatpush1.msra.mxu0 %v683
        %1273 = vmatprep.subr.mxu0 %v686
        %1274 = vmatpush1.msra.mxu0 %v685
        %1275 = vmatprep.subr.mxu0 0.0
        %1276 = vmatpush1.msra.mxu0 0.0
        %1277 = vmatprep.subr.mxu0 0.0
        %1278 = vmatpush1.msra.mxu0 0.0
        %1279 = vmatprep.subr.mxu0 0.0
        %1280 = vmatpush1.msra.mxu0 0.0
        %1281 = vmatprep.subr.mxu0 0.0
        %1282 = vmatpush1.msra.mxu0 0.0
        %1283 = vmatprep.subr.mxu0 0.0
        %1284 = vmatpush1.msra.mxu0 0.0
        %1285 = vmatprep.subr.mxu0 0.0
        %1286 = vmatpush1.msra.mxu0 0.0
        %1287 = vmatprep.subr.mxu0 0.0
        %1288 = vmatpush1.msra.mxu0 0.0
        %1289 = vmatprep.subr.mxu0 0.0
        %1290 = vmatpush1.msra.mxu0 0.0
        %1291 = vmatprep.subr.mxu0 0.0
        %1292 = vmatpush1.msra.mxu0 0.0
        %1293 = vmatprep.subr.mxu0 0.0
        %1294 = vmatpush1.msra.mxu0 0.0
        %1295 = vmatprep.subr.mxu0 0.0
        %1296 = vmatpush1.msra.mxu0 0.0
        %1297 = vmatprep.subr.mxu0 0.0
        %1298 = vmatpush1.msra.mxu0 0.0
        %1299 = vmatprep.subr.mxu0 0.0
        %1300 = vmatpush1.msra.mxu0 0.0
        %1301 = vmatprep.subr.mxu0 0.0
        %1302 = vmatpush1.msra.mxu0 0.0
        %1303 = vmatprep.subr.mxu0 0.0
        %1304 = vmatpush1.msra.mxu0 0.0
        %1305 = vmatprep.subr.mxu0 0.0
        %1306 = vmatpush1.msra.mxu0 0.0
        %1307 = vmatprep.subr.mxu0 0.0
        %1308 = vmatpush1.msra.mxu0 0.0
        %1309 = vmatprep.subr.mxu0 0.0
        %1310 = vmatpush1.msra.mxu0 0.0
        %1311 = vmatprep.subr.mxu0 0.0
        %1312 = vmatpush1.msra.mxu0 0.0
        %1313 = vmatprep.subr.mxu0 0.0
        %1314 = vmatpush1.msra.mxu0 0.0
        %1315 = vmatprep.subr.mxu0 0.0
        %1316 = vmatpush1.msra.mxu0 0.0
        %1317 = vmatprep.subr.mxu0 0.0
        %1318 = vmatpush1.msra.mxu0 0.0
        %1319 = vmatprep.subr.mxu0 0.0
        %1320 = vmatpush1.msra.mxu0 0.0
        %1321 = vmatprep.subr.mxu0 0.0
        %1322 = vmatpush1.msra.mxu0 0.0
        %1323 = vmatprep.subr.mxu0 0.0
        %1324 = vmatpush1.msra.mxu0 0.0
        %1325 = vmatprep.subr.mxu0 0.0
        %1326 = vmatpush1.msra.mxu0 0.0
        %1327 = vmatprep.subr.mxu0 0.0
        %1328 = vmatpush1.msra.mxu0 0.0
        %1329 = vmatprep.subr.mxu0 0.0
        %1330 = vmatpush1.msra.mxu0 0.0
        %1331 = vmatprep.subr.mxu0 0.0
        %1332 = vmatpush1.msra.mxu0 0.0
        %1333 = vmatprep.subr.mxu0 0.0
        %1334 = vmatpush1.msra.mxu0 0.0
        %1335 = vmatprep.mubr.f32.mxu0 0.0
        %1336 = vmatmul.mubr.f32.gmra.mrb[0].mxu0 %v1267
        %v1337 = vpop.f32.mrb[0].mxu0
        %v1338 = vadd.f32 %v1257, %v1337
        %v1339 = vpop.f32.mrb[0].mxu0
        %v1340 = vadd.f32 %v1259, %v1339
        %1341 = vmatprep.mubr.f32.mxu0 0.0
        %1342 = vmatmul.mubr.f32.gmra.mrb[0].mxu0 %v1269
        %v1343 = vpop.f32.mrb[0].mxu0
        %v1344 = vadd.f32 %v1263, %v1343
        %v1345 = vpop.f32.mrb[0].mxu0
        %v1346 = vadd.f32 %v1265, %v1345
        %1347 = vdwg.mxu0
        %v1348 = vld [vmem:[%s6] sm:$0xff]
        %v1349 = vld [vmem:[%s6 + $0x8] sm:$0xff]
        %s1350 = scalar_lea.vmem %s7, 32
        %v1351 = vld [vmem:[%s1350] sm:$0xff]
        %v1352 = vld [vmem:[%s1350 + $0x8] sm:$0xff]
        %v1353 = vld [vmem:[#allocation2] sm:$0xff]
        %v1354 = vld [vmem:[#allocation2 + $0x8] sm:$0xff]
        %v1355 = vld [vmem:[#allocation2 + $0x10] sm:$0xff]
        %v1356 = vld [vmem:[#allocation2 + $0x20] sm:$0xff]
        %v1357 = vld [vmem:[#allocation2 + $0x28] sm:$0xff]
        %v1358 = vld [vmem:[#allocation2 + $0x30] sm:$0xff]
        %1360 = vset.pattern.permute.xlu0 0
        %1361 = vperm.xlu0 %1360, %v1348
        %v1362 = vpop.permute.xlu0 %1361
        %1365 = vset.pattern.permute.xlu0 0
        %1366 = vperm.xlu0 %1365, %v1349
        %v1367 = vpop.permute.xlu0 %1366
        %v1369 = vmul.f32 %v1353, %v1362
        %v1370 = vmul.f32 %v1354, %v1362
        %v1371 = vmul.f32 %v1355, %v1362
        %v1372 = vmul.f32 %v1356, %v1367
        %v1373 = vmul.f32 %v1357, %v1367
        %v1374 = vmul.f32 %v1358, %v1367
        %1375 = vset.pattern.permute.xlu0 1
        %1376 = vperm.xlu0 %1375, %v1348
        %v1377 = vpop.permute.xlu0 %1376
        %1379 = vset.pattern.permute.xlu0 1
        %1380 = vperm.xlu0 %1379, %v1349
        %v1381 = vpop.permute.xlu0 %1380
        %v1383 = vmul.f32 %v694, %v1377
        %v1384 = vmul.f32 %v695, %v1377
        %v1385 = vmul.f32 %v696, %v1377
        %v1386 = vmul.f32 %v697, %v1381
        %v1387 = vmul.f32 %v698, %v1381
        %v1388 = vmul.f32 %v699, %v1381
        %1395 = vrot.lane.b32.xlu0 %v1383, 127
        %v1396 = vpop.permute.xlu0 %1395
        %1397 = vrot.lane.b32.xlu0 %v1384, 127
        %v1398 = vpop.permute.xlu0 %1397
        %1399 = vrot.lane.b32.xlu0 %v1385, 127
        %v1400 = vpop.permute.xlu0 %1399
        %1401 = vrot.lane.b32.xlu0 %v1386, 127
        %v1402 = vpop.permute.xlu0 %1401
        %1403 = vrot.lane.b32.xlu0 %v1387, 127
        %v1404 = vpop.permute.xlu0 %1403
        %1405 = vrot.lane.b32.xlu0 %v1388, 127
        %v1406 = vpop.permute.xlu0 %1405
        %v1407 = vsel %vm754, %v1396, %v1398
        %v1408 = vsel %vm754, %v1398, %v1400
        %v1409 = vsel %vm754, %v1402, %v1404
        %v1410 = vsel %vm754, %v1404, %v1406
        %v1417 = vadd.f32 %v1369, %v1407
        %v1418 = vadd.f32 %v1370, %v1408
        %v1419 = vadd.f32 %v1371, %v1400
        %v1420 = vadd.f32 %v1372, %v1409
        %v1421 = vadd.f32 %v1373, %v1410
        %v1422 = vadd.f32 %v1374, %v1406
        %1423 = vset.pattern.permute.xlu0 2
        %1424 = vperm.xlu0 %1423, %v1348
        %v1425 = vpop.permute.xlu0 %1424
        %1427 = vset.pattern.permute.xlu0 2
        %1428 = vperm.xlu0 %1427, %v1349
        %v1429 = vpop.permute.xlu0 %1428
        %v1431 = vmul.f32 %v716, %v1425
        %v1432 = vmul.f32 %v717, %v1425
        %v1433 = vmul.f32 %v718, %v1425
        %v1434 = vmul.f32 %v719, %v1429
        %v1435 = vmul.f32 %v720, %v1429
        %v1436 = vmul.f32 %v721, %v1429
        %1443 = vrot.lane.b32.xlu0 %v1431, 126
        %v1444 = vpop.permute.xlu0 %1443
        %1445 = vrot.lane.b32.xlu0 %v1432, 126
        %v1446 = vpop.permute.xlu0 %1445
        %1447 = vrot.lane.b32.xlu0 %v1433, 126
        %v1448 = vpop.permute.xlu0 %1447
        %1449 = vrot.lane.b32.xlu0 %v1434, 126
        %v1450 = vpop.permute.xlu0 %1449
        %1451 = vrot.lane.b32.xlu0 %v1435, 126
        %v1452 = vpop.permute.xlu0 %1451
        %1453 = vrot.lane.b32.xlu0 %v1436, 126
        %v1454 = vpop.permute.xlu0 %1453
        %v1455 = vsel %vm809, %v1444, %v1446
        %v1456 = vsel %vm809, %v1446, %v1448
        %v1457 = vsel %vm809, %v1450, %v1452
        %v1458 = vsel %vm809, %v1452, %v1454
        %v1465 = vadd.f32 %v1417, %v1455
        %v1466 = vadd.f32 %v1418, %v1456
        %v1467 = vadd.f32 %v1419, %v1448
        %v1468 = vadd.f32 %v1420, %v1457
        %v1469 = vadd.f32 %v1421, %v1458
        %v1470 = vadd.f32 %v1422, %v1454
        %1471 = vset.pattern.permute.xlu0 3
        %1472 = vperm.xlu0 %1471, %v1348
        %v1473 = vpop.permute.xlu0 %1472
        %1475 = vset.pattern.permute.xlu0 3
        %1476 = vperm.xlu0 %1475, %v1349
        %v1477 = vpop.permute.xlu0 %1476
        %v1479 = vmul.f32 %v771, %v1473
        %v1480 = vmul.f32 %v772, %v1473
        %v1481 = vmul.f32 %v773, %v1473
        %v1482 = vmul.f32 %v774, %v1477
        %v1483 = vmul.f32 %v775, %v1477
        %v1484 = vmul.f32 %v776, %v1477
        %1491 = vrot.lane.b32.xlu0 %v1479, 125
        %v1492 = vpop.permute.xlu0 %1491
        %1493 = vrot.lane.b32.xlu0 %v1480, 125
        %v1494 = vpop.permute.xlu0 %1493
        %1495 = vrot.lane.b32.xlu0 %v1481, 125
        %v1496 = vpop.permute.xlu0 %1495
        %1497 = vrot.lane.b32.xlu0 %v1482, 125
        %v1498 = vpop.permute.xlu0 %1497
        %1499 = vrot.lane.b32.xlu0 %v1483, 125
        %v1500 = vpop.permute.xlu0 %1499
        %1501 = vrot.lane.b32.xlu0 %v1484, 125
        %v1502 = vpop.permute.xlu0 %1501
        %vm1503 = vcmask 1022976
        %v1504 = vsel %vm1503, %v1492, %v1494
        %v1505 = vsel %vm1503, %v1494, %v1496
        %v1506 = vsel %vm1503, %v1498, %v1500
        %v1507 = vsel %vm1503, %v1500, %v1502
        %v1514 = vadd.f32 %v1465, %v1504
        %v1515 = vadd.f32 %v1466, %v1505
        %v1516 = vadd.f32 %v1467, %v1496
        %v1517 = vadd.f32 %v1468, %v1506
        %v1518 = vadd.f32 %v1469, %v1507
        %v1519 = vadd.f32 %v1470, %v1502
        %v1520 = vld [vmem:[%s582] sm:$0xff]
        %v1521 = vld [vmem:[%s582 + $0x8] sm:$0xff]
        %v1522 = vld [vmem:[%s582 + $0x10] sm:$0xff]
        %v1523 = vld [vmem:[%s582 + $0x20] sm:$0xff]
        %v1524 = vld [vmem:[%s582 + $0x28] sm:$0xff]
        %v1525 = vld [vmem:[%s582 + $0x30] sm:$0xff]
        %1526 = vset.pattern.permute.xlu0 4
        %1527 = vperm.xlu0 %1526, %v1348
        %v1528 = vpop.permute.xlu0 %1527
        %1530 = vset.pattern.permute.xlu0 4
        %1531 = vperm.xlu0 %1530, %v1349
        %v1532 = vpop.permute.xlu0 %1531
        %v1534 = vmul.f32 %v1520, %v1528
        %v1535 = vmul.f32 %v1521, %v1528
        %v1536 = vmul.f32 %v1522, %v1528
        %v1537 = vmul.f32 %v1523, %v1532
        %v1538 = vmul.f32 %v1524, %v1532
        %v1539 = vmul.f32 %v1525, %v1532
        %1546 = vrot.lane.b32.xlu0 %v1534, 124
        %v1547 = vpop.permute.xlu0 %1546
        %1548 = vrot.lane.b32.xlu0 %v1535, 124
        %v1549 = vpop.permute.xlu0 %1548
        %1550 = vrot.lane.b32.xlu0 %v1536, 124
        %v1551 = vpop.permute.xlu0 %1550
        %1552 = vrot.lane.b32.xlu0 %v1537, 124
        %v1553 = vpop.permute.xlu0 %1552
        %1554 = vrot.lane.b32.xlu0 %v1538, 124
        %v1555 = vpop.permute.xlu0 %1554
        %1556 = vrot.lane.b32.xlu0 %v1539, 124
        %v1557 = vpop.permute.xlu0 %1556
        %vm1558 = vcmask 1014784
        %v1559 = vsel %vm1558, %v1547, %v1549
        %v1560 = vsel %vm1558, %v1549, %v1551
        %v1561 = vsel %vm1558, %v1553, %v1555
        %v1562 = vsel %vm1558, %v1555, %v1557
        %v1569 = vadd.f32 %v1514, %v1559
        %v1570 = vadd.f32 %v1515, %v1560
        %v1571 = vadd.f32 %v1516, %v1551
        %v1572 = vadd.f32 %v1517, %v1561
        %v1573 = vadd.f32 %v1518, %v1562
        %v1574 = vadd.f32 %v1519, %v1557
        %1575 = vset.pattern.permute.xlu0 5
        %1576 = vperm.xlu0 %1575, %v1348
        %v1577 = vpop.permute.xlu0 %1576
        %1579 = vset.pattern.permute.xlu0 5
        %1580 = vperm.xlu0 %1579, %v1349
        %v1581 = vpop.permute.xlu0 %1580
        %v1583 = vmul.f32 %v1353, %v1577
        %v1584 = vmul.f32 %v1354, %v1577
        %v1585 = vmul.f32 %v1355, %v1577
        %v1586 = vmul.f32 %v1356, %v1581
        %v1587 = vmul.f32 %v1357, %v1581
        %v1588 = vmul.f32 %v1358, %v1581
        %1589 = vset.pattern.permute.xlu0 6
        %1590 = vperm.xlu0 %1589, %v1348
        %v1591 = vpop.permute.xlu0 %1590
        %1593 = vset.pattern.permute.xlu0 6
        %1594 = vperm.xlu0 %1593, %v1349
        %v1595 = vpop.permute.xlu0 %1594
        %v1597 = vmul.f32 %v694, %v1591
        %v1598 = vmul.f32 %v695, %v1591
        %v1599 = vmul.f32 %v696, %v1591
        %v1600 = vmul.f32 %v697, %v1595
        %v1601 = vmul.f32 %v698, %v1595
        %v1602 = vmul.f32 %v699, %v1595
        %1609 = vrot.lane.b32.xlu0 %v1597, 127
        %v1610 = vpop.permute.xlu0 %1609
        %1611 = vrot.lane.b32.xlu0 %v1598, 127
        %v1612 = vpop.permute.xlu0 %1611
        %1613 = vrot.lane.b32.xlu0 %v1599, 127
        %v1614 = vpop.permute.xlu0 %1613
        %1615 = vrot.lane.b32.xlu0 %v1600, 127
        %v1616 = vpop.permute.xlu0 %1615
        %1617 = vrot.lane.b32.xlu0 %v1601, 127
        %v1618 = vpop.permute.xlu0 %1617
        %1619 = vrot.lane.b32.xlu0 %v1602, 127
        %v1620 = vpop.permute.xlu0 %1619
        %v1621 = vsel %vm754, %v1610, %v1612
        %v1622 = vsel %vm754, %v1612, %v1614
        %v1623 = vsel %vm754, %v1616, %v1618
        %v1624 = vsel %vm754, %v1618, %v1620
        %v1631 = vadd.f32 %v1583, %v1621
        %v1632 = vadd.f32 %v1584, %v1622
        %v1633 = vadd.f32 %v1585, %v1614
        %v1634 = vadd.f32 %v1586, %v1623
        %v1635 = vadd.f32 %v1587, %v1624
        %v1636 = vadd.f32 %v1588, %v1620
        %1637 = vset.pattern.permute.xlu0 7
        %1638 = vperm.xlu0 %1637, %v1348
        %v1639 = vpop.permute.xlu0 %1638
        %1641 = vset.pattern.permute.xlu0 7
        %1642 = vperm.xlu0 %1641, %v1349
        %v1643 = vpop.permute.xlu0 %1642
        %v1645 = vmul.f32 %v716, %v1639
        %v1646 = vmul.f32 %v717, %v1639
        %v1647 = vmul.f32 %v718, %v1639
        %v1648 = vmul.f32 %v719, %v1643
        %v1649 = vmul.f32 %v720, %v1643
        %v1650 = vmul.f32 %v721, %v1643
        %1657 = vrot.lane.b32.xlu0 %v1645, 126
        %v1658 = vpop.permute.xlu0 %1657
        %1659 = vrot.lane.b32.xlu0 %v1646, 126
        %v1660 = vpop.permute.xlu0 %1659
        %1661 = vrot.lane.b32.xlu0 %v1647, 126
        %v1662 = vpop.permute.xlu0 %1661
        %1663 = vrot.lane.b32.xlu0 %v1648, 126
        %v1664 = vpop.permute.xlu0 %1663
        %1665 = vrot.lane.b32.xlu0 %v1649, 126
        %v1666 = vpop.permute.xlu0 %1665
        %1667 = vrot.lane.b32.xlu0 %v1650, 126
        %v1668 = vpop.permute.xlu0 %1667
        %v1669 = vsel %vm809, %v1658, %v1660
        %v1670 = vsel %vm809, %v1660, %v1662
        %v1671 = vsel %vm809, %v1664, %v1666
        %v1672 = vsel %vm809, %v1666, %v1668
        %v1679 = vadd.f32 %v1631, %v1669
        %v1680 = vadd.f32 %v1632, %v1670
        %v1681 = vadd.f32 %v1633, %v1662
        %v1682 = vadd.f32 %v1634, %v1671
        %v1683 = vadd.f32 %v1635, %v1672
        %v1684 = vadd.f32 %v1636, %v1668
        %1685 = vset.pattern.permute.xlu0 8
        %1686 = vperm.xlu0 %1685, %v1348
        %v1687 = vpop.permute.xlu0 %1686
        %1689 = vset.pattern.permute.xlu0 8
        %1690 = vperm.xlu0 %1689, %v1349
        %v1691 = vpop.permute.xlu0 %1690
        %v1693 = vmul.f32 %v771, %v1687
        %v1694 = vmul.f32 %v772, %v1687
        %v1695 = vmul.f32 %v773, %v1687
        %v1696 = vmul.f32 %v774, %v1691
        %v1697 = vmul.f32 %v775, %v1691
        %v1698 = vmul.f32 %v776, %v1691
        %1705 = vrot.lane.b32.xlu0 %v1693, 125
        %v1706 = vpop.permute.xlu0 %1705
        %1707 = vrot.lane.b32.xlu0 %v1694, 125
        %v1708 = vpop.permute.xlu0 %1707
        %1709 = vrot.lane.b32.xlu0 %v1695, 125
        %v1710 = vpop.permute.xlu0 %1709
        %1711 = vrot.lane.b32.xlu0 %v1696, 125
        %v1712 = vpop.permute.xlu0 %1711
        %1713 = vrot.lane.b32.xlu0 %v1697, 125
        %v1714 = vpop.permute.xlu0 %1713
        %1715 = vrot.lane.b32.xlu0 %v1698, 125
        %v1716 = vpop.permute.xlu0 %1715
        %v1717 = vsel %vm1503, %v1706, %v1708
        %v1718 = vsel %vm1503, %v1708, %v1710
        %v1719 = vsel %vm1503, %v1712, %v1714
        %v1720 = vsel %vm1503, %v1714, %v1716
        %v1727 = vadd.f32 %v1679, %v1717
        %v1728 = vadd.f32 %v1680, %v1718
        %v1729 = vadd.f32 %v1681, %v1710
        %v1730 = vadd.f32 %v1682, %v1719
        %v1731 = vadd.f32 %v1683, %v1720
        %v1732 = vadd.f32 %v1684, %v1716
        %1733 = vset.pattern.permute.xlu0 9
        %1734 = vperm.xlu0 %1733, %v1348
        %v1735 = vpop.permute.xlu0 %1734
        %1737 = vset.pattern.permute.xlu0 9
        %1738 = vperm.xlu0 %1737, %v1349
        %v1739 = vpop.permute.xlu0 %1738
        %v1741 = vmul.f32 %v1520, %v1735
        %v1742 = vmul.f32 %v1521, %v1735
        %v1743 = vmul.f32 %v1522, %v1735
        %v1744 = vmul.f32 %v1523, %v1739
        %v1745 = vmul.f32 %v1524, %v1739
        %v1746 = vmul.f32 %v1525, %v1739
        %1753 = vrot.lane.b32.xlu0 %v1741, 124
        %v1754 = vpop.permute.xlu0 %1753
        %1755 = vrot.lane.b32.xlu0 %v1742, 124
        %v1756 = vpop.permute.xlu0 %1755
        %1757 = vrot.lane.b32.xlu0 %v1743, 124
        %v1758 = vpop.permute.xlu0 %1757
        %1759 = vrot.lane.b32.xlu0 %v1744, 124
        %v1760 = vpop.permute.xlu0 %1759
        %1761 = vrot.lane.b32.xlu0 %v1745, 124
        %v1762 = vpop.permute.xlu0 %1761
        %1763 = vrot.lane.b32.xlu0 %v1746, 124
        %v1764 = vpop.permute.xlu0 %1763
        %v1765 = vsel %vm1558, %v1754, %v1756
        %v1766 = vsel %vm1558, %v1756, %v1758
        %v1767 = vsel %vm1558, %v1760, %v1762
        %v1768 = vsel %vm1558, %v1762, %v1764
        %v1775 = vadd.f32 %v1727, %v1765
        %v1776 = vadd.f32 %v1728, %v1766
        %v1777 = vadd.f32 %v1729, %v1758
        %v1778 = vadd.f32 %v1730, %v1767
        %v1779 = vadd.f32 %v1731, %v1768
        %v1780 = vadd.f32 %v1732, %v1764
        %1787 = vrot.lane.b32.xlu0 %v1775, 112
        %v1788 = vpop.permute.xlu0 %1787
        %1789 = vrot.lane.b32.xlu0 %v1776, 112
        %v1790 = vpop.permute.xlu0 %1789
        %1791 = vrot.lane.b32.xlu0 %v1777, 112
        %v1792 = vpop.permute.xlu0 %1791
        %1793 = vrot.lane.b32.xlu0 %v1778, 112
        %v1794 = vpop.permute.xlu0 %1793
        %1795 = vrot.lane.b32.xlu0 %v1779, 112
        %v1796 = vpop.permute.xlu0 %1795
        %1797 = vrot.lane.b32.xlu0 %v1780, 112
        %v1798 = vpop.permute.xlu0 %1797
        %v1799 = vsel %vm950, %v1788, %v1790
        %v1800 = vsel %vm950, %v1790, %v1792
        %v1801 = vsel %vm950, %v1794, %v1796
        %v1802 = vsel %vm950, %v1796, %v1798
        %v1809 = vadd.f32 %v1569, %v1799
        %v1810 = vadd.f32 %v1570, %v1800
        %v1811 = vadd.f32 %v1571, %v1792
        %v1812 = vadd.f32 %v1572, %v1801
        %v1813 = vadd.f32 %v1573, %v1802
        %v1814 = vadd.f32 %v1574, %v1798
        %1815 = vset.pattern.permute.xlu0 10
        %1816 = vperm.xlu0 %1815, %v1348
        %v1817 = vpop.permute.xlu0 %1816
        %1819 = vset.pattern.permute.xlu0 10
        %1820 = vperm.xlu0 %1819, %v1349
        %v1821 = vpop.permute.xlu0 %1820
        %v1823 = vmul.f32 %v1353, %v1817
        %v1824 = vmul.f32 %v1354, %v1817
        %v1825 = vmul.f32 %v1355, %v1817
        %v1826 = vmul.f32 %v1356, %v1821
        %v1827 = vmul.f32 %v1357, %v1821
        %v1828 = vmul.f32 %v1358, %v1821
        %1829 = vset.pattern.permute.xlu0 11
        %1830 = vperm.xlu0 %1829, %v1348
        %v1831 = vpop.permute.xlu0 %1830
        %1833 = vset.pattern.permute.xlu0 11
        %1834 = vperm.xlu0 %1833, %v1349
        %v1835 = vpop.permute.xlu0 %1834
        %v1837 = vmul.f32 %v694, %v1831
        %v1838 = vmul.f32 %v695, %v1831
        %v1839 = vmul.f32 %v696, %v1831
        %v1840 = vmul.f32 %v697, %v1835
        %v1841 = vmul.f32 %v698, %v1835
        %v1842 = vmul.f32 %v699, %v1835
        %1849 = vrot.lane.b32.xlu0 %v1837, 127
        %v1850 = vpop.permute.xlu0 %1849
        %1851 = vrot.lane.b32.xlu0 %v1838, 127
        %v1852 = vpop.permute.xlu0 %1851
        %1853 = vrot.lane.b32.xlu0 %v1839, 127
        %v1854 = vpop.permute.xlu0 %1853
        %1855 = vrot.lane.b32.xlu0 %v1840, 127
        %v1856 = vpop.permute.xlu0 %1855
        %1857 = vrot.lane.b32.xlu0 %v1841, 127
        %v1858 = vpop.permute.xlu0 %1857
        %1859 = vrot.lane.b32.xlu0 %v1842, 127
        %v1860 = vpop.permute.xlu0 %1859
        %v1861 = vsel %vm754, %v1850, %v1852
        %v1862 = vsel %vm754, %v1852, %v1854
        %v1863 = vsel %vm754, %v1856, %v1858
        %v1864 = vsel %vm754, %v1858, %v1860
        %v1871 = vadd.f32 %v1823, %v1861
        %v1872 = vadd.f32 %v1824, %v1862
        %v1873 = vadd.f32 %v1825, %v1854
        %v1874 = vadd.f32 %v1826, %v1863
        %v1875 = vadd.f32 %v1827, %v1864
        %v1876 = vadd.f32 %v1828, %v1860
        %1877 = vset.pattern.permute.xlu0 12
        %1878 = vperm.xlu0 %1877, %v1348
        %v1879 = vpop.permute.xlu0 %1878
        %1881 = vset.pattern.permute.xlu0 12
        %1882 = vperm.xlu0 %1881, %v1349
        %v1883 = vpop.permute.xlu0 %1882
        %v1885 = vmul.f32 %v717, %v1879
        %v1886 = vmul.f32 %v718, %v1879
        %v1887 = vmul.f32 %v720, %v1883
        %v1888 = vmul.f32 %v721, %v1883
        %1893 = vrot.lane.b32.xlu0 %v1885, 126
        %v1894 = vpop.permute.xlu0 %1893
        %1895 = vrot.lane.b32.xlu0 %v1886, 126
        %v1896 = vpop.permute.xlu0 %1895
        %1897 = vrot.lane.b32.xlu0 %v1887, 126
        %v1898 = vpop.permute.xlu0 %1897
        %1899 = vrot.lane.b32.xlu0 %v1888, 126
        %v1900 = vpop.permute.xlu0 %1899
        %v1901 = vsel %vm809, %v1894, %v1896
        %v1902 = vsel %vm809, %v1898, %v1900
        %v1909 = vadd.f32 %v1871, %v1894
        %v1910 = vadd.f32 %v1872, %v1901
        %v1911 = vadd.f32 %v1873, %v1896
        %v1912 = vadd.f32 %v1874, %v1898
        %v1913 = vadd.f32 %v1875, %v1902
        %v1914 = vadd.f32 %v1876, %v1900
        %1915 = vset.pattern.permute.xlu0 13
        %1916 = vperm.xlu0 %1915, %v1348
        %v1917 = vpop.permute.xlu0 %1916
        %1919 = vset.pattern.permute.xlu0 13
        %1920 = vperm.xlu0 %1919, %v1349
        %v1921 = vpop.permute.xlu0 %1920
        %v1923 = vmul.f32 %v878, %v1917
        %v1924 = vmul.f32 %v879, %v1917
        %v1925 = vmul.f32 %v880, %v1917
        %v1926 = vmul.f32 %v881, %v1921
        %v1927 = vmul.f32 %v882, %v1921
        %v1928 = vmul.f32 %v883, %v1921
        %1935 = vrot.lane.b32.xlu0 %v1923, 125
        %v1936 = vpop.permute.xlu0 %1935
        %1937 = vrot.lane.b32.xlu0 %v1924, 125
        %v1938 = vpop.permute.xlu0 %1937
        %1939 = vrot.lane.b32.xlu0 %v1925, 125
        %v1940 = vpop.permute.xlu0 %1939
        %1941 = vrot.lane.b32.xlu0 %v1926, 125
        %v1942 = vpop.permute.xlu0 %1941
        %1943 = vrot.lane.b32.xlu0 %v1927, 125
        %v1944 = vpop.permute.xlu0 %1943
        %1945 = vrot.lane.b32.xlu0 %v1928, 125
        %v1946 = vpop.permute.xlu0 %1945
        %v1947 = vsel %vm1503, %v1936, %v1938
        %v1948 = vsel %vm1503, %v1938, %v1940
        %v1949 = vsel %vm1503, %v1942, %v1944
        %v1950 = vsel %vm1503, %v1944, %v1946
        %v1957 = vadd.f32 %v1909, %v1936
        %v1958 = vadd.f32 %v1910, %v1947
        %v1959 = vadd.f32 %v1911, %v1948
        %v1960 = vadd.f32 %v1912, %v1942
        %v1961 = vadd.f32 %v1913, %v1949
        %v1962 = vadd.f32 %v1914, %v1950
        %v1963 = vld [vmem:[%s582 + $0x8] sm:$0xff]
        %v1964 = vld [vmem:[%s582 + $0x10] sm:$0xff]
        %v1965 = vld [vmem:[%s582 + $0x18] sm:$0xff]
        %v1966 = vld [vmem:[%s582 + $0x28] sm:$0xff]
        %v1967 = vld [vmem:[%s582 + $0x30] sm:$0xff]
        %v1968 = vld [vmem:[%s582 + $0x38] sm:$0xff]
        %1969 = vset.pattern.permute.xlu0 14
        %1970 = vperm.xlu0 %1969, %v1348
        %v1971 = vpop.permute.xlu0 %1970
        %1973 = vset.pattern.permute.xlu0 14
        %1974 = vperm.xlu0 %1973, %v1349
        %v1975 = vpop.permute.xlu0 %1974
        %v1977 = vmul.f32 %v1963, %v1971
        %v1978 = vmul.f32 %v1964, %v1971
        %v1979 = vmul.f32 %v1965, %v1971
        %v1980 = vmul.f32 %v1966, %v1975
        %v1981 = vmul.f32 %v1967, %v1975
        %v1982 = vmul.f32 %v1968, %v1975
        %1989 = vrot.lane.b32.xlu0 %v1977, 124
        %v1990 = vpop.permute.xlu0 %1989
        %1991 = vrot.lane.b32.xlu0 %v1978, 124
        %v1992 = vpop.permute.xlu0 %1991
        %1993 = vrot.lane.b32.xlu0 %v1979, 124
        %v1994 = vpop.permute.xlu0 %1993
        %1995 = vrot.lane.b32.xlu0 %v1980, 124
        %v1996 = vpop.permute.xlu0 %1995
        %1997 = vrot.lane.b32.xlu0 %v1981, 124
        %v1998 = vpop.permute.xlu0 %1997
        %1999 = vrot.lane.b32.xlu0 %v1982, 124
        %v2000 = vpop.permute.xlu0 %1999
        %v2001 = vsel %vm1558, %v1990, %v1992
        %v2002 = vsel %vm1558, %v1992, %v1994
        %v2003 = vsel %vm1558, %v1996, %v1998
        %v2004 = vsel %vm1558, %v1998, %v2000
        %v2011 = vadd.f32 %v1957, %v1990
        %v2012 = vadd.f32 %v1958, %v2001
        %v2013 = vadd.f32 %v1959, %v2002
        %v2014 = vadd.f32 %v1960, %v1996
        %v2015 = vadd.f32 %v1961, %v2003
        %v2016 = vadd.f32 %v1962, %v2004
        %2023 = vrot.lane.b32.xlu0 %v2011, 96
        %v2024 = vpop.permute.xlu0 %2023
        %2025 = vrot.lane.b32.xlu0 %v2012, 96
        %v2026 = vpop.permute.xlu0 %2025
        %2027 = vrot.lane.b32.xlu0 %v2013, 96
        %v2028 = vpop.permute.xlu0 %2027
        %2029 = vrot.lane.b32.xlu0 %v2014, 96
        %v2030 = vpop.permute.xlu0 %2029
        %2031 = vrot.lane.b32.xlu0 %v2015, 96
        %v2032 = vpop.permute.xlu0 %2031
        %2033 = vrot.lane.b32.xlu0 %v2016, 96
        %v2034 = vpop.permute.xlu0 %2033
        %v2035 = vsel %vm1107, %v2024, %v2026
        %v2036 = vsel %vm1107, %v2026, %v2028
        %v2037 = vsel %vm1107, %v2030, %v2032
        %v2038 = vsel %vm1107, %v2032, %v2034
        %v2045 = vadd.f32 %v1809, %v2035
        %v2046 = vadd.f32 %v1810, %v2036
        %v2047 = vadd.f32 %v1811, %v2028
        %v2048 = vadd.f32 %v1812, %v2037
        %v2049 = vadd.f32 %v1813, %v2038
        %v2050 = vadd.f32 %v1814, %v2034
        %v2051 = vld [vmem:[#allocation2 + $0x8] sm:$0xff]
        %v2052 = vld [vmem:[#allocation2 + $0x10] sm:$0xff]
        %v2053 = vld [vmem:[#allocation2 + $0x18] sm:$0xff]
        %v2054 = vld [vmem:[#allocation2 + $0x28] sm:$0xff]
        %v2055 = vld [vmem:[#allocation2 + $0x30] sm:$0xff]
        %v2056 = vld [vmem:[#allocation2 + $0x38] sm:$0xff]
        %2057 = vset.pattern.permute.xlu0 15
        %2058 = vperm.xlu0 %2057, %v1348
        %v2059 = vpop.permute.xlu0 %2058
        %2061 = vset.pattern.permute.xlu0 15
        %2062 = vperm.xlu0 %2061, %v1349
        %v2063 = vpop.permute.xlu0 %2062
        %v2065 = vmul.f32 %v2051, %v2059
        %v2066 = vmul.f32 %v2052, %v2059
        %v2067 = vmul.f32 %v2053, %v2059
        %v2068 = vmul.f32 %v2054, %v2063
        %v2069 = vmul.f32 %v2055, %v2063
        %v2070 = vmul.f32 %v2056, %v2063
        %2071 = vset.pattern.permute.xlu0 16
        %2072 = vperm.xlu0 %2071, %v1348
        %v2073 = vpop.permute.xlu0 %2072
        %2075 = vset.pattern.permute.xlu0 16
        %2076 = vperm.xlu0 %2075, %v1349
        %v2077 = vpop.permute.xlu0 %2076
        %v2079 = vmul.f32 %v967, %v2073
        %v2080 = vmul.f32 %v968, %v2073
        %v2081 = vmul.f32 %v969, %v2073
        %v2082 = vmul.f32 %v970, %v2077
        %v2083 = vmul.f32 %v971, %v2077
        %v2084 = vmul.f32 %v972, %v2077
        %2091 = vrot.lane.b32.xlu0 %v2079, 127
        %v2092 = vpop.permute.xlu0 %2091
        %2093 = vrot.lane.b32.xlu0 %v2080, 127
        %v2094 = vpop.permute.xlu0 %2093
        %2095 = vrot.lane.b32.xlu0 %v2081, 127
        %v2096 = vpop.permute.xlu0 %2095
        %2097 = vrot.lane.b32.xlu0 %v2082, 127
        %v2098 = vpop.permute.xlu0 %2097
        %2099 = vrot.lane.b32.xlu0 %v2083, 127
        %v2100 = vpop.permute.xlu0 %2099
        %2101 = vrot.lane.b32.xlu0 %v2084, 127
        %v2102 = vpop.permute.xlu0 %2101
        %v2103 = vsel %vm754, %v2092, %v2094
        %v2104 = vsel %vm754, %v2094, %v2096
        %v2105 = vsel %vm754, %v2098, %v2100
        %v2106 = vsel %vm754, %v2100, %v2102
        %v2113 = vadd.f32 %v2065, %v2103
        %v2114 = vadd.f32 %v2066, %v2104
        %v2115 = vadd.f32 %v2067, %v2096
        %v2116 = vadd.f32 %v2068, %v2105
        %v2117 = vadd.f32 %v2069, %v2106
        %v2118 = vadd.f32 %v2070, %v2102
        %2119 = vset.pattern.permute.xlu0 17
        %2120 = vperm.xlu0 %2119, %v1348
        %v2121 = vpop.permute.xlu0 %2120
        %2123 = vset.pattern.permute.xlu0 17
        %2124 = vperm.xlu0 %2123, %v1349
        %v2125 = vpop.permute.xlu0 %2124
        %v2127 = vmul.f32 %v987, %v2121
        %v2128 = vmul.f32 %v988, %v2121
        %v2129 = vmul.f32 %v989, %v2121
        %v2130 = vmul.f32 %v990, %v2125
        %v2131 = vmul.f32 %v991, %v2125
        %v2132 = vmul.f32 %v992, %v2125
        %2139 = vrot.lane.b32.xlu0 %v2127, 126
        %v2140 = vpop.permute.xlu0 %2139
        %2141 = vrot.lane.b32.xlu0 %v2128, 126
        %v2142 = vpop.permute.xlu0 %2141
        %2143 = vrot.lane.b32.xlu0 %v2129, 126
        %v2144 = vpop.permute.xlu0 %2143
        %2145 = vrot.lane.b32.xlu0 %v2130, 126
        %v2146 = vpop.permute.xlu0 %2145
        %2147 = vrot.lane.b32.xlu0 %v2131, 126
        %v2148 = vpop.permute.xlu0 %2147
        %2149 = vrot.lane.b32.xlu0 %v2132, 126
        %v2150 = vpop.permute.xlu0 %2149
        %v2151 = vsel %vm809, %v2140, %v2142
        %v2152 = vsel %vm809, %v2142, %v2144
        %v2153 = vsel %vm809, %v2146, %v2148
        %v2154 = vsel %vm809, %v2148, %v2150
        %v2161 = vadd.f32 %v2113, %v2151
        %v2162 = vadd.f32 %v2114, %v2152
        %v2163 = vadd.f32 %v2115, %v2144
        %v2164 = vadd.f32 %v2116, %v2153
        %v2165 = vadd.f32 %v2117, %v2154
        %v2166 = vadd.f32 %v2118, %v2150
        %2167 = vset.pattern.permute.xlu0 18
        %2168 = vperm.xlu0 %2167, %v1348
        %v2169 = vpop.permute.xlu0 %2168
        %2171 = vset.pattern.permute.xlu0 18
        %2172 = vperm.xlu0 %2171, %v1349
        %v2173 = vpop.permute.xlu0 %2172
        %v2175 = vmul.f32 %v878, %v2169
        %v2176 = vmul.f32 %v879, %v2169
        %v2177 = vmul.f32 %v880, %v2169
        %v2178 = vmul.f32 %v881, %v2173
        %v2179 = vmul.f32 %v882, %v2173
        %v2180 = vmul.f32 %v883, %v2173
        %2187 = vrot.lane.b32.xlu0 %v2175, 125
        %v2188 = vpop.permute.xlu0 %2187
        %2189 = vrot.lane.b32.xlu0 %v2176, 125
        %v2190 = vpop.permute.xlu0 %2189
        %2191 = vrot.lane.b32.xlu0 %v2177, 125
        %v2192 = vpop.permute.xlu0 %2191
        %2193 = vrot.lane.b32.xlu0 %v2178, 125
        %v2194 = vpop.permute.xlu0 %2193
        %2195 = vrot.lane.b32.xlu0 %v2179, 125
        %v2196 = vpop.permute.xlu0 %2195
        %2197 = vrot.lane.b32.xlu0 %v2180, 125
        %v2198 = vpop.permute.xlu0 %2197
        %v2199 = vsel %vm1503, %v2188, %v2190
        %v2200 = vsel %vm1503, %v2190, %v2192
        %v2201 = vsel %vm1503, %v2194, %v2196
        %v2202 = vsel %vm1503, %v2196, %v2198
        %v2209 = vadd.f32 %v2161, %v2199
        %v2210 = vadd.f32 %v2162, %v2200
        %v2211 = vadd.f32 %v2163, %v2192
        %v2212 = vadd.f32 %v2164, %v2201
        %v2213 = vadd.f32 %v2165, %v2202
        %v2214 = vadd.f32 %v2166, %v2198
        %2215 = vset.pattern.permute.xlu0 19
        %2216 = vperm.xlu0 %2215, %v1348
        %v2217 = vpop.permute.xlu0 %2216
        %2219 = vset.pattern.permute.xlu0 19
        %2220 = vperm.xlu0 %2219, %v1349
        %v2221 = vpop.permute.xlu0 %2220
        %v2223 = vmul.f32 %v1963, %v2217
        %v2224 = vmul.f32 %v1964, %v2217
        %v2225 = vmul.f32 %v1965, %v2217
        %v2226 = vmul.f32 %v1966, %v2221
        %v2227 = vmul.f32 %v1967, %v2221
        %v2228 = vmul.f32 %v1968, %v2221
        %2235 = vrot.lane.b32.xlu0 %v2223, 124
        %v2236 = vpop.permute.xlu0 %2235
        %2237 = vrot.lane.b32.xlu0 %v2224, 124
        %v2238 = vpop.permute.xlu0 %2237
        %2239 = vrot.lane.b32.xlu0 %v2225, 124
        %v2240 = vpop.permute.xlu0 %2239
        %2241 = vrot.lane.b32.xlu0 %v2226, 124
        %v2242 = vpop.permute.xlu0 %2241
        %2243 = vrot.lane.b32.xlu0 %v2227, 124
        %v2244 = vpop.permute.xlu0 %2243
        %2245 = vrot.lane.b32.xlu0 %v2228, 124
        %v2246 = vpop.permute.xlu0 %2245
        %v2247 = vsel %vm1558, %v2236, %v2238
        %v2248 = vsel %vm1558, %v2238, %v2240
        %v2249 = vsel %vm1558, %v2242, %v2244
        %v2250 = vsel %vm1558, %v2244, %v2246
        %v2257 = vadd.f32 %v2209, %v2247
        %v2258 = vadd.f32 %v2210, %v2248
        %v2259 = vadd.f32 %v2211, %v2240
        %v2260 = vadd.f32 %v2212, %v2249
        %v2261 = vadd.f32 %v2213, %v2250
        %v2262 = vadd.f32 %v2214, %v2246
        %2269 = vrot.lane.b32.xlu0 %v2257, 80
        %v2270 = vpop.permute.xlu0 %2269
        %2271 = vrot.lane.b32.xlu0 %v2258, 80
        %v2272 = vpop.permute.xlu0 %2271
        %2273 = vrot.lane.b32.xlu0 %v2259, 80
        %v2274 = vpop.permute.xlu0 %2273
        %2275 = vrot.lane.b32.xlu0 %v2260, 80
        %v2276 = vpop.permute.xlu0 %2275
        %2277 = vrot.lane.b32.xlu0 %v2261, 80
        %v2278 = vpop.permute.xlu0 %2277
        %2279 = vrot.lane.b32.xlu0 %v2262, 80
        %v2280 = vpop.permute.xlu0 %2279
        %vm2281 = vcmask 654336
        %v2282 = vsel %vm2281, %v2270, %v2272
        %v2283 = vsel %vm2281, %v2272, %v2274
        %v2284 = vsel %vm2281, %v2276, %v2278
        %v2285 = vsel %vm2281, %v2278, %v2280
        %v2292 = vadd.f32 %v2045, %v2270
        %v2293 = vadd.f32 %v2046, %v2282
        %v2294 = vadd.f32 %v2047, %v2283
        %v2295 = vadd.f32 %v2048, %v2276
        %v2296 = vadd.f32 %v2049, %v2284
        %v2297 = vadd.f32 %v2050, %v2285
        %2298 = vset.pattern.permute.xlu0 20
        %2299 = vperm.xlu0 %2298, %v1348
        %v2300 = vpop.permute.xlu0 %2299
        %2302 = vset.pattern.permute.xlu0 20
        %2303 = vperm.xlu0 %2302, %v1349
        %v2304 = vpop.permute.xlu0 %2303
        %v2306 = vmul.f32 %v2051, %v2300
        %v2307 = vmul.f32 %v2052, %v2300
        %v2308 = vmul.f32 %v2053, %v2300
        %v2309 = vmul.f32 %v2054, %v2304
        %v2310 = vmul.f32 %v2055, %v2304
        %v2311 = vmul.f32 %v2056, %v2304
        %2312 = vset.pattern.permute.xlu0 21
        %2313 = vperm.xlu0 %2312, %v1348
        %v2314 = vpop.permute.xlu0 %2313
        %2316 = vset.pattern.permute.xlu0 21
        %2317 = vperm.xlu0 %2316, %v1349
        %v2318 = vpop.permute.xlu0 %2317
        %v2320 = vmul.f32 %v967, %v2314
        %v2321 = vmul.f32 %v968, %v2314
        %v2322 = vmul.f32 %v969, %v2314
        %v2323 = vmul.f32 %v970, %v2318
        %v2324 = vmul.f32 %v971, %v2318
        %v2325 = vmul.f32 %v972, %v2318
        %2332 = vrot.lane.b32.xlu0 %v2320, 127
        %v2333 = vpop.permute.xlu0 %2332
        %2334 = vrot.lane.b32.xlu0 %v2321, 127
        %v2335 = vpop.permute.xlu0 %2334
        %2336 = vrot.lane.b32.xlu0 %v2322, 127
        %v2337 = vpop.permute.xlu0 %2336
        %2338 = vrot.lane.b32.xlu0 %v2323, 127
        %v2339 = vpop.permute.xlu0 %2338
        %2340 = vrot.lane.b32.xlu0 %v2324, 127
        %v2341 = vpop.permute.xlu0 %2340
        %2342 = vrot.lane.b32.xlu0 %v2325, 127
        %v2343 = vpop.permute.xlu0 %2342
        %v2344 = vsel %vm754, %v2333, %v2335
        %v2345 = vsel %vm754, %v2335, %v2337
        %v2346 = vsel %vm754, %v2339, %v2341
        %v2347 = vsel %vm754, %v2341, %v2343
        %v2354 = vadd.f32 %v2306, %v2344
        %v2355 = vadd.f32 %v2307, %v2345
        %v2356 = vadd.f32 %v2308, %v2337
        %v2357 = vadd.f32 %v2309, %v2346
        %v2358 = vadd.f32 %v2310, %v2347
        %v2359 = vadd.f32 %v2311, %v2343
        %2360 = vset.pattern.permute.xlu0 22
        %2361 = vperm.xlu0 %2360, %v1348
        %v2362 = vpop.permute.xlu0 %2361
        %2364 = vset.pattern.permute.xlu0 22
        %2365 = vperm.xlu0 %2364, %v1349
        %v2366 = vpop.permute.xlu0 %2365
        %v2368 = vmul.f32 %v987, %v2362
        %v2369 = vmul.f32 %v988, %v2362
        %v2370 = vmul.f32 %v989, %v2362
        %v2371 = vmul.f32 %v990, %v2366
        %v2372 = vmul.f32 %v991, %v2366
        %v2373 = vmul.f32 %v992, %v2366
        %2380 = vrot.lane.b32.xlu0 %v2368, 126
        %v2381 = vpop.permute.xlu0 %2380
        %2382 = vrot.lane.b32.xlu0 %v2369, 126
        %v2383 = vpop.permute.xlu0 %2382
        %2384 = vrot.lane.b32.xlu0 %v2370, 126
        %v2385 = vpop.permute.xlu0 %2384
        %2386 = vrot.lane.b32.xlu0 %v2371, 126
        %v2387 = vpop.permute.xlu0 %2386
        %2388 = vrot.lane.b32.xlu0 %v2372, 126
        %v2389 = vpop.permute.xlu0 %2388
        %2390 = vrot.lane.b32.xlu0 %v2373, 126
        %v2391 = vpop.permute.xlu0 %2390
        %v2392 = vsel %vm809, %v2381, %v2383
        %v2393 = vsel %vm809, %v2383, %v2385
        %v2394 = vsel %vm809, %v2387, %v2389
        %v2395 = vsel %vm809, %v2389, %v2391
        %v2402 = vadd.f32 %v2354, %v2392
        %v2403 = vadd.f32 %v2355, %v2393
        %v2404 = vadd.f32 %v2356, %v2385
        %v2405 = vadd.f32 %v2357, %v2394
        %v2406 = vadd.f32 %v2358, %v2395
        %v2407 = vadd.f32 %v2359, %v2391
        %2408 = vset.pattern.permute.xlu0 23
        %2409 = vperm.xlu0 %2408, %v1348
        %v2410 = vpop.permute.xlu0 %2409
        %2412 = vset.pattern.permute.xlu0 23
        %2413 = vperm.xlu0 %2412, %v1349
        %v2414 = vpop.permute.xlu0 %2413
        %v2416 = vmul.f32 %v878, %v2410
        %v2417 = vmul.f32 %v879, %v2410
        %v2418 = vmul.f32 %v880, %v2410
        %v2419 = vmul.f32 %v881, %v2414
        %v2420 = vmul.f32 %v882, %v2414
        %v2421 = vmul.f32 %v883, %v2414
        %2428 = vrot.lane.b32.xlu0 %v2416, 125
        %v2429 = vpop.permute.xlu0 %2428
        %2430 = vrot.lane.b32.xlu0 %v2417, 125
        %v2431 = vpop.permute.xlu0 %2430
        %2432 = vrot.lane.b32.xlu0 %v2418, 125
        %v2433 = vpop.permute.xlu0 %2432
        %2434 = vrot.lane.b32.xlu0 %v2419, 125
        %v2435 = vpop.permute.xlu0 %2434
        %2436 = vrot.lane.b32.xlu0 %v2420, 125
        %v2437 = vpop.permute.xlu0 %2436
        %2438 = vrot.lane.b32.xlu0 %v2421, 125
        %v2439 = vpop.permute.xlu0 %2438
        %v2440 = vsel %vm1503, %v2429, %v2431
        %v2441 = vsel %vm1503, %v2431, %v2433
        %v2442 = vsel %vm1503, %v2435, %v2437
        %v2443 = vsel %vm1503, %v2437, %v2439
        %v2450 = vadd.f32 %v2402, %v2440
        %v2451 = vadd.f32 %v2403, %v2441
        %v2452 = vadd.f32 %v2404, %v2433
        %v2453 = vadd.f32 %v2405, %v2442
        %v2454 = vadd.f32 %v2406, %v2443
        %v2455 = vadd.f32 %v2407, %v2439
        %2456 = vset.pattern.permute.xlu0 24
        %2457 = vperm.xlu0 %2456, %v1348
        %v2458 = vpop.permute.xlu0 %2457
        %2460 = vset.pattern.permute.xlu0 24
        %2461 = vperm.xlu0 %2460, %v1349
        %v2462 = vpop.permute.xlu0 %2461
        %v2464 = vmul.f32 %v1963, %v2458
        %v2465 = vmul.f32 %v1964, %v2458
        %v2466 = vmul.f32 %v1965, %v2458
        %v2467 = vmul.f32 %v1966, %v2462
        %v2468 = vmul.f32 %v1967, %v2462
        %v2469 = vmul.f32 %v1968, %v2462
        %2476 = vrot.lane.b32.xlu0 %v2464, 124
        %v2477 = vpop.permute.xlu0 %2476
        %2478 = vrot.lane.b32.xlu0 %v2465, 124
        %v2479 = vpop.permute.xlu0 %2478
        %2480 = vrot.lane.b32.xlu0 %v2466, 124
        %v2481 = vpop.permute.xlu0 %2480
        %2482 = vrot.lane.b32.xlu0 %v2467, 124
        %v2483 = vpop.permute.xlu0 %2482
        %2484 = vrot.lane.b32.xlu0 %v2468, 124
        %v2485 = vpop.permute.xlu0 %2484
        %2486 = vrot.lane.b32.xlu0 %v2469, 124
        %v2487 = vpop.permute.xlu0 %2486
        %v2488 = vsel %vm1558, %v2477, %v2479
        %v2489 = vsel %vm1558, %v2479, %v2481
        %v2490 = vsel %vm1558, %v2483, %v2485
        %v2491 = vsel %vm1558, %v2485, %v2487
        %v2498 = vadd.f32 %v2450, %v2488
        %v2499 = vadd.f32 %v2451, %v2489
        %v2500 = vadd.f32 %v2452, %v2481
        %v2501 = vadd.f32 %v2453, %v2490
        %v2502 = vadd.f32 %v2454, %v2491
        %v2503 = vadd.f32 %v2455, %v2487
        %2510 = vrot.lane.b32.xlu0 %v2498, 64
        %v2511 = vpop.permute.xlu0 %2510
        %2512 = vrot.lane.b32.xlu0 %v2499, 64
        %v2513 = vpop.permute.xlu0 %2512
        %2514 = vrot.lane.b32.xlu0 %v2500, 64
        %v2515 = vpop.permute.xlu0 %2514
        %2516 = vrot.lane.b32.xlu0 %v2501, 64
        %v2517 = vpop.permute.xlu0 %2516
        %2518 = vrot.lane.b32.xlu0 %v2502, 64
        %v2519 = vpop.permute.xlu0 %2518
        %2520 = vrot.lane.b32.xlu0 %v2503, 64
        %v2521 = vpop.permute.xlu0 %2520
        %vm2522 = vcmask 523264
        %v2523 = vsel %vm2522, %v2511, %v2513
        %v2524 = vsel %vm2522, %v2513, %v2515
        %v2525 = vsel %vm2522, %v2517, %v2519
        %v2526 = vsel %vm2522, %v2519, %v2521
        %v2533 = vadd.f32 %v2292, %v2511
        %v2534 = vadd.f32 %v2293, %v2523
        %v2535 = vadd.f32 %v2294, %v2524
        %v2536 = vadd.f32 %v2295, %v2517
        %v2537 = vadd.f32 %v2296, %v2525
        %v2538 = vadd.f32 %v2297, %v2526
        %2540 = vset.pattern.permute.xlu0 0
        %2541 = vperm.xlu0 %2540, %v1351
        %v2542 = vpop.permute.xlu0 %2541
        %2545 = vset.pattern.permute.xlu0 0
        %2546 = vperm.xlu0 %2545, %v1352
        %v2547 = vpop.permute.xlu0 %2546
        %v2549 = vadd.f32 %v2533, %v2542
        %v2550 = vadd.f32 %v2534, %v2542
        %v2551 = vadd.f32 %v2535, %v2542
        %v2552 = vadd.f32 %v2536, %v2547
        %v2553 = vadd.f32 %v2537, %v2547
        %v2554 = vadd.f32 %v2538, %v2547
        %v2555 = vmax.f32 %v2549, 0.0
        %v2556 = vmax.f32 %v2550, 0.0
        %v2557 = vmax.f32 %v2551, 0.0
        %v2558 = vmax.f32 %v2552, 0.0
        %v2559 = vmax.f32 %v2553, 0.0
        %v2560 = vmax.f32 %v2554, 0.0
        %v2561 = vmin.f32 %v2555, 6.0
        %v2562 = vmin.f32 %v2556, 6.0
        %v2563 = vmin.f32 %v2557, 6.0
        %v2564 = vmin.f32 %v2558, 6.0
        %v2565 = vmin.f32 %v2559, 6.0
        %v2566 = vmin.f32 %v2560, 6.0
        %2567 = vrot.lane.b32.xlu0 %v687, 96
        %v2568 = vpop.permute.xlu0 %2567
        %2569 = vrot.lane.b32.xlu0 %v688, 96
        %v2570 = vpop.permute.xlu0 %2569
        %2577 = vrot.lane.b32.xlu0 %v2561, 34
        %v2578 = vpop.permute.xlu0 %2577
        %2579 = vrot.lane.b32.xlu0 %v2562, 34
        %v2580 = vpop.permute.xlu0 %2579
        %2581 = vrot.lane.b32.xlu0 %v2563, 34
        %v2582 = vpop.permute.xlu0 %2581
        %2583 = vrot.lane.b32.xlu0 %v2564, 34
        %v2584 = vpop.permute.xlu0 %2583
        %2585 = vrot.lane.b32.xlu0 %v2565, 34
        %v2586 = vpop.permute.xlu0 %2585
        %2587 = vrot.lane.b32.xlu0 %v2566, 34
        %v2588 = vpop.permute.xlu0 %2587
        %vm2589 = vcmask 277504
        %v2590 = vsel %vm2589, %v2578, %v2580
        %v2591 = vsel %vm2589, %v2580, %v2582
        %v2592 = vsel %vm2589, %v2584, %v2586
        %v2593 = vsel %vm2589, %v2586, %v2588
        %v2598 = vsel %vm1185, %v2568, 0
        %v2600 = vsel %vm1185, %v2570, 0
        %2602 = vmatprep.subr.mxu0 %v2591
        %2603 = vmatpush1.msra.mxu0 %v2590
        %2604 = vmatprep.subr.mxu0 %v2593
        %2605 = vmatpush1.msra.mxu0 %v2592
        %2606 = vmatprep.subr.mxu0 0.0
        %2607 = vmatpush1.msra.mxu0 0.0
        %2608 = vmatprep.subr.mxu0 0.0
        %2609 = vmatpush1.msra.mxu0 0.0
        %2610 = vmatprep.subr.mxu0 0.0
        %2611 = vmatpush1.msra.mxu0 0.0
        %2612 = vmatprep.subr.mxu0 0.0
        %2613 = vmatpush1.msra.mxu0 0.0
        %2614 = vmatprep.subr.mxu0 0.0
        %2615 = vmatpush1.msra.mxu0 0.0
        %2616 = vmatprep.subr.mxu0 0.0
        %2617 = vmatpush1.msra.mxu0 0.0
        %2618 = vmatprep.subr.mxu0 0.0
        %2619 = vmatpush1.msra.mxu0 0.0
        %2620 = vmatprep.subr.mxu0 0.0
        %2621 = vmatpush1.msra.mxu0 0.0
        %2622 = vmatprep.subr.mxu0 0.0
        %2623 = vmatpush1.msra.mxu0 0.0
        %2624 = vmatprep.subr.mxu0 0.0
        %2625 = vmatpush1.msra.mxu0 0.0
        %2626 = vmatprep.subr.mxu0 0.0
        %2627 = vmatpush1.msra.mxu0 0.0
        %2628 = vmatprep.subr.mxu0 0.0
        %2629 = vmatpush1.msra.mxu0 0.0
        %2630 = vmatprep.subr.mxu0 0.0
        %2631 = vmatpush1.msra.mxu0 0.0
        %2632 = vmatprep.subr.mxu0 0.0
        %2633 = vmatpush1.msra.mxu0 0.0
        %2634 = vmatprep.subr.mxu0 0.0
        %2635 = vmatpush1.msra.mxu0 0.0
        %2636 = vmatprep.subr.mxu0 0.0
        %2637 = vmatpush1.msra.mxu0 0.0
        %2638 = vmatprep.subr.mxu0 0.0
        %2639 = vmatpush1.msra.mxu0 0.0
        %2640 = vmatprep.subr.mxu0 0.0
        %2641 = vmatpush1.msra.mxu0 0.0
        %2642 = vmatprep.subr.mxu0 0.0
        %2643 = vmatpush1.msra.mxu0 0.0
        %2644 = vmatprep.subr.mxu0 0.0
        %2645 = vmatpush1.msra.mxu0 0.0
        %2646 = vmatprep.subr.mxu0 0.0
        %2647 = vmatpush1.msra.mxu0 0.0
        %2648 = vmatprep.subr.mxu0 0.0
        %2649 = vmatpush1.msra.mxu0 0.0
        %2650 = vmatprep.subr.mxu0 0.0
        %2651 = vmatpush1.msra.mxu0 0.0
        %2652 = vmatprep.subr.mxu0 0.0
        %2653 = vmatpush1.msra.mxu0 0.0
        %2654 = vmatprep.subr.mxu0 0.0
        %2655 = vmatpush1.msra.mxu0 0.0
        %2656 = vmatprep.subr.mxu0 0.0
        %2657 = vmatpush1.msra.mxu0 0.0
        %2658 = vmatprep.subr.mxu0 0.0
        %2659 = vmatpush1.msra.mxu0 0.0
        %2660 = vmatprep.subr.mxu0 0.0
        %2661 = vmatpush1.msra.mxu0 0.0
        %2662 = vmatprep.subr.mxu0 0.0
        %2663 = vmatpush1.msra.mxu0 0.0
        %2664 = vmatprep.subr.mxu0 0.0
        %2665 = vmatpush1.msra.mxu0 0.0
        %2666 = vmatprep.mubr.f32.mxu0 0.0
        %2667 = vmatmul.mubr.f32.gmra.mrb[0].mxu0 %v2598
        %v2668 = vpop.f32.mrb[0].mxu0
        %v2669 = vadd.f32 0.0, %v2668
        %v2670 = vpop.f32.mrb[0].mxu0
        %v2671 = vadd.f32 0.0, %v2670
        %2672 = vmatprep.mubr.f32.mxu0 0.0
        %2673 = vmatmul.mubr.f32.gmra.mrb[0].mxu0 %v2600
        %v2674 = vpop.f32.mrb[0].mxu0
        %v2675 = vadd.f32 0.0, %v2674
        %v2676 = vpop.f32.mrb[0].mxu0
        %v2677 = vadd.f32 0.0, %v2676
        %2678 = vdwg.mxu0
        %v2679 = vadd.f32 %v1338, %v2669
        %v2680 = vadd.f32 %v1340, %v2671
        %v2681 = vadd.f32 %v1344, %v2675
        %v2682 = vadd.f32 %v1346, %v2677
        %v2683 = vld [vmem:[%s9] sm:$0xff]
        %v2684 = vld [vmem:[%s9 + $0x8] sm:$0xff]
        %2686 = vset.pattern.permute.xlu0 0
        %2687 = vperm.xlu0 %2686, %v2683
        %v2688 = vpop.permute.xlu0 %2687
        %2691 = vset.pattern.permute.xlu0 0
        %2692 = vperm.xlu0 %2691, %v2684
        %v2693 = vpop.permute.xlu0 %2692
        %v2695 = vmul.f32 %v2679, %v2688
        %v2696 = vmul.f32 %v2680, %v2688
        %v2697 = vmul.f32 %v2681, %v2693
        %v2698 = vmul.f32 %v2682, %v2693
        %v2699 = vld [vmem:[%s10] sm:$0xff]
        %v2700 = vld [vmem:[%s10 + $0x8] sm:$0xff]
        %2702 = vset.pattern.permute.xlu0 0
        %2703 = vperm.xlu0 %2702, %v2699
        %v2704 = vpop.permute.xlu0 %2703
        %2707 = vset.pattern.permute.xlu0 0
        %2708 = vperm.xlu0 %2707, %v2700
        %v2709 = vpop.permute.xlu0 %2708
        %v2711 = vadd.f32 %v2695, %v2704
        %v2712 = vadd.f32 %v2696, %v2704
        %v2713 = vadd.f32 %v2697, %v2709
        %v2714 = vadd.f32 %v2698, %v2709
        %v2715 = vadd.f32 %v2711, %v486
        %v2716 = vadd.f32 %v2712, %v488
        %v2717 = vadd.f32 %v2713, %v492
        %v2718 = vadd.f32 %v2714, %v494
        %2719 = vst [vmem:[%s380] sm:$0xff] %v2715
        %2720 = vst [vmem:[%s380 + $0x8] sm:$0xff] %v2716
        %2721 = vst [vmem:[%s380 + $0x10] sm:$0xff] %v2717
        %2722 = vst [vmem:[%s380 + $0x18] sm:$0xff] %v2718
        %s2723 = sand.u32 %s269, 1
        %s2724 = scalar_lea.sflag [#allocation4], %s2723
        %s2725 = sand.u32 %s269, 1
        %s2726 = smul.addr %s2725, 32
        %s2727 = scalar_lea.vmem [#allocation3], %s2726
        // Predicated region
        $region65: #{tpu_custom_call.1} parent=63 // pred_check
          %p2728 = pneg %p279
        $region66: #{tpu_custom_call.1} parent=63 // pred_check_branch
          %2730 = sbr.rel (%p2728) target = $region68
        $region67: #{tpu_custom_call.1} parent=63 // pred_region
          %s2731 = smul.u32 2, %s25
          %s2733 = ssub.s32 512, 512
          %2734 = vsyncadd %s2724, %s2733
          %s2735 = smul.addr %s2731, 128
          %s2736 = scalar_lea.hbm %s11, %s2735
          %s2737 = sshll.u32 %s2727, 4
          %s2738 = int_to_ptr.vmem [resolvable:$true] %s2737
          %2743 = dma.vmem_to_hbm [thread:$0]  %s2738, 512, %s2736, %s2724, 256, 512, 16
        $region68: #{tpu_custom_call.1} parent=63 // pred_fallthru
          _
      $region64: #{tpu_custom_call.1} parent=5 // pred_fallthru
        _
      %p2744 = scmp.le.s32.totalorder 2, %s20
      // Predicated region
      $region69: #{tpu_custom_call.1} parent=5 // pred_check
        %p2745 = pneg %p2744
      $region70: #{tpu_custom_call.1} parent=5 // pred_check_branch
        %2747 = sbr.rel (%p2745) target = $region72
      $region71: #{tpu_custom_call.1} parent=5 // pred_region
        %s2748 = ssub.s32 %s20, 2
        // Predicated region
        $region73: #{tpu_custom_call.1} parent=71 // pred_check
          %p2749 = pneg %p285
        $region74: #{tpu_custom_call.1} parent=71 // pred_check_branch
          %2751 = sbr.rel (%p2749) target = $region76
        $region75: #{tpu_custom_call.1} parent=71 // pred_region
          %s2752 = sand.u32 %s270, 1
          %s2753 = scalar_lea.sflag [#allocation4], %s2752
          %s2754 = sand.u32 %s270, 1
          %s2755 = smul.addr %s2754, 32
          %s2756 = scalar_lea.vmem [#allocation3], %s2755
          %2757 = dma.done %s2753, 512
        $region76: #{tpu_custom_call.1} parent=71 // pred_fallthru
          _
      $region72: #{tpu_custom_call.1} parent=5 // pred_fallthru
        _
    $region6: #{tpu_custom_call.1} parent=1 // loop_footer
      %s24 = sadd.s32 1, %s20
    $region7: #{tpu_custom_call.1} parent=1 // loop_footer_branch
      %19 = sbr.rel target = $region3
    $region8: #{tpu_custom_call.1} parent=1 // loop_exit
      _
    %2758 = vsyncpa [#allocation4], 1
    %s2759 = scalar_lea.sflag [#allocation4], 1
    %2760 = vsyncpa %s2759, 1

</llo_original>
